<compile_context>
chip_gen: v7x
topology: tpu7x:2x2x1
jax: 0.10.0
libtpu: 0.0.40
codegen_flags: <defaults>
</compile_context>

<pallas_src>
import functools

import jax
import jax.numpy as jnp
from jax.experimental import pallas as pl
from jax.experimental.pallas import tpu as pltpu


# ----------------------------------------------------------------------------
# Model dims (small synthetic configuration)
# ----------------------------------------------------------------------------
B = 2            # batch
C_LAT = 4        # latent channels (SDXL UNet in/out channels = 4)
H = W = 16       # latent spatial
HW = H * W
S_IMG = 8        # image-embed sequence length
D_IN = 32        # image-embed feature dim (resampler input)
D_CTX = 64       # resampler output / cross-attn context dim
D_POOL = 32      # pooled image-embed dim ("text_embeds" added cond)
D_T = 64         # time-embedding dim
C_HID = 64       # UNet hidden channels
N_TIME_IDS = 6   # SDXL time_ids length
T_ID_PAD = 8     # time_ids K padded 6 -> 8  (zero-padded columns)
K_CONV = 64      # im2col K padded C_LAT*9=36 -> 64 (zero-padded columns)


# ----------------------------------------------------------------------------
# Fused kernel: resampler + added-cond + conv_in + cross-attn + conv_out + MSE
# ----------------------------------------------------------------------------
def _fused_adapter_kernel(img_ref, temb_ref, tid_ref, patch_ref, noise_ref,
                          rw_in_ref, rb_in_ref, rw_pool_ref, rb_pool_ref,
                          wc_pool_ref, wc_time_ref, bc_ref,
                          wt_ref, bt_ref, wci_ref, bci_ref,
                          wq_ref, wkv_ref, wo_ref, wco_ref, bco_ref,
                          pred_ref, sse_ref):
    f32 = jnp.float32

    def mm(a, b):
        # bf16 MXU operands, f32 accumulation.
        return jnp.dot(a.astype(jnp.bfloat16), b.astype(jnp.bfloat16),
                       preferred_element_type=f32)

    # ---- resampler: image_embeds -> (ctx, pooled) ----
    img = img_ref[0]                                            # (S_IMG, D_IN)
    ctx = mm(img, rw_in_ref[...]) + rb_in_ref[...]              # (S_IMG, D_CTX)
    pooled = mm(jnp.mean(ctx, axis=0, keepdims=True),
                rw_pool_ref[...]) + rb_pool_ref[...]            # (1, D_POOL)

    # ---- SDXL added conditions (pooled embeds + time_ids) + time embedding --
    cond = (mm(pooled, wc_pool_ref[...])
            + mm(tid_ref[0], wc_time_ref[...])
            + bc_ref[...])                                      # (1, D_T)
    z = temb_ref[0] + cond                                      # (1, D_T)
    emb = z * pl.reciprocal(1.0 + jnp.exp(-z), approx=True)     # silu, f32
    emb = mm(emb, wt_ref[...]) + bt_ref[...]                    # (1, C_HID)

    # ---- conv_in: 3x3 conv via im2col patches (K padded to K_CONV) ----
    h = mm(patch_ref[0], wci_ref[...]) + bci_ref[...] + emb     # (HW, C_HID)

    # ---- cross-attention: latents attend to resampled image context ----
    q = mm(h, wq_ref[...])                                      # (HW, C_HID)
    kv = mm(ctx, wkv_ref[...])                                  # (S_IMG, 2*C_HID)  fused to_k||to_v
    k = kv[:, :C_HID]
    v = kv[:, C_HID:]
    s = jax.lax.dot_general(q.astype(jnp.bfloat16), k.astype(jnp.bfloat16),
                            (((1,), (1,)), ((), ())),
                            preferred_element_type=f32)
    s = s * (1.0 / (C_HID ** 0.5))                              # (HW, S_IMG)
    m = jnp.max(s, axis=-1, keepdims=True)
    p = jnp.exp(s - m)
    p = p * pl.reciprocal(jnp.sum(p, axis=-1, keepdims=True), approx=True)
    attn = mm(mm(p, v), wo_ref[...])                            # (HW, C_HID)
    h = h + attn

    # ---- conv_out (1x1) + MSE partial sums (token layout, f32) ----
    pred = mm(h, wco_ref[...]) + bco_ref[...]                   # (HW, C_LAT)
    pred_ref[0] = pred
    d = pred - noise_ref[0]
    sse_ref[0] = jnp.sum(d * d, axis=0, keepdims=True)          # (1, C_LAT)


def _per_batch3(s1, s2):
    return pl.BlockSpec((1, s1, s2), lambda b: (b, 0, 0))


def _whole2(s0, s1):
    return pl.BlockSpec((s0, s1), lambda b: (0, 0))


# ----------------------------------------------------------------------------
# Plain-JAX glue (tiny tensors only)
# ----------------------------------------------------------------------------
def timestep_embedding(t, dim, max_period=10000.0):
    half = dim // 2
    freqs = jnp.exp(
        -jnp.log(max_period) * jnp.arange(half, dtype=jnp.float32) / half)
    args = t.astype(jnp.float32)[:, None] * freqs[None, :]
    return jnp.concatenate([jnp.cos(args), jnp.sin(args)], axis=-1)


def im2col_3x3_tokens(x_nchw, k_pad):
    """3x3, stride 1, pad 1 patches; returns [B, H*W, k_pad] (zero K-padding)."""
    b, c, h, w = x_nchw.shape
    xp = jnp.pad(x_nchw, ((0, 0), (0, 0), (1, 1), (1, 1)))
    cols = [xp[:, :, dh:dh + h, dw:dw + w] for dh in range(3) for dw in range(3)]
    p = jnp.stack(cols, axis=2)                          # [B, C, 9, H, W]
    p = p.transpose(0, 3, 4, 1, 2).reshape(b, h * w, c * 9)
    return jnp.pad(p, ((0, 0), (0, 0), (0, k_pad - c * 9)))


# ----------------------------------------------------------------------------
# Params (synthetic stand-in for the injected UNet / Resampler)
# ----------------------------------------------------------------------------
def init_params(key):
    ks = jax.random.split(key, 10)
    sc = 0.02

    def w(k, shape):
        return (sc * jax.random.normal(k, shape)).astype(jnp.float32)

    def bias(n):
        return jnp.zeros((1, n), jnp.float32)

    return {
        # resampler
        'res_w_in':    w(ks[0], (D_IN, D_CTX)),   'res_b_in':   bias(D_CTX),
        'res_w_pool':  w(ks[1], (D_CTX, D_POOL)), 'res_b_pool': bias(D_POOL),
        # unet added-cond + time embedding
        'w_cond_pool': w(ks[2], (D_POOL, D_T)),
        'w_cond_time': w(ks[3], (T_ID_PAD, D_T)),  # cols 6,7 of time_ids are 0
        'b_cond':      bias(D_T),
        'w_temb':      w(ks[4], (D_T, C_HID)),    'b_temb':     bias(C_HID),
        # unet conv_in (3x3, im2col K padded) / conv_out (1x1)
        'w_conv_in':   w(ks[5], (K_CONV, C_HID)), 'b_conv_in':  bias(C_HID),
        'w_conv_out':  w(ks[9], (C_HID, C_LAT)),  'b_conv_out': bias(C_LAT),
        # cross-attention (to_k / to_v are the "adapter_parameters", fused)
        'w_q':  w(ks[6], (C_HID, C_HID)),
        'w_kv': w(ks[7], (D_CTX, 2 * C_HID)),      # to_k || to_v (lane-dense)
        'w_o':  w(ks[8], (C_HID, C_HID)),
    }


# ----------------------------------------------------------------------------
# SDXLAdapter.forward equivalent
# ----------------------------------------------------------------------------
def sdxl_adapter_forward(params, noisy_latents, timesteps, image_embeds,
                         text_embeds, noise, time_ids):
    # `text_embeds` is accepted but unused, exactly as in the PyTorch forward
    # (the added-cond text_embeds are the pooled image embeds).
    del text_embeds
    # TODO(synk): the pretrained SDXL UNet / Resampler are injected external
    # modules in the PyTorch code; synthetic stand-ins with the same I/O
    # contract are used here.

    bsz = noisy_latents.shape[0]

    # ---- tiny host-side prep (all << 100 KiB) ----
    img = image_embeds.astype(jnp.float32)                         # [B,S,D_IN]
    t_emb = timestep_embedding(timesteps, D_T).reshape(bsz, 1, D_T)
    tid = jnp.pad(time_ids.astype(jnp.float32),
                  ((0, 0), (0, T_ID_PAD - N_TIME_IDS))).reshape(bsz, 1, T_ID_PAD)
    patches = im2col_3x3_tokens(noisy_latents.astype(jnp.float32), K_CONV)
    noise_tok = noise.astype(jnp.float32).transpose(0, 2, 3, 1).reshape(
        bsz, HW, C_LAT)

    p = params
    pred_tok, sse = pl.pallas_call(
        _fused_adapter_kernel,
        out_shape=(jax.ShapeDtypeStruct((bsz, HW, C_LAT), jnp.float32),
                   jax.ShapeDtypeStruct((bsz, 1, C_LAT), jnp.float32)),
        grid=(bsz,),
        in_specs=[
            _per_batch3(S_IMG, D_IN),          # image_embeds
            _per_batch3(1, D_T),               # t_emb
            _per_batch3(1, T_ID_PAD),          # time_ids (padded)
            _per_batch3(HW, K_CONV),           # im2col patches (padded K)
            _per_batch3(HW, C_LAT),            # noise (token layout)
            _whole2(D_IN, D_CTX),  _whole2(1, D_CTX),
            _whole2(D_CTX, D_POOL), _whole2(1, D_POOL),
            _whole2(D_POOL, D_T),  _whole2(T_ID_PAD, D_T), _whole2(1, D_T),
            _whole2(D_T, C_HID),   _whole2(1, C_HID),
            _whole2(K_CONV, C_HID), _whole2(1, C_HID),
            _whole2(C_HID, C_HID),             # w_q
            _whole2(D_CTX, 2 * C_HID),         # w_kv (fused to_k||to_v)
            _whole2(C_HID, C_HID),             # w_o
            _whole2(C_HID, C_LAT), _whole2(1, C_LAT),
        ],
        out_specs=(_per_batch3(HW, C_LAT),     # noise_pred tokens
                   _per_batch3(1, C_LAT)),     # per-batch/channel SSE
        compiler_params=pltpu.CompilerParams(
            dimension_semantics=("parallel",)),
    )(img, t_emb, tid, patches, noise_tok,
      p['res_w_in'], p['res_b_in'], p['res_w_pool'], p['res_b_pool'],
      p['w_cond_pool'], p['w_cond_time'], p['b_cond'],
      p['w_temb'], p['b_temb'], p['w_conv_in'], p['b_conv_in'],
      p['w_q'], p['w_kv'], p['w_o'], p['w_conv_out'], p['b_conv_out'])

    # restore NCHW for the returned noise_pred (lazy layout op)
    noise_pred = pred_tok.reshape(bsz, H, W, C_LAT).transpose(0, 3, 1, 2)
    # F.mse_loss(noise_pred.float(), noise.float(), reduction='mean')
    total_loss = jnp.sum(sse) / jnp.float32(noise.size)
    return {'total_loss': total_loss, 'noise_pred': noise_pred}


# ----------------------------------------------------------------------------
if __name__ == "__main__":
    key = jax.random.PRNGKey(0)
    k_param, k1, k2, k3, k4 = jax.random.split(key, 5)

    params = init_params(k_param)

    noisy_latents = jax.random.normal(k1, (B, C_LAT, H, W), jnp.float32)
    noise = jax.random.normal(k2, (B, C_LAT, H, W), jnp.float32)
    image_embeds = jax.random.normal(k3, (B, S_IMG, D_IN), jnp.float32)
    text_embeds = jax.random.normal(k4, (B, D_POOL), jnp.float32)  # unused
    timesteps = jnp.array([10, 500], dtype=jnp.int32)
    time_ids = jnp.tile(
        jnp.array([[1024., 1024., 0., 0., 1024., 1024.]], jnp.float32),
        (B, 1))

    forward = jax.jit(sdxl_adapter_forward)
    out = forward(params, noisy_latents, timesteps, image_embeds,
                  text_embeds, noise, time_ids)
    jax.block_until_ready(out)

    assert out['noise_pred'].shape == (B, C_LAT, H, W)
    assert out['total_loss'].shape == ()
    assert bool(jnp.isfinite(out['total_loss']))
    print("KERNEL_OK")
</pallas_src>

<mosaic_0001>
module attributes {stable_mosaic.version = 11 : i64} {
  func.func @_fused_adapter_kernel(%arg0: i32, %arg1: memref<1x8x32xf32, #tpu.memory_space<vmem>>, %arg2: memref<1x1x64xf32, #tpu.memory_space<vmem>>, %arg3: memref<1x1x8xf32, #tpu.memory_space<vmem>>, %arg4: memref<1x256x64xf32, #tpu.memory_space<vmem>>, %arg5: memref<1x256x4xf32, #tpu.memory_space<vmem>>, %arg6: memref<32x64xf32, #tpu.memory_space<vmem>>, %arg7: memref<1x64xf32, #tpu.memory_space<vmem>>, %arg8: memref<64x32xf32, #tpu.memory_space<vmem>>, %arg9: memref<1x32xf32, #tpu.memory_space<vmem>>, %arg10: memref<32x64xf32, #tpu.memory_space<vmem>>, %arg11: memref<8x64xf32, #tpu.memory_space<vmem>>, %arg12: memref<1x64xf32, #tpu.memory_space<vmem>>, %arg13: memref<64x64xf32, #tpu.memory_space<vmem>>, %arg14: memref<1x64xf32, #tpu.memory_space<vmem>>, %arg15: memref<64x64xf32, #tpu.memory_space<vmem>>, %arg16: memref<1x64xf32, #tpu.memory_space<vmem>>, %arg17: memref<64x64xf32, #tpu.memory_space<vmem>>, %arg18: memref<64x128xf32, #tpu.memory_space<vmem>>, %arg19: memref<64x64xf32, #tpu.memory_space<vmem>>, %arg20: memref<64x4xf32, #tpu.memory_space<vmem>>, %arg21: memref<1x4xf32, #tpu.memory_space<vmem>>, %arg22: memref<1x256x4xf32, #tpu.memory_space<vmem>>, %arg23: memref<1x1x4xf32, #tpu.memory_space<vmem>>) attributes {dimension_semantics = [#tpu.dimension_semantics<parallel>], iteration_bounds = array<i64: 2>, scalar_prefetch = 0 : i64, scratch_operands = 0 : i64, tpu.core_type = #tpu.core_type<tc>, window_params = [{transform_indices = @transform_0, window_bounds = array<i64: 1, 8, 32>}, {transform_indices = @transform_1, window_bounds = array<i64: 1, 1, 64>}, {transform_indices = @transform_2, window_bounds = array<i64: 1, 1, 8>}, {transform_indices = @transform_3, window_bounds = array<i64: 1, 256, 64>}, {transform_indices = @transform_4, window_bounds = array<i64: 1, 256, 4>}, {pipeline_mode = #tpu.pipeline_mode<synchronous>, transform_indices = @transform_5, window_bounds = array<i64: 32, 64>}, {pipeline_mode = #tpu.pipeline_mode<synchronous>, transform_indices = @transform_6, window_bounds = array<i64: 1, 64>}, {pipeline_mode = #tpu.pipeline_mode<synchronous>, transform_indices = @transform_7, window_bounds = array<i64: 64, 32>}, {pipeline_mode = #tpu.pipeline_mode<synchronous>, transform_indices = @transform_8, window_bounds = array<i64: 1, 32>}, {pipeline_mode = #tpu.pipeline_mode<synchronous>, transform_indices = @transform_9, window_bounds = array<i64: 32, 64>}, {pipeline_mode = #tpu.pipeline_mode<synchronous>, transform_indices = @transform_10, window_bounds = array<i64: 8, 64>}, {pipeline_mode = #tpu.pipeline_mode<synchronous>, transform_indices = @transform_11, window_bounds = array<i64: 1, 64>}, {pipeline_mode = #tpu.pipeline_mode<synchronous>, transform_indices = @transform_12, window_bounds = array<i64: 64, 64>}, {pipeline_mode = #tpu.pipeline_mode<synchronous>, transform_indices = @transform_13, window_bounds = array<i64: 1, 64>}, {pipeline_mode = #tpu.pipeline_mode<synchronous>, transform_indices = @transform_14, window_bounds = array<i64: 64, 64>}, {pipeline_mode = #tpu.pipeline_mode<synchronous>, transform_indices = @transform_15, window_bounds = array<i64: 1, 64>}, {pipeline_mode = #tpu.pipeline_mode<synchronous>, transform_indices = @transform_16, window_bounds = array<i64: 64, 64>}, {pipeline_mode = #tpu.pipeline_mode<synchronous>, transform_indices = @transform_17, window_bounds = array<i64: 64, 128>}, {pipeline_mode = #tpu.pipeline_mode<synchronous>, transform_indices = @transform_18, window_bounds = array<i64: 64, 64>}, {pipeline_mode = #tpu.pipeline_mode<synchronous>, transform_indices = @transform_19, window_bounds = array<i64: 64, 4>}, {pipeline_mode = #tpu.pipeline_mode<synchronous>, transform_indices = @transform_20, window_bounds = array<i64: 1, 4>}, {transform_indices = @transform_21, window_bounds = array<i64: 1, 256, 4>}, {transform_indices = @transform_22, window_bounds = array<i64: 1, 1, 4>}]} {
    %c0 = arith.constant 0 : index
    %c0_0 = arith.constant 0 : index
    %c0_1 = arith.constant 0 : index
    %0 = vector.load %arg1[%c0, %c0_0, %c0_1] : memref<1x8x32xf32, #tpu.memory_space<vmem>>, vector<1x8x32xf32>
    %1 = vector.shape_cast %0 : vector<1x8x32xf32> to vector<8x32xf32>
    %c0_2 = arith.constant 0 : index
    %c0_3 = arith.constant 0 : index
    %2 = vector.load %arg6[%c0_2, %c0_3] : memref<32x64xf32, #tpu.memory_space<vmem>>, vector<32x64xf32>
    %3 = arith.truncf %1 : vector<8x32xf32> to vector<8x32xbf16>
    %4 = arith.truncf %2 : vector<32x64xf32> to vector<32x64xbf16>
    %cst = arith.constant dense<0.000000e+00> : vector<8x64xf32>
    %5 = tpu.matmul %3, %4, %cst {dimension_numbers = #tpu.dot_dimension_numbers<[1], [0], [0], [1], [0, 0, 1, 1], [], []>} : vector<8x32xbf16>, vector<32x64xbf16>, vector<8x64xf32> -> vector<8x64xf32>
    %c0_4 = arith.constant 0 : index
    %c0_5 = arith.constant 0 : index
    %6 = vector.load %arg7[%c0_4, %c0_5] : memref<1x64xf32, #tpu.memory_space<vmem>>, vector<1x64xf32>
    %7 = vector.broadcast %6 : vector<1x64xf32> to vector<8x64xf32>
    %8 = arith.addf %5, %7 : vector<8x64xf32>
    %cst_6 = arith.constant dense<0.000000e+00> : vector<64xf32>
    %9 = vector.multi_reduction <add>, %8, %cst_6 [0] : vector<8x64xf32> to vector<64xf32>
    %10 = vector.shape_cast %9 : vector<64xf32> to vector<1x64xf32>
    %cst_7 = arith.constant 8.000000e+00 : f32
    %11 = vector.broadcast %cst_7 : f32 to vector<1x64xf32>
    %12 = arith.divf %10, %11 : vector<1x64xf32>
    %c0_8 = arith.constant 0 : index
    %c0_9 = arith.constant 0 : index
    %13 = vector.load %arg8[%c0_8, %c0_9] : memref<64x32xf32, #tpu.memory_space<vmem>>, vector<64x32xf32>
    %14 = arith.truncf %12 : vector<1x64xf32> to vector<1x64xbf16>
    %15 = arith.truncf %13 : vector<64x32xf32> to vector<64x32xbf16>
    %cst_10 = arith.constant dense<0.000000e+00> : vector<1x32xf32>
    %16 = tpu.matmul %14, %15, %cst_10 {dimension_numbers = #tpu.dot_dimension_numbers<[1], [0], [0], [1], [0, 0, 1, 1], [], []>} : vector<1x64xbf16>, vector<64x32xbf16>, vector<1x32xf32> -> vector<1x32xf32>
    %c0_11 = arith.constant 0 : index
    %c0_12 = arith.constant 0 : index
    %17 = vector.load %arg9[%c0_11, %c0_12] : memref<1x32xf32, #tpu.memory_space<vmem>>, vector<1x32xf32>
    %18 = arith.addf %16, %17 : vector<1x32xf32>
    %c0_13 = arith.constant 0 : index
    %c0_14 = arith.constant 0 : index
    %19 = vector.load %arg10[%c0_13, %c0_14] : memref<32x64xf32, #tpu.memory_space<vmem>>, vector<32x64xf32>
    %20 = arith.truncf %18 : vector<1x32xf32> to vector<1x32xbf16>
    %21 = arith.truncf %19 : vector<32x64xf32> to vector<32x64xbf16>
    %cst_15 = arith.constant dense<0.000000e+00> : vector<1x64xf32>
    %22 = tpu.matmul %20, %21, %cst_15 {dimension_numbers = #tpu.dot_dimension_numbers<[1], [0], [0], [1], [0, 0, 1, 1], [], []>} : vector<1x32xbf16>, vector<32x64xbf16>, vector<1x64xf32> -> vector<1x64xf32>
    %c0_16 = arith.constant 0 : index
    %c0_17 = arith.constant 0 : index
    %c0_18 = arith.constant 0 : index
    %23 = vector.load %arg3[%c0_16, %c0_17, %c0_18] : memref<1x1x8xf32, #tpu.memory_space<vmem>>, vector<1x1x8xf32>
    %24 = vector.shape_cast %23 : vector<1x1x8xf32> to vector<1x8xf32>
    %c0_19 = arith.constant 0 : index
    %c0_20 = arith.constant 0 : index
    %25 = vector.load %arg11[%c0_19, %c0_20] : memref<8x64xf32, #tpu.memory_space<vmem>>, vector<8x64xf32>
    %26 = arith.truncf %24 : vector<1x8xf32> to vector<1x8xbf16>
    %27 = arith.truncf %25 : vector<8x64xf32> to vector<8x64xbf16>
    %cst_21 = arith.constant dense<0.000000e+00> : vector<1x64xf32>
    %28 = tpu.matmul %26, %27, %cst_21 {dimension_numbers = #tpu.dot_dimension_numbers<[1], [0], [0], [1], [0, 0, 1, 1], [], []>} : vector<1x8xbf16>, vector<8x64xbf16>, vector<1x64xf32> -> vector<1x64xf32>
    %29 = arith.addf %22, %28 : vector<1x64xf32>
    %c0_22 = arith.constant 0 : index
    %c0_23 = arith.constant 0 : index
    %30 = vector.load %arg12[%c0_22, %c0_23] : memref<1x64xf32, #tpu.memory_space<vmem>>, vector<1x64xf32>
    %31 = arith.addf %29, %30 : vector<1x64xf32>
    %c0_24 = arith.constant 0 : index
    %c0_25 = arith.constant 0 : index
    %c0_26 = arith.constant 0 : index
    %32 = vector.load %arg2[%c0_24, %c0_25, %c0_26] : memref<1x1x64xf32, #tpu.memory_space<vmem>>, vector<1x1x64xf32>
    %33 = vector.shape_cast %32 : vector<1x1x64xf32> to vector<1x64xf32>
    %34 = arith.addf %33, %31 : vector<1x64xf32>
    %cst_27 = arith.constant 0.000000e+00 : f32
    %35 = vector.broadcast %cst_27 : f32 to vector<1x64xf32>
    %36 = arith.subf %35, %34 : vector<1x64xf32>
    %37 = math.exp %36 : vector<1x64xf32>
    %cst_28 = arith.constant 1.000000e+00 : f32
    %38 = vector.broadcast %cst_28 : f32 to vector<1x64xf32>
    %39 = arith.addf %38, %37 : vector<1x64xf32>
    %40 = tpu.reciprocal %39 {approx = true} : vector<1x64xf32> -> vector<1x64xf32>
    %41 = arith.mulf %34, %40 : vector<1x64xf32>
    %c0_29 = arith.constant 0 : index
    %c0_30 = arith.constant 0 : index
    %42 = vector.load %arg13[%c0_29, %c0_30] : memref<64x64xf32, #tpu.memory_space<vmem>>, vector<64x64xf32>
    %43 = arith.truncf %41 : vector<1x64xf32> to vector<1x64xbf16>
    %44 = arith.truncf %42 : vector<64x64xf32> to vector<64x64xbf16>
    %cst_31 = arith.constant dense<0.000000e+00> : vector<1x64xf32>
    %45 = tpu.matmul %43, %44, %cst_31 {dimension_numbers = #tpu.dot_dimension_numbers<[1], [0], [0], [1], [0, 0, 1, 1], [], []>} : vector<1x64xbf16>, vector<64x64xbf16>, vector<1x64xf32> -> vector<1x64xf32>
    %c0_32 = arith.constant 0 : index
    %c0_33 = arith.constant 0 : index
    %46 = vector.load %arg14[%c0_32, %c0_33] : memref<1x64xf32, #tpu.memory_space<vmem>>, vector<1x64xf32>
    %47 = arith.addf %45, %46 : vector<1x64xf32>
    %c0_34 = arith.constant 0 : index
    %c0_35 = arith.constant 0 : index
    %c0_36 = arith.constant 0 : index
    %48 = vector.load %arg4[%c0_34, %c0_35, %c0_36] : memref<1x256x64xf32, #tpu.memory_space<vmem>>, vector<1x256x64xf32>
    %49 = vector.shape_cast %48 : vector<1x256x64xf32> to vector<256x64xf32>
    %c0_37 = arith.constant 0 : index
    %c0_38 = arith.constant 0 : index
    %50 = vector.load %arg15[%c0_37, %c0_38] : memref<64x64xf32, #tpu.memory_space<vmem>>, vector<64x64xf32>
    %51 = arith.truncf %49 : vector<256x64xf32> to vector<256x64xbf16>
    %52 = arith.truncf %50 : vector<64x64xf32> to vector<64x64xbf16>
    %cst_39 = arith.constant dense<0.000000e+00> : vector<256x64xf32>
    %53 = tpu.matmul %51, %52, %cst_39 {dimension_numbers = #tpu.dot_dimension_numbers<[1], [0], [0], [1], [0, 0, 1, 1], [], []>} : vector<256x64xbf16>, vector<64x64xbf16>, vector<256x64xf32> -> vector<256x64xf32>
    %c0_40 = arith.constant 0 : index
    %c0_41 = arith.constant 0 : index
    %54 = vector.load %arg16[%c0_40, %c0_41] : memref<1x64xf32, #tpu.memory_space<vmem>>, vector<1x64xf32>
    %55 = vector.broadcast %54 : vector<1x64xf32> to vector<256x64xf32>
    %56 = arith.addf %53, %55 : vector<256x64xf32>
    %57 = vector.broadcast %47 : vector<1x64xf32> to vector<256x64xf32>
    %58 = arith.addf %56, %57 : vector<256x64xf32>
    %c0_42 = arith.constant 0 : index
    %c0_43 = arith.constant 0 : index
    %59 = vector.load %arg17[%c0_42, %c0_43] : memref<64x64xf32, #tpu.memory_space<vmem>>, vector<64x64xf32>
    %60 = arith.truncf %58 : vector<256x64xf32> to vector<256x64xbf16>
    %61 = arith.truncf %59 : vector<64x64xf32> to vector<64x64xbf16>
    %cst_44 = arith.constant dense<0.000000e+00> : vector<256x64xf32>
    %62 = tpu.matmul %60, %61, %cst_44 {dimension_numbers = #tpu.dot_dimension_numbers<[1], [0], [0], [1], [0, 0, 1, 1], [], []>} : vector<256x64xbf16>, vector<64x64xbf16>, vector<256x64xf32> -> vector<256x64xf32>
    %c0_45 = arith.constant 0 : index
    %c0_46 = arith.constant 0 : index
    %63 = vector.load %arg18[%c0_45, %c0_46] : memref<64x128xf32, #tpu.memory_space<vmem>>, vector<64x128xf32>
    %64 = arith.truncf %8 : vector<8x64xf32> to vector<8x64xbf16>
    %65 = arith.truncf %63 : vector<64x128xf32> to vector<64x128xbf16>
    %cst_47 = arith.constant dense<0.000000e+00> : vector<8x128xf32>
    %66 = tpu.matmul %64, %65, %cst_47 {dimension_numbers = #tpu.dot_dimension_numbers<[1], [0], [0], [1], [0, 0, 1, 1], [], []>} : vector<8x64xbf16>, vector<64x128xbf16>, vector<8x128xf32> -> vector<8x128xf32>
    %67 = vector.extract_strided_slice %66 {offsets = [0, 0], sizes = [8, 64], strides = [1, 1]} : vector<8x128xf32> to vector<8x64xf32>
    %68 = vector.extract_strided_slice %66 {offsets = [0, 64], sizes = [8, 64], strides = [1, 1]} : vector<8x128xf32> to vector<8x64xf32>
    %69 = arith.truncf %62 : vector<256x64xf32> to vector<256x64xbf16>
    %70 = arith.truncf %67 : vector<8x64xf32> to vector<8x64xbf16>
    %cst_48 = arith.constant dense<0.000000e+00> : vector<256x8xf32>
    %71 = tpu.matmul %69, %70, %cst_48 {dimension_numbers = #tpu.dot_dimension_numbers<[1], [1], [0], [0], [0, 0, 1, 0], [], []>} : vector<256x64xbf16>, vector<8x64xbf16>, vector<256x8xf32> -> vector<256x8xf32>
    %cst_49 = arith.constant 1.250000e-01 : f32
    %72 = vector.broadcast %cst_49 : f32 to vector<256x8xf32>
    %73 = arith.mulf %71, %72 : vector<256x8xf32>
    %cst_50 = arith.constant dense<0xFF800000> : vector<256xf32>
    %74 = vector.multi_reduction <maximumf>, %73, %cst_50 [1] : vector<256x8xf32> to vector<256xf32>
    %75 = vector.shape_cast %74 : vector<256xf32> to vector<256x1xf32>
    %76 = vector.broadcast %75 : vector<256x1xf32> to vector<256x8xf32>
    %77 = arith.subf %73, %76 : vector<256x8xf32>
    %78 = math.exp %77 : vector<256x8xf32>
    %cst_51 = arith.constant dense<0.000000e+00> : vector<256xf32>
    %79 = vector.multi_reduction <add>, %78, %cst_51 [1] : vector<256x8xf32> to vector<256xf32>
    %80 = vector.shape_cast %79 : vector<256xf32> to vector<256x1xf32>
    %81 = tpu.reciprocal %80 {approx = true} : vector<256x1xf32> -> vector<256x1xf32>
    %82 = vector.broadcast %81 : vector<256x1xf32> to vector<256x8xf32>
    %83 = arith.mulf %78, %82 : vector<256x8xf32>
    %84 = arith.truncf %83 : vector<256x8xf32> to vector<256x8xbf16>
    %85 = arith.truncf %68 : vector<8x64xf32> to vector<8x64xbf16>
    %cst_52 = arith.constant dense<0.000000e+00> : vector<256x64xf32>
    %86 = tpu.matmul %84, %85, %cst_52 {dimension_numbers = #tpu.dot_dimension_numbers<[1], [0], [0], [1], [0, 0, 1, 1], [], []>} : vector<256x8xbf16>, vector<8x64xbf16>, vector<256x64xf32> -> vector<256x64xf32>
    %c0_53 = arith.constant 0 : index
    %c0_54 = arith.constant 0 : index
    %87 = vector.load %arg19[%c0_53, %c0_54] : memref<64x64xf32, #tpu.memory_space<vmem>>, vector<64x64xf32>
    %88 = arith.truncf %86 : vector<256x64xf32> to vector<256x64xbf16>
    %89 = arith.truncf %87 : vector<64x64xf32> to vector<64x64xbf16>
    %cst_55 = arith.constant dense<0.000000e+00> : vector<256x64xf32>
    %90 = tpu.matmul %88, %89, %cst_55 {dimension_numbers = #tpu.dot_dimension_numbers<[1], [0], [0], [1], [0, 0, 1, 1], [], []>} : vector<256x64xbf16>, vector<64x64xbf16>, vector<256x64xf32> -> vector<256x64xf32>
    %91 = arith.addf %58, %90 : vector<256x64xf32>
    %c0_56 = arith.constant 0 : index
    %c0_57 = arith.constant 0 : index
    %92 = vector.load %arg20[%c0_56, %c0_57] : memref<64x4xf32, #tpu.memory_space<vmem>>, vector<64x4xf32>
    %93 = arith.truncf %91 : vector<256x64xf32> to vector<256x64xbf16>
    %94 = arith.truncf %92 : vector<64x4xf32> to vector<64x4xbf16>
    %cst_58 = arith.constant dense<0.000000e+00> : vector<256x4xf32>
    %95 = tpu.matmul %93, %94, %cst_58 {dimension_numbers = #tpu.dot_dimension_numbers<[1], [0], [0], [1], [0, 0, 1, 1], [], []>} : vector<256x64xbf16>, vector<64x4xbf16>, vector<256x4xf32> -> vector<256x4xf32>
    %c0_59 = arith.constant 0 : index
    %c0_60 = arith.constant 0 : index
    %96 = vector.load %arg21[%c0_59, %c0_60] : memref<1x4xf32, #tpu.memory_space<vmem>>, vector<1x4xf32>
    %97 = vector.broadcast %96 : vector<1x4xf32> to vector<256x4xf32>
    %98 = arith.addf %95, %97 : vector<256x4xf32>
    %c0_61 = arith.constant 0 : index
    %c0_62 = arith.constant 0 : index
    %c0_63 = arith.constant 0 : index
    %99 = vector.load %arg22[%c0_61, %c0_62, %c0_63] : memref<1x256x4xf32, #tpu.memory_space<vmem>>, vector<1x256x4xf32>
    %100 = vector.shape_cast %99 : vector<1x256x4xf32> to vector<256x4xf32>
    %101 = vector.shape_cast %98 : vector<256x4xf32> to vector<1x256x4xf32>
    tpu.vector_store %arg22[%c0_61, %c0_62, %c0_63], %101 {strides = array<i32>} : memref<1x256x4xf32, #tpu.memory_space<vmem>>, vector<1x256x4xf32>,
    %c0_64 = arith.constant 0 : index
    %c0_65 = arith.constant 0 : index
    %c0_66 = arith.constant 0 : index
    %102 = vector.load %arg5[%c0_64, %c0_65, %c0_66] : memref<1x256x4xf32, #tpu.memory_space<vmem>>, vector<1x256x4xf32>
    %103 = vector.shape_cast %102 : vector<1x256x4xf32> to vector<256x4xf32>
    %104 = arith.subf %98, %103 : vector<256x4xf32>
    %105 = arith.mulf %104, %104 : vector<256x4xf32>
    %cst_67 = arith.constant dense<0.000000e+00> : vector<4xf32>
    %106 = vector.multi_reduction <add>, %105, %cst_67 [0] : vector<256x4xf32> to vector<4xf32>
    %107 = vector.shape_cast %106 : vector<4xf32> to vector<1x4xf32>
    %c0_68 = arith.constant 0 : index
    %c0_69 = arith.constant 0 : index
    %c0_70 = arith.constant 0 : index
    %108 = vector.load %arg23[%c0_68, %c0_69, %c0_70] : memref<1x1x4xf32, #tpu.memory_space<vmem>>, vector<1x1x4xf32>
    %109 = vector.shape_cast %108 : vector<1x1x4xf32> to vector<1x4xf32>
    %110 = vector.shape_cast %107 : vector<1x4xf32> to vector<1x1x4xf32>
    tpu.vector_store %arg23[%c0_68, %c0_69, %c0_70], %110 {strides = array<i32>} : memref<1x1x4xf32, #tpu.memory_space<vmem>>, vector<1x1x4xf32>,
    return
  }
  func.func @transform_0(%arg0: i32) -> (i32, i32, i32) {
    %c0_i32 = arith.constant 0 : i32
    %c0_i32_0 = arith.constant 0 : i32
    %c0_i32_1 = arith.constant 0 : i32
    return %arg0, %c0_i32, %c0_i32_0 : i32, i32, i32
  }
  func.func @transform_1(%arg0: i32) -> (i32, i32, i32) {
    %c0_i32 = arith.constant 0 : i32
    %c0_i32_0 = arith.constant 0 : i32
    %c0_i32_1 = arith.constant 0 : i32
    return %arg0, %c0_i32, %c0_i32_0 : i32, i32, i32
  }
  func.func @transform_2(%arg0: i32) -> (i32, i32, i32) {
    %c0_i32 = arith.constant 0 : i32
    %c0_i32_0 = arith.constant 0 : i32
    %c0_i32_1 = arith.constant 0 : i32
    return %arg0, %c0_i32, %c0_i32_0 : i32, i32, i32
  }
  func.func @transform_3(%arg0: i32) -> (i32, i32, i32) {
    %c0_i32 = arith.constant 0 : i32
    %c0_i32_0 = arith.constant 0 : i32
    %c0_i32_1 = arith.constant 0 : i32
    return %arg0, %c0_i32, %c0_i32_0 : i32, i32, i32
  }
  func.func @transform_4(%arg0: i32) -> (i32, i32, i32) {
    %c0_i32 = arith.constant 0 : i32
    %c0_i32_0 = arith.constant 0 : i32
    %c0_i32_1 = arith.constant 0 : i32
    return %arg0, %c0_i32, %c0_i32_0 : i32, i32, i32
  }
  func.func @transform_5(%arg0: i32) -> (i32, i32) {
    %c0_i32 = arith.constant 0 : i32
    %c0_i32_0 = arith.constant 0 : i32
    %c0_i32_1 = arith.constant 0 : i32
    return %c0_i32, %c0_i32_0 : i32, i32
  }
  func.func @transform_6(%arg0: i32) -> (i32, i32) {
    %c0_i32 = arith.constant 0 : i32
    %c0_i32_0 = arith.constant 0 : i32
    %c0_i32_1 = arith.constant 0 : i32
    return %c0_i32, %c0_i32_0 : i32, i32
  }
  func.func @transform_7(%arg0: i32) -> (i32, i32) {
    %c0_i32 = arith.constant 0 : i32
    %c0_i32_0 = arith.constant 0 : i32
    %c0_i32_1 = arith.constant 0 : i32
    return %c0_i32, %c0_i32_0 : i32, i32
  }
  func.func @transform_8(%arg0: i32) -> (i32, i32) {
    %c0_i32 = arith.constant 0 : i32
    %c0_i32_0 = arith.constant 0 : i32
    %c0_i32_1 = arith.constant 0 : i32
    return %c0_i32, %c0_i32_0 : i32, i32
  }
  func.func @transform_9(%arg0: i32) -> (i32, i32) {
    %c0_i32 = arith.constant 0 : i32
    %c0_i32_0 = arith.constant 0 : i32
    %c0_i32_1 = arith.constant 0 : i32
    return %c0_i32, %c0_i32_0 : i32, i32
  }
  func.func @transform_10(%arg0: i32) -> (i32, i32) {
    %c0_i32 = arith.constant 0 : i32
    %c0_i32_0 = arith.constant 0 : i32
    %c0_i32_1 = arith.constant 0 : i32
    return %c0_i32, %c0_i32_0 : i32, i32
  }
  func.func @transform_11(%arg0: i32) -> (i32, i32) {
    %c0_i32 = arith.constant 0 : i32
    %c0_i32_0 = arith.constant 0 : i32
    %c0_i32_1 = arith.constant 0 : i32
    return %c0_i32, %c0_i32_0 : i32, i32
  }
  func.func @transform_12(%arg0: i32) -> (i32, i32) {
    %c0_i32 = arith.constant 0 : i32
    %c0_i32_0 = arith.constant 0 : i32
    %c0_i32_1 = arith.constant 0 : i32
    return %c0_i32, %c0_i32_0 : i32, i32
  }
  func.func @transform_13(%arg0: i32) -> (i32, i32) {
    %c0_i32 = arith.constant 0 : i32
    %c0_i32_0 = arith.constant 0 : i32
    %c0_i32_1 = arith.constant 0 : i32
    return %c0_i32, %c0_i32_0 : i32, i32
  }
  func.func @transform_14(%arg0: i32) -> (i32, i32) {
    %c0_i32 = arith.constant 0 : i32
    %c0_i32_0 = arith.constant 0 : i32
    %c0_i32_1 = arith.constant 0 : i32
    return %c0_i32, %c0_i32_0 : i32, i32
  }
  func.func @transform_15(%arg0: i32) -> (i32, i32) {
    %c0_i32 = arith.constant 0 : i32
    %c0_i32_0 = arith.constant 0 : i32
    %c0_i32_1 = arith.constant 0 : i32
    return %c0_i32, %c0_i32_0 : i32, i32
  }
  func.func @transform_16(%arg0: i32) -> (i32, i32) {
    %c0_i32 = arith.constant 0 : i32
    %c0_i32_0 = arith.constant 0 : i32
    %c0_i32_1 = arith.constant 0 : i32
    return %c0_i32, %c0_i32_0 : i32, i32
  }
  func.func @transform_17(%arg0: i32) -> (i32, i32) {
    %c0_i32 = arith.constant 0 : i32
    %c0_i32_0 = arith.constant 0 : i32
    %c0_i32_1 = arith.constant 0 : i32
    return %c0_i32, %c0_i32_0 : i32, i32
  }
  func.func @transform_18(%arg0: i32) -> (i32, i32) {
    %c0_i32 = arith.constant 0 : i32
    %c0_i32_0 = arith.constant 0 : i32
    %c0_i32_1 = arith.constant 0 : i32
    return %c0_i32, %c0_i32_0 : i32, i32
  }
  func.func @transform_19(%arg0: i32) -> (i32, i32) {
    %c0_i32 = arith.constant 0 : i32
    %c0_i32_0 = arith.constant 0 : i32
    %c0_i32_1 = arith.constant 0 : i32
    return %c0_i32, %c0_i32_0 : i32, i32
  }
  func.func @transform_20(%arg0: i32) -> (i32, i32) {
    %c0_i32 = arith.constant 0 : i32
    %c0_i32_0 = arith.constant 0 : i32
    %c0_i32_1 = arith.constant 0 : i32
    return %c0_i32, %c0_i32_0 : i32, i32
  }
  func.func @transform_21(%arg0: i32) -> (i32, i32, i32) {
    %c0_i32 = arith.constant 0 : i32
    %c0_i32_0 = arith.constant 0 : i32
    %c0_i32_1 = arith.constant 0 : i32
    return %arg0, %c0_i32, %c0_i32_0 : i32, i32, i32
  }
  func.func @transform_22(%arg0: i32) -> (i32, i32, i32) {
    %c0_i32 = arith.constant 0 : i32
    %c0_i32_0 = arith.constant 0 : i32
    %c0_i32_1 = arith.constant 0 : i32
    return %arg0, %c0_i32, %c0_i32_0 : i32, i32, i32
  }
}

</mosaic_0001>

<llo_original>
// kernel: sdxl_adapter_forward.1
$region0: #{sdxl_adapter_forward.1}
  #allocation0 [shape = 'u32[]', space=smem, size = 0x4, offset = 0x4, fixed_abs, tag = 'smem constant byte address 0x4 - core index']
  #allocation1 [shape = 'u32[144,128]{1,0:T(1,128)}', space=vmem, size = 0x12000, scoped, tag = 'internal scratch']
  %s0 = inlined_call_operand.vmem [shape: f32[2,8,32], index: 0, kind: input, shape index: {}]
  %s1 = inlined_call_operand.vmem [shape: f32[2,1,64], index: 1, kind: input, shape index: {}]
  %s2 = inlined_call_operand.vmem [shape: f32[2,1,8], index: 2, kind: input, shape index: {}]
  %s3 = inlined_call_operand.vmem [shape: f32[2,256,64], index: 3, kind: input, shape index: {}]
  %s4 = inlined_call_operand.vmem [shape: f32[2,256,4], index: 4, kind: input, shape index: {}]
  %s5 = inlined_call_operand.vmem [shape: f32[32,64], index: 5, kind: input, shape index: {}]
  %s6 = inlined_call_operand.vmem [shape: f32[1,64], index: 6, kind: input, shape index: {}]
  %s7 = inlined_call_operand.vmem [shape: f32[64,32], index: 7, kind: input, shape index: {}]
  %s8 = inlined_call_operand.vmem [shape: f32[1,32], index: 8, kind: input, shape index: {}]
  %s9 = inlined_call_operand.vmem [shape: f32[32,64], index: 9, kind: input, shape index: {}]
  %s10 = inlined_call_operand.vmem [shape: f32[8,64], index: 10, kind: input, shape index: {}]
  %s11 = inlined_call_operand.vmem [shape: f32[1,64], index: 11, kind: input, shape index: {}]
  %s12 = inlined_call_operand.vmem [shape: f32[64,64], index: 12, kind: input, shape index: {}]
  %s13 = inlined_call_operand.vmem [shape: f32[1,64], index: 13, kind: input, shape index: {}]
  %s14 = inlined_call_operand.vmem [shape: f32[64,64], index: 14, kind: input, shape index: {}]
  %s15 = inlined_call_operand.vmem [shape: f32[1,64], index: 15, kind: input, shape index: {}]
  %s16 = inlined_call_operand.vmem [shape: f32[64,64], index: 16, kind: input, shape index: {}]
  %s17 = inlined_call_operand.vmem [shape: f32[64,128], index: 17, kind: input, shape index: {}]
  %s18 = inlined_call_operand.vmem [shape: f32[64,64], index: 18, kind: input, shape index: {}]
  %s19 = inlined_call_operand.vmem [shape: f32[64,4], index: 19, kind: input, shape index: {}]
  %s20 = inlined_call_operand.vmem [shape: f32[1,4], index: 20, kind: input, shape index: {}]
  %s21 = inlined_call_operand.vmem [shape: f32[2,256,4], index: 21, kind: output, shape index: {0}]
  %s22 = inlined_call_operand.vmem [shape: f32[2,1,4], index: 22, kind: output, shape index: {1}]
  %23 = xla_tuple %s21, %s22
  %s24 = sld [smem:[#allocation0]]
  $region125: #{sdxl_adapter_forward.1} parent=0
    _
  %s26 = ssub.s32 1, %s24
  %s27 = scalar_select 0, %s26, %s24
  loop: start=0, step=1, limit=4
  $region2: #{sdxl_adapter_forward.1} parent=0 // loop_pre_header
    _
  $region3: #{sdxl_adapter_forward.1} parent=0 // loop_header
    %s29 = sphi 0, %s33
    %p30 = scmp.ge.s32.totalorder %s29, 4
    %s39 = sphi 0, %s41
    %s42 = sphi 0, %s39
    %s43 = sphi 0, %s42
    %s59 = sphi 0, %s43
    %s65 = sphi 0, %s67
    %s68 = sphi 0, %s65
    %s69 = sphi 0, %s68
    %s85 = sphi 0, %s69
    %s91 = sphi 0, %s93
    %s94 = sphi 0, %s91
    %s95 = sphi 0, %s94
    %s111 = sphi 0, %s95
    %s117 = sphi 0, %s119
    %s120 = sphi 0, %s117
    %s121 = sphi 0, %s120
    %s137 = sphi 0, %s121
    %s143 = sphi 0, %s145
    %s146 = sphi 0, %s143
    %s147 = sphi 0, %s146
    %s163 = sphi 0, %s147
    %s167 = sphi 0, %s167
    %s169 = sphi 0, %s167
    %s170 = sphi 0, %s169
    %s184 = sphi 0, %s170
    %s188 = sphi 0, %s188
    %s190 = sphi 0, %s188
    %s191 = sphi 0, %s190
    %s205 = sphi 0, %s191
    %s209 = sphi 0, %s209
    %s211 = sphi 0, %s209
    %s212 = sphi 0, %s211
    %s226 = sphi 0, %s212
    %s230 = sphi 0, %s230
    %s232 = sphi 0, %s230
    %s233 = sphi 0, %s232
    %s247 = sphi 0, %s233
    %s251 = sphi 0, %s251
    %s253 = sphi 0, %s251
    %s254 = sphi 0, %s253
    %s268 = sphi 0, %s254
    %s272 = sphi 0, %s272
    %s274 = sphi 0, %s272
    %s275 = sphi 0, %s274
    %s289 = sphi 0, %s275
    %s293 = sphi 0, %s293
    %s295 = sphi 0, %s293
    %s296 = sphi 0, %s295
    %s310 = sphi 0, %s296
    %s314 = sphi 0, %s314
    %s316 = sphi 0, %s314
    %s317 = sphi 0, %s316
    %s331 = sphi 0, %s317
    %s335 = sphi 0, %s335
    %s337 = sphi 0, %s335
    %s338 = sphi 0, %s337
    %s352 = sphi 0, %s338
    %s356 = sphi 0, %s356
    %s358 = sphi 0, %s356
    %s359 = sphi 0, %s358
    %s373 = sphi 0, %s359
    %s377 = sphi 0, %s377
    %s379 = sphi 0, %s377
    %s380 = sphi 0, %s379
    %s394 = sphi 0, %s380
    %s398 = sphi 0, %s398
    %s400 = sphi 0, %s398
    %s401 = sphi 0, %s400
    %s415 = sphi 0, %s401
    %s419 = sphi 0, %s419
    %s421 = sphi 0, %s419
    %s422 = sphi 0, %s421
    %s436 = sphi 0, %s422
    %s440 = sphi 0, %s440
    %s442 = sphi 0, %s440
    %s443 = sphi 0, %s442
    %s457 = sphi 0, %s443
    %s461 = sphi 0, %s461
    %s463 = sphi 0, %s461
    %s464 = sphi 0, %s463
    %s478 = sphi 0, %s464
    %s482 = sphi 0, %s482
    %s484 = sphi 0, %s482
    %s485 = sphi 0, %s484
    %s499 = sphi 0, %s485
    %s505 = sphi 0, %s507
    %s508 = sphi 0, %s505
    %s509 = sphi 0, %s508
    %s525 = sphi 0, %s509
    %s531 = sphi 0, %s533
    %s534 = sphi 0, %s531
    %s535 = sphi 0, %s534
    %s551 = sphi 0, %s535
  $region4: #{sdxl_adapter_forward.1} parent=0 // loop_header_branch
    %32 = sbr.rel (%p30) target = $region8
  $region5: #{sdxl_adapter_forward.1} parent=0 // loop_body
    %s34 = ssub.s32 %s29, 1
    %s35 = ssub.s32 %s29, 2
    %s36 = sadd.s32 %s29, 1
    %s37 = ssub.s32 %s29, %s36
    %p38 = scmp.eq.s32.totalorder %s37, 0
    %s40 = sadd.s32 %s39, 1
    %s41 = scalar_select %p38, %s39, %s40
    %p44 = pneg %p38
    %p45 = scmp.eq.s32.totalorder %s29, 1
    %p46 = por %p44, %p45
    %p47 = scmp.ne.s32.totalorder %s39, %s42
    %p48 = scmp.eq.s32.totalorder %s29, 0
    %p49 = por %p47, %p48
    %p50 = scmp.ne.s32.totalorder %s39, %s42
    %p51 = scmp.eq.s32.totalorder %s34, 1
    %p52 = por %p50, %p51
    %p53 = scmp.ne.s32.totalorder %s42, %s43
    %p54 = scmp.eq.s32.totalorder %s34, 0
    %p55 = por %p53, %p54
    %p56 = scmp.ne.s32.totalorder %s42, %s43
    %p57 = scmp.eq.s32.totalorder %s35, 1
    %p58 = por %p56, %p57
    %p60 = scmp.ne.s32.totalorder %s43, %s59
    %p61 = scmp.eq.s32.totalorder %s35, 0
    %p62 = por %p60, %p61
    %s63 = ssub.s32 %s29, %s36
    %p64 = scmp.eq.s32.totalorder %s63, 0
    %s66 = sadd.s32 %s65, 1
    %s67 = scalar_select %p64, %s65, %s66
    %p70 = pneg %p64
    %p71 = scmp.eq.s32.totalorder %s29, 1
    %p72 = por %p70, %p71
    %p73 = scmp.ne.s32.totalorder %s65, %s68
    %p74 = scmp.eq.s32.totalorder %s29, 0
    %p75 = por %p73, %p74
    %p76 = scmp.ne.s32.totalorder %s65, %s68
    %p77 = scmp.eq.s32.totalorder %s34, 1
    %p78 = por %p76, %p77
    %p79 = scmp.ne.s32.totalorder %s68, %s69
    %p80 = scmp.eq.s32.totalorder %s34, 0
    %p81 = por %p79, %p80
    %p82 = scmp.ne.s32.totalorder %s68, %s69
    %p83 = scmp.eq.s32.totalorder %s35, 1
    %p84 = por %p82, %p83
    %p86 = scmp.ne.s32.totalorder %s69, %s85
    %p87 = scmp.eq.s32.totalorder %s35, 0
    %p88 = por %p86, %p87
    %s89 = ssub.s32 %s29, %s36
    %p90 = scmp.eq.s32.totalorder %s89, 0
    %s92 = sadd.s32 %s91, 1
    %s93 = scalar_select %p90, %s91, %s92
    %p96 = pneg %p90
    %p97 = scmp.eq.s32.totalorder %s29, 1
    %p98 = por %p96, %p97
    %p99 = scmp.ne.s32.totalorder %s91, %s94
    %p100 = scmp.eq.s32.totalorder %s29, 0
    %p101 = por %p99, %p100
    %p102 = scmp.ne.s32.totalorder %s91, %s94
    %p103 = scmp.eq.s32.totalorder %s34, 1
    %p104 = por %p102, %p103
    %p105 = scmp.ne.s32.totalorder %s94, %s95
    %p106 = scmp.eq.s32.totalorder %s34, 0
    %p107 = por %p105, %p106
    %p108 = scmp.ne.s32.totalorder %s94, %s95
    %p109 = scmp.eq.s32.totalorder %s35, 1
    %p110 = por %p108, %p109
    %p112 = scmp.ne.s32.totalorder %s95, %s111
    %p113 = scmp.eq.s32.totalorder %s35, 0
    %p114 = por %p112, %p113
    %s115 = ssub.s32 %s29, %s36
    %p116 = scmp.eq.s32.totalorder %s115, 0
    %s118 = sadd.s32 %s117, 1
    %s119 = scalar_select %p116, %s117, %s118
    %p122 = pneg %p116
    %p123 = scmp.eq.s32.totalorder %s29, 1
    %p124 = por %p122, %p123
    %p125 = scmp.ne.s32.totalorder %s117, %s120
    %p126 = scmp.eq.s32.totalorder %s29, 0
    %p127 = por %p125, %p126
    %p128 = scmp.ne.s32.totalorder %s117, %s120
    %p129 = scmp.eq.s32.totalorder %s34, 1
    %p130 = por %p128, %p129
    %p131 = scmp.ne.s32.totalorder %s120, %s121
    %p132 = scmp.eq.s32.totalorder %s34, 0
    %p133 = por %p131, %p132
    %p134 = scmp.ne.s32.totalorder %s120, %s121
    %p135 = scmp.eq.s32.totalorder %s35, 1
    %p136 = por %p134, %p135
    %p138 = scmp.ne.s32.totalorder %s121, %s137
    %p139 = scmp.eq.s32.totalorder %s35, 0
    %p140 = por %p138, %p139
    %s141 = ssub.s32 %s29, %s36
    %p142 = scmp.eq.s32.totalorder %s141, 0
    %s144 = sadd.s32 %s143, 1
    %s145 = scalar_select %p142, %s143, %s144
    %p148 = pneg %p142
    %p149 = scmp.eq.s32.totalorder %s29, 1
    %p150 = por %p148, %p149
    %p151 = scmp.ne.s32.totalorder %s143, %s146
    %p152 = scmp.eq.s32.totalorder %s29, 0
    %p153 = por %p151, %p152
    %p154 = scmp.ne.s32.totalorder %s143, %s146
    %p155 = scmp.eq.s32.totalorder %s34, 1
    %p156 = por %p154, %p155
    %p157 = scmp.ne.s32.totalorder %s146, %s147
    %p158 = scmp.eq.s32.totalorder %s34, 0
    %p159 = por %p157, %p158
    %p160 = scmp.ne.s32.totalorder %s146, %s147
    %p161 = scmp.eq.s32.totalorder %s35, 1
    %p162 = por %p160, %p161
    %p164 = scmp.ne.s32.totalorder %s147, %s163
    %p165 = scmp.eq.s32.totalorder %s35, 0
    %p166 = por %p164, %p165
    %s168 = sadd.s32 %s167, 1
    %p171 = scmp.eq.s32.totalorder %s29, 1
    %p172 = scmp.ne.s32.totalorder %s167, %s169
    %p173 = scmp.eq.s32.totalorder %s29, 0
    %p174 = por %p172, %p173
    %p175 = scmp.ne.s32.totalorder %s167, %s169
    %p176 = scmp.eq.s32.totalorder %s34, 1
    %p177 = por %p175, %p176
    %p178 = scmp.ne.s32.totalorder %s169, %s170
    %p179 = scmp.eq.s32.totalorder %s34, 0
    %p180 = por %p178, %p179
    %p181 = scmp.ne.s32.totalorder %s169, %s170
    %p182 = scmp.eq.s32.totalorder %s35, 1
    %p183 = por %p181, %p182
    %p185 = scmp.ne.s32.totalorder %s170, %s184
    %p186 = scmp.eq.s32.totalorder %s35, 0
    %p187 = por %p185, %p186
    %s189 = sadd.s32 %s188, 1
    %p192 = scmp.eq.s32.totalorder %s29, 1
    %p193 = scmp.ne.s32.totalorder %s188, %s190
    %p194 = scmp.eq.s32.totalorder %s29, 0
    %p195 = por %p193, %p194
    %p196 = scmp.ne.s32.totalorder %s188, %s190
    %p197 = scmp.eq.s32.totalorder %s34, 1
    %p198 = por %p196, %p197
    %p199 = scmp.ne.s32.totalorder %s190, %s191
    %p200 = scmp.eq.s32.totalorder %s34, 0
    %p201 = por %p199, %p200
    %p202 = scmp.ne.s32.totalorder %s190, %s191
    %p203 = scmp.eq.s32.totalorder %s35, 1
    %p204 = por %p202, %p203
    %p206 = scmp.ne.s32.totalorder %s191, %s205
    %p207 = scmp.eq.s32.totalorder %s35, 0
    %p208 = por %p206, %p207
    %s210 = sadd.s32 %s209, 1
    %p213 = scmp.eq.s32.totalorder %s29, 1
    %p214 = scmp.ne.s32.totalorder %s209, %s211
    %p215 = scmp.eq.s32.totalorder %s29, 0
    %p216 = por %p214, %p215
    %p217 = scmp.ne.s32.totalorder %s209, %s211
    %p218 = scmp.eq.s32.totalorder %s34, 1
    %p219 = por %p217, %p218
    %p220 = scmp.ne.s32.totalorder %s211, %s212
    %p221 = scmp.eq.s32.totalorder %s34, 0
    %p222 = por %p220, %p221
    %p223 = scmp.ne.s32.totalorder %s211, %s212
    %p224 = scmp.eq.s32.totalorder %s35, 1
    %p225 = por %p223, %p224
    %p227 = scmp.ne.s32.totalorder %s212, %s226
    %p228 = scmp.eq.s32.totalorder %s35, 0
    %p229 = por %p227, %p228
    %s231 = sadd.s32 %s230, 1
    %p234 = scmp.eq.s32.totalorder %s29, 1
    %p235 = scmp.ne.s32.totalorder %s230, %s232
    %p236 = scmp.eq.s32.totalorder %s29, 0
    %p237 = por %p235, %p236
    %p238 = scmp.ne.s32.totalorder %s230, %s232
    %p239 = scmp.eq.s32.totalorder %s34, 1
    %p240 = por %p238, %p239
    %p241 = scmp.ne.s32.totalorder %s232, %s233
    %p242 = scmp.eq.s32.totalorder %s34, 0
    %p243 = por %p241, %p242
    %p244 = scmp.ne.s32.totalorder %s232, %s233
    %p245 = scmp.eq.s32.totalorder %s35, 1
    %p246 = por %p244, %p245
    %p248 = scmp.ne.s32.totalorder %s233, %s247
    %p249 = scmp.eq.s32.totalorder %s35, 0
    %p250 = por %p248, %p249
    %s252 = sadd.s32 %s251, 1
    %p255 = scmp.eq.s32.totalorder %s29, 1
    %p256 = scmp.ne.s32.totalorder %s251, %s253
    %p257 = scmp.eq.s32.totalorder %s29, 0
    %p258 = por %p256, %p257
    %p259 = scmp.ne.s32.totalorder %s251, %s253
    %p260 = scmp.eq.s32.totalorder %s34, 1
    %p261 = por %p259, %p260
    %p262 = scmp.ne.s32.totalorder %s253, %s254
    %p263 = scmp.eq.s32.totalorder %s34, 0
    %p264 = por %p262, %p263
    %p265 = scmp.ne.s32.totalorder %s253, %s254
    %p266 = scmp.eq.s32.totalorder %s35, 1
    %p267 = por %p265, %p266
    %p269 = scmp.ne.s32.totalorder %s254, %s268
    %p270 = scmp.eq.s32.totalorder %s35, 0
    %p271 = por %p269, %p270
    %s273 = sadd.s32 %s272, 1
    %p276 = scmp.eq.s32.totalorder %s29, 1
    %p277 = scmp.ne.s32.totalorder %s272, %s274
    %p278 = scmp.eq.s32.totalorder %s29, 0
    %p279 = por %p277, %p278
    %p280 = scmp.ne.s32.totalorder %s272, %s274
    %p281 = scmp.eq.s32.totalorder %s34, 1
    %p282 = por %p280, %p281
    %p283 = scmp.ne.s32.totalorder %s274, %s275
    %p284 = scmp.eq.s32.totalorder %s34, 0
    %p285 = por %p283, %p284
    %p286 = scmp.ne.s32.totalorder %s274, %s275
    %p287 = scmp.eq.s32.totalorder %s35, 1
    %p288 = por %p286, %p287
    %p290 = scmp.ne.s32.totalorder %s275, %s289
    %p291 = scmp.eq.s32.totalorder %s35, 0
    %p292 = por %p290, %p291
    %s294 = sadd.s32 %s293, 1
    %p297 = scmp.eq.s32.totalorder %s29, 1
    %p298 = scmp.ne.s32.totalorder %s293, %s295
    %p299 = scmp.eq.s32.totalorder %s29, 0
    %p300 = por %p298, %p299
    %p301 = scmp.ne.s32.totalorder %s293, %s295
    %p302 = scmp.eq.s32.totalorder %s34, 1
    %p303 = por %p301, %p302
    %p304 = scmp.ne.s32.totalorder %s295, %s296
    %p305 = scmp.eq.s32.totalorder %s34, 0
    %p306 = por %p304, %p305
    %p307 = scmp.ne.s32.totalorder %s295, %s296
    %p308 = scmp.eq.s32.totalorder %s35, 1
    %p309 = por %p307, %p308
    %p311 = scmp.ne.s32.totalorder %s296, %s310
    %p312 = scmp.eq.s32.totalorder %s35, 0
    %p313 = por %p311, %p312
    %s315 = sadd.s32 %s314, 1
    %p318 = scmp.eq.s32.totalorder %s29, 1
    %p319 = scmp.ne.s32.totalorder %s314, %s316
    %p320 = scmp.eq.s32.totalorder %s29, 0
    %p321 = por %p319, %p320
    %p322 = scmp.ne.s32.totalorder %s314, %s316
    %p323 = scmp.eq.s32.totalorder %s34, 1
    %p324 = por %p322, %p323
    %p325 = scmp.ne.s32.totalorder %s316, %s317
    %p326 = scmp.eq.s32.totalorder %s34, 0
    %p327 = por %p325, %p326
    %p328 = scmp.ne.s32.totalorder %s316, %s317
    %p329 = scmp.eq.s32.totalorder %s35, 1
    %p330 = por %p328, %p329
    %p332 = scmp.ne.s32.totalorder %s317, %s331
    %p333 = scmp.eq.s32.totalorder %s35, 0
    %p334 = por %p332, %p333
    %s336 = sadd.s32 %s335, 1
    %p339 = scmp.eq.s32.totalorder %s29, 1
    %p340 = scmp.ne.s32.totalorder %s335, %s337
    %p341 = scmp.eq.s32.totalorder %s29, 0
    %p342 = por %p340, %p341
    %p343 = scmp.ne.s32.totalorder %s335, %s337
    %p344 = scmp.eq.s32.totalorder %s34, 1
    %p345 = por %p343, %p344
    %p346 = scmp.ne.s32.totalorder %s337, %s338
    %p347 = scmp.eq.s32.totalorder %s34, 0
    %p348 = por %p346, %p347
    %p349 = scmp.ne.s32.totalorder %s337, %s338
    %p350 = scmp.eq.s32.totalorder %s35, 1
    %p351 = por %p349, %p350
    %p353 = scmp.ne.s32.totalorder %s338, %s352
    %p354 = scmp.eq.s32.totalorder %s35, 0
    %p355 = por %p353, %p354
    %s357 = sadd.s32 %s356, 1
    %p360 = scmp.eq.s32.totalorder %s29, 1
    %p361 = scmp.ne.s32.totalorder %s356, %s358
    %p362 = scmp.eq.s32.totalorder %s29, 0
    %p363 = por %p361, %p362
    %p364 = scmp.ne.s32.totalorder %s356, %s358
    %p365 = scmp.eq.s32.totalorder %s34, 1
    %p366 = por %p364, %p365
    %p367 = scmp.ne.s32.totalorder %s358, %s359
    %p368 = scmp.eq.s32.totalorder %s34, 0
    %p369 = por %p367, %p368
    %p370 = scmp.ne.s32.totalorder %s358, %s359
    %p371 = scmp.eq.s32.totalorder %s35, 1
    %p372 = por %p370, %p371
    %p374 = scmp.ne.s32.totalorder %s359, %s373
    %p375 = scmp.eq.s32.totalorder %s35, 0
    %p376 = por %p374, %p375
    %s378 = sadd.s32 %s377, 1
    %p381 = scmp.eq.s32.totalorder %s29, 1
    %p382 = scmp.ne.s32.totalorder %s377, %s379
    %p383 = scmp.eq.s32.totalorder %s29, 0
    %p384 = por %p382, %p383
    %p385 = scmp.ne.s32.totalorder %s377, %s379
    %p386 = scmp.eq.s32.totalorder %s34, 1
    %p387 = por %p385, %p386
    %p388 = scmp.ne.s32.totalorder %s379, %s380
    %p389 = scmp.eq.s32.totalorder %s34, 0
    %p390 = por %p388, %p389
    %p391 = scmp.ne.s32.totalorder %s379, %s380
    %p392 = scmp.eq.s32.totalorder %s35, 1
    %p393 = por %p391, %p392
    %p395 = scmp.ne.s32.totalorder %s380, %s394
    %p396 = scmp.eq.s32.totalorder %s35, 0
    %p397 = por %p395, %p396
    %s399 = sadd.s32 %s398, 1
    %p402 = scmp.eq.s32.totalorder %s29, 1
    %p403 = scmp.ne.s32.totalorder %s398, %s400
    %p404 = scmp.eq.s32.totalorder %s29, 0
    %p405 = por %p403, %p404
    %p406 = scmp.ne.s32.totalorder %s398, %s400
    %p407 = scmp.eq.s32.totalorder %s34, 1
    %p408 = por %p406, %p407
    %p409 = scmp.ne.s32.totalorder %s400, %s401
    %p410 = scmp.eq.s32.totalorder %s34, 0
    %p411 = por %p409, %p410
    %p412 = scmp.ne.s32.totalorder %s400, %s401
    %p413 = scmp.eq.s32.totalorder %s35, 1
    %p414 = por %p412, %p413
    %p416 = scmp.ne.s32.totalorder %s401, %s415
    %p417 = scmp.eq.s32.totalorder %s35, 0
    %p418 = por %p416, %p417
    %s420 = sadd.s32 %s419, 1
    %p423 = scmp.eq.s32.totalorder %s29, 1
    %p424 = scmp.ne.s32.totalorder %s419, %s421
    %p425 = scmp.eq.s32.totalorder %s29, 0
    %p426 = por %p424, %p425
    %p427 = scmp.ne.s32.totalorder %s419, %s421
    %p428 = scmp.eq.s32.totalorder %s34, 1
    %p429 = por %p427, %p428
    %p430 = scmp.ne.s32.totalorder %s421, %s422
    %p431 = scmp.eq.s32.totalorder %s34, 0
    %p432 = por %p430, %p431
    %p433 = scmp.ne.s32.totalorder %s421, %s422
    %p434 = scmp.eq.s32.totalorder %s35, 1
    %p435 = por %p433, %p434
    %p437 = scmp.ne.s32.totalorder %s422, %s436
    %p438 = scmp.eq.s32.totalorder %s35, 0
    %p439 = por %p437, %p438
    %s441 = sadd.s32 %s440, 1
    %p444 = scmp.eq.s32.totalorder %s29, 1
    %p445 = scmp.ne.s32.totalorder %s440, %s442
    %p446 = scmp.eq.s32.totalorder %s29, 0
    %p447 = por %p445, %p446
    %p448 = scmp.ne.s32.totalorder %s440, %s442
    %p449 = scmp.eq.s32.totalorder %s34, 1
    %p450 = por %p448, %p449
    %p451 = scmp.ne.s32.totalorder %s442, %s443
    %p452 = scmp.eq.s32.totalorder %s34, 0
    %p453 = por %p451, %p452
    %p454 = scmp.ne.s32.totalorder %s442, %s443
    %p455 = scmp.eq.s32.totalorder %s35, 1
    %p456 = por %p454, %p455
    %p458 = scmp.ne.s32.totalorder %s443, %s457
    %p459 = scmp.eq.s32.totalorder %s35, 0
    %p460 = por %p458, %p459
    %s462 = sadd.s32 %s461, 1
    %p465 = scmp.eq.s32.totalorder %s29, 1
    %p466 = scmp.ne.s32.totalorder %s461, %s463
    %p467 = scmp.eq.s32.totalorder %s29, 0
    %p468 = por %p466, %p467
    %p469 = scmp.ne.s32.totalorder %s461, %s463
    %p470 = scmp.eq.s32.totalorder %s34, 1
    %p471 = por %p469, %p470
    %p472 = scmp.ne.s32.totalorder %s463, %s464
    %p473 = scmp.eq.s32.totalorder %s34, 0
    %p474 = por %p472, %p473
    %p475 = scmp.ne.s32.totalorder %s463, %s464
    %p476 = scmp.eq.s32.totalorder %s35, 1
    %p477 = por %p475, %p476
    %p479 = scmp.ne.s32.totalorder %s464, %s478
    %p480 = scmp.eq.s32.totalorder %s35, 0
    %p481 = por %p479, %p480
    %s483 = sadd.s32 %s482, 1
    %p486 = scmp.eq.s32.totalorder %s29, 1
    %p487 = scmp.ne.s32.totalorder %s482, %s484
    %p488 = scmp.eq.s32.totalorder %s29, 0
    %p489 = por %p487, %p488
    %p490 = scmp.ne.s32.totalorder %s482, %s484
    %p491 = scmp.eq.s32.totalorder %s34, 1
    %p492 = por %p490, %p491
    %p493 = scmp.ne.s32.totalorder %s484, %s485
    %p494 = scmp.eq.s32.totalorder %s34, 0
    %p495 = por %p493, %p494
    %p496 = scmp.ne.s32.totalorder %s484, %s485
    %p497 = scmp.eq.s32.totalorder %s35, 1
    %p498 = por %p496, %p497
    %p500 = scmp.ne.s32.totalorder %s485, %s499
    %p501 = scmp.eq.s32.totalorder %s35, 0
    %p502 = por %p500, %p501
    %s503 = ssub.s32 %s29, %s36
    %p504 = scmp.eq.s32.totalorder %s503, 0
    %s506 = sadd.s32 %s505, 1
    %s507 = scalar_select %p504, %s505, %s506
    %p510 = pneg %p504
    %p511 = scmp.eq.s32.totalorder %s29, 1
    %p512 = por %p510, %p511
    %p513 = scmp.ne.s32.totalorder %s505, %s508
    %p514 = scmp.eq.s32.totalorder %s29, 0
    %p515 = por %p513, %p514
    %p516 = scmp.ne.s32.totalorder %s505, %s508
    %p517 = scmp.eq.s32.totalorder %s34, 1
    %p518 = por %p516, %p517
    %p519 = scmp.ne.s32.totalorder %s508, %s509
    %p520 = scmp.eq.s32.totalorder %s34, 0
    %p521 = por %p519, %p520
    %p522 = scmp.ne.s32.totalorder %s508, %s509
    %p523 = scmp.eq.s32.totalorder %s35, 1
    %p524 = por %p522, %p523
    %p526 = scmp.ne.s32.totalorder %s509, %s525
    %p527 = scmp.eq.s32.totalorder %s35, 0
    %p528 = por %p526, %p527
    %s529 = ssub.s32 %s29, %s36
    %p530 = scmp.eq.s32.totalorder %s529, 0
    %s532 = sadd.s32 %s531, 1
    %s533 = scalar_select %p530, %s531, %s532
    %p536 = pneg %p530
    %p537 = scmp.eq.s32.totalorder %s29, 1
    %p538 = por %p536, %p537
    %p539 = scmp.ne.s32.totalorder %s531, %s534
    %p540 = scmp.eq.s32.totalorder %s29, 0
    %p541 = por %p539, %p540
    %p542 = scmp.ne.s32.totalorder %s531, %s534
    %p543 = scmp.eq.s32.totalorder %s34, 1
    %p544 = por %p542, %p543
    %p545 = scmp.ne.s32.totalorder %s534, %s535
    %p546 = scmp.eq.s32.totalorder %s34, 0
    %p547 = por %p545, %p546
    %p548 = scmp.ne.s32.totalorder %s534, %s535
    %p549 = scmp.eq.s32.totalorder %s35, 1
    %p550 = por %p548, %p549
    %p552 = scmp.ne.s32.totalorder %s535, %s551
    %p553 = scmp.eq.s32.totalorder %s35, 0
    %p554 = por %p552, %p553
    %p555 = scmp.le.s32.totalorder 1, %s29
    %p556 = scmp.lt.s32.totalorder %s29, 3
    %p557 = pnand %p555, %p556
    %p558 = pneg %p557
    // Predicated region
    $region9: #{sdxl_adapter_forward.1} parent=5 // pred_check
      _
    $region10: #{sdxl_adapter_forward.1} parent=5 // pred_check_branch
      %560 = sbr.rel (%p557) target = $region12
    $region11: #{sdxl_adapter_forward.1} parent=5 // pred_region
      %s561 = ssub.s32 %s29, 1
      // Predicated region
      $region13: #{sdxl_adapter_forward.1} parent=11 // pred_check
        %p562 = pneg %p180
      $region14: #{sdxl_adapter_forward.1} parent=11 // pred_check_branch
        %564 = sbr.rel (%p562) target = $region16
      $region15: #{sdxl_adapter_forward.1} parent=11 // pred_region
        _
      $region16: #{sdxl_adapter_forward.1} parent=11 // pred_fallthru
        _
      // Predicated region
      $region17: #{sdxl_adapter_forward.1} parent=11 // pred_check
        %p565 = pneg %p201
      $region18: #{sdxl_adapter_forward.1} parent=11 // pred_check_branch
        %567 = sbr.rel (%p565) target = $region20
      $region19: #{sdxl_adapter_forward.1} parent=11 // pred_region
        _
      $region20: #{sdxl_adapter_forward.1} parent=11 // pred_fallthru
        _
      // Predicated region
      $region21: #{sdxl_adapter_forward.1} parent=11 // pred_check
        %p568 = pneg %p222
      $region22: #{sdxl_adapter_forward.1} parent=11 // pred_check_branch
        %570 = sbr.rel (%p568) target = $region24
      $region23: #{sdxl_adapter_forward.1} parent=11 // pred_region
        _
      $region24: #{sdxl_adapter_forward.1} parent=11 // pred_fallthru
        _
      // Predicated region
      $region25: #{sdxl_adapter_forward.1} parent=11 // pred_check
        %p571 = pneg %p243
      $region26: #{sdxl_adapter_forward.1} parent=11 // pred_check_branch
        %573 = sbr.rel (%p571) target = $region28
      $region27: #{sdxl_adapter_forward.1} parent=11 // pred_region
        _
      $region28: #{sdxl_adapter_forward.1} parent=11 // pred_fallthru
        _
      // Predicated region
      $region29: #{sdxl_adapter_forward.1} parent=11 // pred_check
        %p574 = pneg %p264
      $region30: #{sdxl_adapter_forward.1} parent=11 // pred_check_branch
        %576 = sbr.rel (%p574) target = $region32
      $region31: #{sdxl_adapter_forward.1} parent=11 // pred_region
        _
      $region32: #{sdxl_adapter_forward.1} parent=11 // pred_fallthru
        _
      // Predicated region
      $region33: #{sdxl_adapter_forward.1} parent=11 // pred_check
        %p577 = pneg %p285
      $region34: #{sdxl_adapter_forward.1} parent=11 // pred_check_branch
        %579 = sbr.rel (%p577) target = $region36
      $region35: #{sdxl_adapter_forward.1} parent=11 // pred_region
        _
      $region36: #{sdxl_adapter_forward.1} parent=11 // pred_fallthru
        _
      // Predicated region
      $region37: #{sdxl_adapter_forward.1} parent=11 // pred_check
        %p580 = pneg %p306
      $region38: #{sdxl_adapter_forward.1} parent=11 // pred_check_branch
        %582 = sbr.rel (%p580) target = $region40
      $region39: #{sdxl_adapter_forward.1} parent=11 // pred_region
        _
      $region40: #{sdxl_adapter_forward.1} parent=11 // pred_fallthru
        _
      // Predicated region
      $region41: #{sdxl_adapter_forward.1} parent=11 // pred_check
        %p583 = pneg %p327
      $region42: #{sdxl_adapter_forward.1} parent=11 // pred_check_branch
        %585 = sbr.rel (%p583) target = $region44
      $region43: #{sdxl_adapter_forward.1} parent=11 // pred_region
        _
      $region44: #{sdxl_adapter_forward.1} parent=11 // pred_fallthru
        _
      // Predicated region
      $region45: #{sdxl_adapter_forward.1} parent=11 // pred_check
        %p586 = pneg %p348
      $region46: #{sdxl_adapter_forward.1} parent=11 // pred_check_branch
        %588 = sbr.rel (%p586) target = $region48
      $region47: #{sdxl_adapter_forward.1} parent=11 // pred_region
        _
      $region48: #{sdxl_adapter_forward.1} parent=11 // pred_fallthru
        _
      // Predicated region
      $region49: #{sdxl_adapter_forward.1} parent=11 // pred_check
        %p589 = pneg %p369
      $region50: #{sdxl_adapter_forward.1} parent=11 // pred_check_branch
        %591 = sbr.rel (%p589) target = $region52
      $region51: #{sdxl_adapter_forward.1} parent=11 // pred_region
        _
      $region52: #{sdxl_adapter_forward.1} parent=11 // pred_fallthru
        _
      // Predicated region
      $region53: #{sdxl_adapter_forward.1} parent=11 // pred_check
        %p592 = pneg %p390
      $region54: #{sdxl_adapter_forward.1} parent=11 // pred_check_branch
        %594 = sbr.rel (%p592) target = $region56
      $region55: #{sdxl_adapter_forward.1} parent=11 // pred_region
        _
      $region56: #{sdxl_adapter_forward.1} parent=11 // pred_fallthru
        _
      // Predicated region
      $region57: #{sdxl_adapter_forward.1} parent=11 // pred_check
        %p595 = pneg %p411
      $region58: #{sdxl_adapter_forward.1} parent=11 // pred_check_branch
        %597 = sbr.rel (%p595) target = $region60
      $region59: #{sdxl_adapter_forward.1} parent=11 // pred_region
        _
      $region60: #{sdxl_adapter_forward.1} parent=11 // pred_fallthru
        _
      // Predicated region
      $region61: #{sdxl_adapter_forward.1} parent=11 // pred_check
        %p598 = pneg %p432
      $region62: #{sdxl_adapter_forward.1} parent=11 // pred_check_branch
        %600 = sbr.rel (%p598) target = $region64
      $region63: #{sdxl_adapter_forward.1} parent=11 // pred_region
        _
      $region64: #{sdxl_adapter_forward.1} parent=11 // pred_fallthru
        _
      // Predicated region
      $region65: #{sdxl_adapter_forward.1} parent=11 // pred_check
        %p601 = pneg %p453
      $region66: #{sdxl_adapter_forward.1} parent=11 // pred_check_branch
        %603 = sbr.rel (%p601) target = $region68
      $region67: #{sdxl_adapter_forward.1} parent=11 // pred_region
        _
      $region68: #{sdxl_adapter_forward.1} parent=11 // pred_fallthru
        _
      // Predicated region
      $region69: #{sdxl_adapter_forward.1} parent=11 // pred_check
        %p604 = pneg %p474
      $region70: #{sdxl_adapter_forward.1} parent=11 // pred_check_branch
        %606 = sbr.rel (%p604) target = $region72
      $region71: #{sdxl_adapter_forward.1} parent=11 // pred_region
        _
      $region72: #{sdxl_adapter_forward.1} parent=11 // pred_fallthru
        _
      // Predicated region
      $region73: #{sdxl_adapter_forward.1} parent=11 // pred_check
        %p607 = pneg %p495
      $region74: #{sdxl_adapter_forward.1} parent=11 // pred_check_branch
        %609 = sbr.rel (%p607) target = $region76
      $region75: #{sdxl_adapter_forward.1} parent=11 // pred_region
        _
      $region76: #{sdxl_adapter_forward.1} parent=11 // pred_fallthru
        _
    $region12: #{sdxl_adapter_forward.1} parent=5 // pred_fallthru
      _
    %p610 = scmp.lt.s32.totalorder %s29, 2
    // Predicated region
    $region77: #{sdxl_adapter_forward.1} parent=5 // pred_check
      %p611 = pneg %p610
    $region78: #{sdxl_adapter_forward.1} parent=5 // pred_check_branch
      %613 = sbr.rel (%p611) target = $region80
    $region79: #{sdxl_adapter_forward.1} parent=5 // pred_region
      // Predicated region
      $region81: #{sdxl_adapter_forward.1} parent=79 // pred_check
        %p614 = pneg %p49
      $region82: #{sdxl_adapter_forward.1} parent=79 // pred_check_branch
        %616 = sbr.rel (%p614) target = $region84
      $region83: #{sdxl_adapter_forward.1} parent=79 // pred_region
        %p617 = scmp.lt.s32.totalorder %s29, 1
        %s618 = scalar_select %p617, %s29, 1
        %s619 = smul.addr %s618, 8
        %s620 = scalar_lea.vmem %s0, %s619
      $region84: #{sdxl_adapter_forward.1} parent=79 // pred_fallthru
        _
      // Predicated region
      $region85: #{sdxl_adapter_forward.1} parent=79 // pred_check
        %p621 = pneg %p75
      $region86: #{sdxl_adapter_forward.1} parent=79 // pred_check_branch
        %623 = sbr.rel (%p621) target = $region88
      $region87: #{sdxl_adapter_forward.1} parent=79 // pred_region
        %p624 = scmp.lt.s32.totalorder %s29, 1
        %s625 = scalar_select %p624, %s29, 1
        %s626 = scalar_lea.vmem %s1, %s625
      $region88: #{sdxl_adapter_forward.1} parent=79 // pred_fallthru
        _
      // Predicated region
      $region89: #{sdxl_adapter_forward.1} parent=79 // pred_check
        %p627 = pneg %p101
      $region90: #{sdxl_adapter_forward.1} parent=79 // pred_check_branch
        %629 = sbr.rel (%p627) target = $region92
      $region91: #{sdxl_adapter_forward.1} parent=79 // pred_region
        %p630 = scmp.lt.s32.totalorder %s29, 1
        %s631 = scalar_select %p630, %s29, 1
        %s632 = scalar_lea.vmem %s2, %s631
      $region92: #{sdxl_adapter_forward.1} parent=79 // pred_fallthru
        _
      // Predicated region
      $region93: #{sdxl_adapter_forward.1} parent=79 // pred_check
        %p633 = pneg %p127
      $region94: #{sdxl_adapter_forward.1} parent=79 // pred_check_branch
        %635 = sbr.rel (%p633) target = $region96
      $region95: #{sdxl_adapter_forward.1} parent=79 // pred_region
        %p636 = scmp.lt.s32.totalorder %s29, 1
        %s637 = scalar_select %p636, %s29, 1
        %s638 = smul.addr %s637, 32
        %s639 = smul.addr %s638, 8
        %s640 = scalar_lea.vmem %s3, %s639
      $region96: #{sdxl_adapter_forward.1} parent=79 // pred_fallthru
        _
      // Predicated region
      $region97: #{sdxl_adapter_forward.1} parent=79 // pred_check
        %p641 = pneg %p153
      $region98: #{sdxl_adapter_forward.1} parent=79 // pred_check_branch
        %643 = sbr.rel (%p641) target = $region100
      $region99: #{sdxl_adapter_forward.1} parent=79 // pred_region
        %p644 = scmp.lt.s32.totalorder %s29, 1
        %s645 = scalar_select %p644, %s29, 1
        %s646 = smul.addr %s645, 32
        %s647 = smul.addr %s646, 8
        %s648 = scalar_lea.vmem %s4, %s647
      $region100: #{sdxl_adapter_forward.1} parent=79 // pred_fallthru
        _
    $region80: #{sdxl_adapter_forward.1} parent=5 // pred_fallthru
      _
    %p649 = scmp.le.s32.totalorder 1, %s29
    %p650 = scmp.lt.s32.totalorder %s29, 3
    %p651 = pnand %p649, %p650
    %p652 = pneg %p651
    // Predicated region
    $region101: #{sdxl_adapter_forward.1} parent=5 // pred_check
      _
    $region102: #{sdxl_adapter_forward.1} parent=5 // pred_check_branch
      %654 = sbr.rel (%p651) target = $region104
    $region103: #{sdxl_adapter_forward.1} parent=5 // pred_region
      %s655 = ssub.s32 %s29, 1
      %p656 = scmp.lt.s32.totalorder %s34, 1
      %s657 = scalar_select %p656, %s34, 1
      %s658 = smul.addr %s657, 8
      %s659 = scalar_lea.vmem %s0, %s658
      %p660 = pneg %p55
      %p661 = pneg %p52
      %p662 = scmp.lt.s32.totalorder %s34, 1
      %s663 = scalar_select %p662, %s34, 1
      %s664 = scalar_lea.vmem %s1, %s663
      %p665 = pneg %p81
      %p666 = pneg %p78
      %p667 = scmp.lt.s32.totalorder %s34, 1
      %s668 = scalar_select %p667, %s34, 1
      %s669 = scalar_lea.vmem %s2, %s668
      %p670 = pneg %p107
      %p671 = pneg %p104
      %p672 = scmp.lt.s32.totalorder %s34, 1
      %s673 = scalar_select %p672, %s34, 1
      %s674 = smul.addr %s673, 32
      %s675 = smul.addr %s674, 8
      %s676 = scalar_lea.vmem %s3, %s675
      %p677 = pneg %p133
      %p678 = pneg %p130
      %p679 = scmp.lt.s32.totalorder %s34, 1
      %s680 = scalar_select %p679, %s34, 1
      %s681 = smul.addr %s680, 32
      %s682 = smul.addr %s681, 8
      %s683 = scalar_lea.vmem %s4, %s682
      %p684 = pneg %p159
      %p685 = pneg %p156
      %p686 = pneg %p180
      %p687 = pneg %p177
      %p688 = pneg %p201
      %p689 = pneg %p198
      %p690 = pneg %p222
      %p691 = pneg %p219
      %p692 = pneg %p243
      %p693 = pneg %p240
      %p694 = pneg %p264
      %p695 = pneg %p261
      %p696 = pneg %p285
      %p697 = pneg %p282
      %p698 = pneg %p306
      %p699 = pneg %p303
      %p700 = pneg %p327
      %p701 = pneg %p324
      %p702 = pneg %p348
      %p703 = pneg %p345
      %p704 = pneg %p369
      %p705 = pneg %p366
      %p706 = pneg %p390
      %p707 = pneg %p387
      %p708 = pneg %p411
      %p709 = pneg %p408
      %p710 = pneg %p432
      %p711 = pneg %p429
      %p712 = pneg %p453
      %p713 = pneg %p450
      %p714 = pneg %p474
      %p715 = pneg %p471
      %p716 = pneg %p495
      %p717 = pneg %p492
      %p718 = pneg %p521
      %p719 = pneg %p518
      %p720 = scmp.lt.s32.totalorder %s34, 1
      %s721 = scalar_select %p720, %s34, 1
      %s722 = smul.addr %s721, 32
      %s723 = smul.addr %s722, 8
      %s724 = scalar_lea.vmem %s21, %s723
      %p725 = pneg %p547
      %p726 = pneg %p544
      %p727 = scmp.lt.s32.totalorder %s34, 1
      %s728 = scalar_select %p727, %s34, 1
      %s729 = scalar_lea.vmem %s22, %s728
      %p730 = scmp.lt.s32.totalorder %s34, 1
      %s731 = scalar_select %p730, %s34, 1
      %s732 = smul.addr %s731, 8
      %s733 = scalar_lea.vmem %s0, %s732
      %p734 = scmp.lt.s32.totalorder %s34, 1
      %s735 = scalar_select %p734, %s34, 1
      %s736 = scalar_lea.vmem %s1, %s735
      %p737 = scmp.lt.s32.totalorder %s34, 1
      %s738 = scalar_select %p737, %s34, 1
      %s739 = scalar_lea.vmem %s2, %s738
      %p740 = scmp.lt.s32.totalorder %s34, 1
      %s741 = scalar_select %p740, %s34, 1
      %s742 = smul.addr %s741, 32
      %s743 = smul.addr %s742, 8
      %s744 = scalar_lea.vmem %s3, %s743
      %p745 = scmp.lt.s32.totalorder %s34, 1
      %s746 = scalar_select %p745, %s34, 1
      %s747 = smul.addr %s746, 32
      %s748 = smul.addr %s747, 8
      %s749 = scalar_lea.vmem %s4, %s748
      %p750 = scmp.lt.s32.totalorder %s34, 1
      %s751 = scalar_select %p750, %s34, 1
      %s752 = smul.addr %s751, 32
      %s753 = smul.addr %s752, 8
      %s754 = scalar_lea.vmem %s21, %s753
      %p755 = scmp.lt.s32.totalorder %s34, 1
      %s756 = scalar_select %p755, %s34, 1
      %s757 = scalar_lea.vmem %s22, %s756
      %v759 = vld [vmem:[%s733] sm:$0xff]
      %v760 = vld [vmem:[%s5] sm:$0xff]
      %v761 = vld [vmem:[%s5 + $0x8] sm:$0xff]
      %v762 = vld [vmem:[%s5 + $0x10] sm:$0xff]
      %v763 = vld [vmem:[%s5 + $0x18] sm:$0xff]
      %v764 = vpack.c.bf16 %v759, %v759
      %v765 = vpack.c.bf16 %v761, %v760
      %v766 = vpack.c.bf16 %v763, %v762
      %v767 = vld [vmem:[%s6] sm:$0x1]
      %v769 = vlaneseq
      %v770 = vshrl.u32 %v769, 7
      %v771 = vsub.s32 0, %v770
      %v772 = vrot.slane %v767, %v771
      %vm774 = vcmask 261120
      %v776 = vsel %vm774, %v764, 0
      %778 = vmatprep.subr.bf16.mxu0 0
      %779 = vmatpush1.bf16.msra.mxu0 %v765
      %780 = vmatprep.subr.bf16.mxu0 0
      %781 = vmatpush1.bf16.msra.mxu0 %v766
      %782 = vmatprep.subr.bf16.mxu0 0
      %783 = vmatpush1.bf16.msra.mxu0 0
      %784 = vmatprep.subr.bf16.mxu0 0
      %785 = vmatpush1.bf16.msra.mxu0 0
      %786 = vmatprep.subr.bf16.mxu0 0
      %787 = vmatpush1.bf16.msra.mxu0 0
      %788 = vmatprep.subr.bf16.mxu0 0
      %789 = vmatpush1.bf16.msra.mxu0 0
      %790 = vmatprep.subr.bf16.mxu0 0
      %791 = vmatpush1.bf16.msra.mxu0 0
      %792 = vmatprep.subr.bf16.mxu0 0
      %793 = vmatpush1.bf16.msra.mxu0 0
      %794 = vmatprep.subr.bf16.mxu0 0
      %795 = vmatpush1.bf16.msra.mxu0 0
      %796 = vmatprep.subr.bf16.mxu0 0
      %797 = vmatpush1.bf16.msra.mxu0 0
      %798 = vmatprep.subr.bf16.mxu0 0
      %799 = vmatpush1.bf16.msra.mxu0 0
      %800 = vmatprep.subr.bf16.mxu0 0
      %801 = vmatpush1.bf16.msra.mxu0 0
      %802 = vmatprep.subr.bf16.mxu0 0
      %803 = vmatpush1.bf16.msra.mxu0 0
      %804 = vmatprep.subr.bf16.mxu0 0
      %805 = vmatpush1.bf16.msra.mxu0 0
      %806 = vmatprep.subr.bf16.mxu0 0
      %807 = vmatpush1.bf16.msra.mxu0 0
      %808 = vmatprep.subr.bf16.mxu0 0
      %809 = vmatpush1.bf16.msra.mxu0 0
      %810 = vmatprep.mubr.bf16.mxu0 0
      %811 = vmatmul.mubr.bf16.gmra.mrb[0].mxu0 %v776
      %v812 = vpop.f32.mrb[0].mxu0
      %v813 = vadd.f32 %v772, %v812
      %v814 = vpop.f32.mrb[0].mxu0
      %v815 = vpop.f32.mrb[0].mxu0
      %v816 = vpop.f32.mrb[0].mxu0
      %817 = vdwg.mxu0
      %vm818 = vcmask 523264
      %v819 = vsel %vm818, %v813, 0.0
      %v820 = vrot.slane %v819, 4
      %v821 = vadd.f32 %v819, %v820
      %v822 = vrot.slane %v821, 2
      %v823 = vadd.f32 %v821, %v822
      %v824 = vrot.slane %v823, 1
      %v825 = vadd.f32 %v823, %v824
      %v826 = vrcp.pop 8.0
      %v827 = vmul.f32 %v825, %v826
      %v828 = vld [vmem:[%s7] sm:$0xff]
      %v829 = vld [vmem:[%s7 + $0x8] sm:$0xff]
      %v830 = vld [vmem:[%s7 + $0x10] sm:$0xff]
      %v831 = vld [vmem:[%s7 + $0x18] sm:$0xff]
      %v832 = vld [vmem:[%s7 + $0x20] sm:$0xff]
      %v833 = vld [vmem:[%s7 + $0x28] sm:$0xff]
      %v834 = vld [vmem:[%s7 + $0x30] sm:$0xff]
      %v835 = vld [vmem:[%s7 + $0x38] sm:$0xff]
      %v836 = vpack.c.bf16 %v827, %v827
      %v837 = vpack.c.bf16 %v829, %v828
      %v838 = vpack.c.bf16 %v831, %v830
      %v839 = vpack.c.bf16 %v833, %v832
      %v840 = vpack.c.bf16 %v835, %v834
      %v841 = vld [vmem:[%s8] sm:$0x1]
      %v843 = vsel %vm818, %v836, 0
      %845 = vmatprep.subr.bf16.mxu0 0
      %846 = vmatpush1.bf16.msra.mxu0 %v837
      %847 = vmatprep.subr.bf16.mxu0 0
      %848 = vmatpush1.bf16.msra.mxu0 %v838
      %849 = vmatprep.subr.bf16.mxu0 0
      %850 = vmatpush1.bf16.msra.mxu0 %v839
      %851 = vmatprep.subr.bf16.mxu0 0
      %852 = vmatpush1.bf16.msra.mxu0 %v840
      %853 = vmatprep.subr.bf16.mxu0 0
      %854 = vmatpush1.bf16.msra.mxu0 0
      %855 = vmatprep.subr.bf16.mxu0 0
      %856 = vmatpush1.bf16.msra.mxu0 0
      %857 = vmatprep.subr.bf16.mxu0 0
      %858 = vmatpush1.bf16.msra.mxu0 0
      %859 = vmatprep.subr.bf16.mxu0 0
      %860 = vmatpush1.bf16.msra.mxu0 0
      %861 = vmatprep.subr.bf16.mxu0 0
      %862 = vmatpush1.bf16.msra.mxu0 0
      %863 = vmatprep.subr.bf16.mxu0 0
      %864 = vmatpush1.bf16.msra.mxu0 0
      %865 = vmatprep.subr.bf16.mxu0 0
      %866 = vmatpush1.bf16.msra.mxu0 0
      %867 = vmatprep.subr.bf16.mxu0 0
      %868 = vmatpush1.bf16.msra.mxu0 0
      %869 = vmatprep.subr.bf16.mxu0 0
      %870 = vmatpush1.bf16.msra.mxu0 0
      %871 = vmatprep.subr.bf16.mxu0 0
      %872 = vmatpush1.bf16.msra.mxu0 0
      %873 = vmatprep.subr.bf16.mxu0 0
      %874 = vmatpush1.bf16.msra.mxu0 0
      %875 = vmatprep.subr.bf16.mxu0 0
      %876 = vmatpush1.bf16.msra.mxu0 0
      %877 = vmatprep.mubr.bf16.mxu0 0
      %878 = vmatmul.mubr.bf16.gmra.mrb[0].mxu0 %v843
      %v879 = vpop.f32.mrb[0].mxu0
      %v880 = vadd.f32 %v841, %v879
      %v881 = vpop.f32.mrb[0].mxu0
      %v882 = vpop.f32.mrb[0].mxu0
      %v883 = vpop.f32.mrb[0].mxu0
      %884 = vdwg.mxu0
      %v885 = vld [vmem:[%s9] sm:$0xff]
      %v886 = vld [vmem:[%s9 + $0x8] sm:$0xff]
      %v887 = vld [vmem:[%s9 + $0x10] sm:$0xff]
      %v888 = vld [vmem:[%s9 + $0x18] sm:$0xff]
      %v889 = vpack.c.bf16 %v880, %v880
      %v890 = vpack.c.bf16 %v886, %v885
      %v891 = vpack.c.bf16 %v888, %v887
      %v892 = vld [vmem:[%s739] sm:$0x1]
      %v893 = vld [vmem:[%s10] sm:$0xff]
      %v894 = vpack.c.bf16 %v892, %v892
      %v895 = vpack.c.bf16 %v893, %v893
      %vm896 = vcmask 64512
      %v898 = vsel %vm896, %v894, 0
      %vm900 = vcmask 1043456
      %v902 = vsel %vm900, %v895, 0
      %904 = vmatprep.subr.bf16.mxu0 0
      %905 = vmatpush1.bf16.msra.mxu0 %v902
      %906 = vmatprep.subr.bf16.mxu0 0
      %907 = vmatpush1.bf16.msra.mxu0 0
      %908 = vmatprep.subr.bf16.mxu0 0
      %909 = vmatpush1.bf16.msra.mxu0 0
      %910 = vmatprep.subr.bf16.mxu0 0
      %911 = vmatpush1.bf16.msra.mxu0 0
      %912 = vmatprep.subr.bf16.mxu0 0
      %913 = vmatpush1.bf16.msra.mxu0 0
      %914 = vmatprep.subr.bf16.mxu0 0
      %915 = vmatpush1.bf16.msra.mxu0 0
      %916 = vmatprep.subr.bf16.mxu0 0
      %917 = vmatpush1.bf16.msra.mxu0 0
      %918 = vmatprep.subr.bf16.mxu0 0
      %919 = vmatpush1.bf16.msra.mxu0 0
      %920 = vmatprep.subr.bf16.mxu0 0
      %921 = vmatpush1.bf16.msra.mxu0 0
      %922 = vmatprep.subr.bf16.mxu0 0
      %923 = vmatpush1.bf16.msra.mxu0 0
      %924 = vmatprep.subr.bf16.mxu0 0
      %925 = vmatpush1.bf16.msra.mxu0 0
      %926 = vmatprep.subr.bf16.mxu0 0
      %927 = vmatpush1.bf16.msra.mxu0 0
      %928 = vmatprep.subr.bf16.mxu0 0
      %929 = vmatpush1.bf16.msra.mxu0 0
      %930 = vmatprep.subr.bf16.mxu0 0
      %931 = vmatpush1.bf16.msra.mxu0 0
      %932 = vmatprep.subr.bf16.mxu0 0
      %933 = vmatpush1.bf16.msra.mxu0 0
      %934 = vmatprep.subr.bf16.mxu0 0
      %935 = vmatpush1.bf16.msra.mxu0 0
      %936 = vmatprep.mubr.bf16.mxu0 0
      %937 = vmatmul.mubr.bf16.gmra.mrb[0].mxu0 %v898
      %v938 = vpop.f32.mrb[0].mxu0
      %v939 = vadd.f32 0.0, %v938
      %v940 = vpop.f32.mrb[0].mxu0
      %v941 = vpop.f32.mrb[0].mxu0
      %v942 = vpop.f32.mrb[0].mxu0
      %943 = vdwg.mxu0
      %v945 = vsel %vm774, %v889, 0
      %947 = vmatprep.subr.bf16.mxu0 0
      %948 = vmatpush1.bf16.msra.mxu0 %v890
      %949 = vmatprep.subr.bf16.mxu0 0
      %950 = vmatpush1.bf16.msra.mxu0 %v891
      %951 = vmatprep.subr.bf16.mxu0 0
      %952 = vmatpush1.bf16.msra.mxu0 0
      %953 = vmatprep.subr.bf16.mxu0 0
      %954 = vmatpush1.bf16.msra.mxu0 0
      %955 = vmatprep.subr.bf16.mxu0 0
      %956 = vmatpush1.bf16.msra.mxu0 0
      %957 = vmatprep.subr.bf16.mxu0 0
      %958 = vmatpush1.bf16.msra.mxu0 0
      %959 = vmatprep.subr.bf16.mxu0 0
      %960 = vmatpush1.bf16.msra.mxu0 0
      %961 = vmatprep.subr.bf16.mxu0 0
      %962 = vmatpush1.bf16.msra.mxu0 0
      %963 = vmatprep.subr.bf16.mxu0 0
      %964 = vmatpush1.bf16.msra.mxu0 0
      %965 = vmatprep.subr.bf16.mxu0 0
      %966 = vmatpush1.bf16.msra.mxu0 0
      %967 = vmatprep.subr.bf16.mxu0 0
      %968 = vmatpush1.bf16.msra.mxu0 0
      %969 = vmatprep.subr.bf16.mxu0 0
      %970 = vmatpush1.bf16.msra.mxu0 0
      %971 = vmatprep.subr.bf16.mxu0 0
      %972 = vmatpush1.bf16.msra.mxu0 0
      %973 = vmatprep.subr.bf16.mxu0 0
      %974 = vmatpush1.bf16.msra.mxu0 0
      %975 = vmatprep.subr.bf16.mxu0 0
      %976 = vmatpush1.bf16.msra.mxu0 0
      %977 = vmatprep.subr.bf16.mxu0 0
      %978 = vmatpush1.bf16.msra.mxu0 0
      %979 = vmatprep.mubr.bf16.mxu0 0
      %980 = vmatmul.mubr.bf16.gmra.mrb[0].mxu0 %v945
      %v981 = vpop.f32.mrb[0].mxu0
      %v982 = vadd.f32 %v939, %v981
      %v983 = vpop.f32.mrb[0].mxu0
      %v984 = vpop.f32.mrb[0].mxu0
      %v985 = vpop.f32.mrb[0].mxu0
      %986 = vdwg.mxu0
      %v987 = vld [vmem:[%s11] sm:$0x1]
      %v988 = vadd.f32 %v982, %v987
      %v989 = vld [vmem:[%s736] sm:$0x1]
      %v990 = vadd.f32 %v989, %v988
      %v991 = vsub.f32 0.0, %v990
      %v992 = vmul.f32 %v991, 1.442695
      %v993 = vpow.pop %v992
      %v994 = vadd.f32 %v993, 1.0
      %v995 = vrcp.pop %v994
      %v996 = vmul.f32 %v990, %v995
      %v997 = vld [vmem:[%s12] sm:$0xff]
      %v998 = vld [vmem:[%s12 + $0x8] sm:$0xff]
      %v999 = vld [vmem:[%s12 + $0x10] sm:$0xff]
      %v1000 = vld [vmem:[%s12 + $0x18] sm:$0xff]
      %v1001 = vld [vmem:[%s12 + $0x20] sm:$0xff]
      %v1002 = vld [vmem:[%s12 + $0x28] sm:$0xff]
      %v1003 = vld [vmem:[%s12 + $0x30] sm:$0xff]
      %v1004 = vld [vmem:[%s12 + $0x38] sm:$0xff]
      %v1005 = vpack.c.bf16 %v996, %v996
      %v1006 = vpack.c.bf16 %v998, %v997
      %v1007 = vpack.c.bf16 %v1000, %v999
      %v1008 = vpack.c.bf16 %v1002, %v1001
      %v1009 = vpack.c.bf16 %v1004, %v1003
      %v1010 = vld [vmem:[%s13] sm:$0x1]
      %v1012 = vsel %vm818, %v1005, 0
      %1014 = vmatprep.subr.bf16.mxu0 0
      %1015 = vmatpush1.bf16.msra.mxu0 %v1006
      %1016 = vmatprep.subr.bf16.mxu0 0
      %1017 = vmatpush1.bf16.msra.mxu0 %v1007
      %1018 = vmatprep.subr.bf16.mxu0 0
      %1019 = vmatpush1.bf16.msra.mxu0 %v1008
      %1020 = vmatprep.subr.bf16.mxu0 0
      %1021 = vmatpush1.bf16.msra.mxu0 %v1009
      %1022 = vmatprep.subr.bf16.mxu0 0
      %1023 = vmatpush1.bf16.msra.mxu0 0
      %1024 = vmatprep.subr.bf16.mxu0 0
      %1025 = vmatpush1.bf16.msra.mxu0 0
      %1026 = vmatprep.subr.bf16.mxu0 0
      %1027 = vmatpush1.bf16.msra.mxu0 0
      %1028 = vmatprep.subr.bf16.mxu0 0
      %1029 = vmatpush1.bf16.msra.mxu0 0
      %1030 = vmatprep.subr.bf16.mxu0 0
      %1031 = vmatpush1.bf16.msra.mxu0 0
      %1032 = vmatprep.subr.bf16.mxu0 0
      %1033 = vmatpush1.bf16.msra.mxu0 0
      %1034 = vmatprep.subr.bf16.mxu0 0
      %1035 = vmatpush1.bf16.msra.mxu0 0
      %1036 = vmatprep.subr.bf16.mxu0 0
      %1037 = vmatpush1.bf16.msra.mxu0 0
      %1038 = vmatprep.subr.bf16.mxu0 0
      %1039 = vmatpush1.bf16.msra.mxu0 0
      %1040 = vmatprep.subr.bf16.mxu0 0
      %1041 = vmatpush1.bf16.msra.mxu0 0
      %1042 = vmatprep.subr.bf16.mxu0 0
      %1043 = vmatpush1.bf16.msra.mxu0 0
      %1044 = vmatprep.subr.bf16.mxu0 0
      %1045 = vmatpush1.bf16.msra.mxu0 0
      %1046 = vmatprep.mubr.bf16.mxu0 0
      %1047 = vmatmul.mubr.bf16.gmra.mrb[0].mxu0 %v1012
      %v1048 = vpop.f32.mrb[0].mxu0
      %v1049 = vadd.f32 %v1010, %v1048
      %v1050 = vpop.f32.mrb[0].mxu0
      %v1051 = vpop.f32.mrb[0].mxu0
      %v1052 = vpop.f32.mrb[0].mxu0
      %1053 = vdwg.mxu0
      %v1054 = vld [vmem:[%s744] sm:$0xff]
      %v1055 = vld [vmem:[%s744 + $0x8] sm:$0xff]
      %v1056 = vld [vmem:[%s744 + $0x10] sm:$0xff]
      %v1057 = vld [vmem:[%s744 + $0x18] sm:$0xff]
      %v1058 = vld [vmem:[%s744 + $0x20] sm:$0xff]
      %v1059 = vld [vmem:[%s744 + $0x28] sm:$0xff]
      %v1060 = vld [vmem:[%s744 + $0x30] sm:$0xff]
      %v1061 = vld [vmem:[%s744 + $0x38] sm:$0xff]
      %v1062 = vld [vmem:[%s744 + $0x40] sm:$0xff]
      %v1063 = vld [vmem:[%s744 + $0x48] sm:$0xff]
      %v1064 = vld [vmem:[%s744 + $0x50] sm:$0xff]
      %v1065 = vld [vmem:[%s744 + $0x58] sm:$0xff]
      %v1066 = vld [vmem:[%s744 + $0x60] sm:$0xff]
      %v1067 = vld [vmem:[%s744 + $0x68] sm:$0xff]
      %v1068 = vld [vmem:[%s744 + $0x70] sm:$0xff]
      %v1069 = vld [vmem:[%s744 + $0x78] sm:$0xff]
      %v1070 = vld [vmem:[%s744 + $0x80] sm:$0xff]
      %v1071 = vld [vmem:[%s744 + $0x88] sm:$0xff]
      %v1072 = vld [vmem:[%s744 + $0x90] sm:$0xff]
      %v1073 = vld [vmem:[%s744 + $0x98] sm:$0xff]
      %v1074 = vld [vmem:[%s744 + $0xa0] sm:$0xff]
      %v1075 = vld [vmem:[%s744 + $0xa8] sm:$0xff]
      %v1076 = vld [vmem:[%s744 + $0xb0] sm:$0xff]
      %v1077 = vld [vmem:[%s744 + $0xb8] sm:$0xff]
      %v1078 = vld [vmem:[%s744 + $0xc0] sm:$0xff]
      %v1079 = vld [vmem:[%s744 + $0xc8] sm:$0xff]
      %v1080 = vld [vmem:[%s744 + $0xd0] sm:$0xff]
      %v1081 = vld [vmem:[%s744 + $0xd8] sm:$0xff]
      %v1082 = vld [vmem:[%s744 + $0xe0] sm:$0xff]
      %v1083 = vld [vmem:[%s744 + $0xe8] sm:$0xff]
      %v1084 = vld [vmem:[%s744 + $0xf0] sm:$0xff]
      %v1085 = vld [vmem:[%s744 + $0xf8] sm:$0xff]
      %v1086 = vld [vmem:[%s14] sm:$0xff]
      %v1087 = vld [vmem:[%s14 + $0x8] sm:$0xff]
      %v1088 = vld [vmem:[%s14 + $0x10] sm:$0xff]
      %v1089 = vld [vmem:[%s14 + $0x18] sm:$0xff]
      %v1090 = vld [vmem:[%s14 + $0x20] sm:$0xff]
      %v1091 = vld [vmem:[%s14 + $0x28] sm:$0xff]
      %v1092 = vld [vmem:[%s14 + $0x30] sm:$0xff]
      %v1093 = vld [vmem:[%s14 + $0x38] sm:$0xff]
      %v1094 = vpack.c.bf16 %v1055, %v1054
      %v1095 = vpack.c.bf16 %v1057, %v1056
      %v1096 = vpack.c.bf16 %v1059, %v1058
      %v1097 = vpack.c.bf16 %v1061, %v1060
      %v1098 = vpack.c.bf16 %v1063, %v1062
      %v1099 = vpack.c.bf16 %v1065, %v1064
      %v1100 = vpack.c.bf16 %v1067, %v1066
      %v1101 = vpack.c.bf16 %v1069, %v1068
      %v1102 = vpack.c.bf16 %v1071, %v1070
      %v1103 = vpack.c.bf16 %v1073, %v1072
      %v1104 = vpack.c.bf16 %v1075, %v1074
      %v1105 = vpack.c.bf16 %v1077, %v1076
      %v1106 = vpack.c.bf16 %v1079, %v1078
      %v1107 = vpack.c.bf16 %v1081, %v1080
      %v1108 = vpack.c.bf16 %v1083, %v1082
      %v1109 = vpack.c.bf16 %v1085, %v1084
      %v1110 = vpack.c.bf16 %v1087, %v1086
      %v1111 = vpack.c.bf16 %v1089, %v1088
      %v1112 = vpack.c.bf16 %v1091, %v1090
      %v1113 = vpack.c.bf16 %v1093, %v1092
      %v1114 = vld [vmem:[%s15] sm:$0x1]
      %v1116 = vlaneseq
      %v1117 = vshrl.u32 %v1116, 7
      %v1118 = vsub.s32 0, %v1117
      %v1119 = vrot.slane %v1114, %v1118
      %v1122 = vsel %vm818, %v1094, 0
      %v1125 = vsel %vm818, %v1095, 0
      %v1128 = vsel %vm818, %v1096, 0
      %v1131 = vsel %vm818, %v1097, 0
      %v1134 = vsel %vm818, %v1098, 0
      %v1137 = vsel %vm818, %v1099, 0
      %v1140 = vsel %vm818, %v1100, 0
      %v1143 = vsel %vm818, %v1101, 0
      %v1146 = vsel %vm818, %v1102, 0
      %v1149 = vsel %vm818, %v1103, 0
      %v1152 = vsel %vm818, %v1104, 0
      %v1155 = vsel %vm818, %v1105, 0
      %v1158 = vsel %vm818, %v1106, 0
      %v1161 = vsel %vm818, %v1107, 0
      %v1164 = vsel %vm818, %v1108, 0
      %v1167 = vsel %vm818, %v1109, 0
      %1169 = vmatprep.subr.bf16.mxu0 0
      %1170 = vmatpush1.bf16.msra.mxu0 %v1110
      %1171 = vmatprep.subr.bf16.mxu0 0
      %1172 = vmatpush1.bf16.msra.mxu0 %v1111
      %1173 = vmatprep.subr.bf16.mxu0 0
      %1174 = vmatpush1.bf16.msra.mxu0 %v1112
      %1175 = vmatprep.subr.bf16.mxu0 0
      %1176 = vmatpush1.bf16.msra.mxu0 %v1113
      %1177 = vmatprep.subr.bf16.mxu0 0
      %1178 = vmatpush1.bf16.msra.mxu0 0
      %1179 = vmatprep.subr.bf16.mxu0 0
      %1180 = vmatpush1.bf16.msra.mxu0 0
      %1181 = vmatprep.subr.bf16.mxu0 0
      %1182 = vmatpush1.bf16.msra.mxu0 0
      %1183 = vmatprep.subr.bf16.mxu0 0
      %1184 = vmatpush1.bf16.msra.mxu0 0
      %1185 = vmatprep.subr.bf16.mxu0 0
      %1186 = vmatpush1.bf16.msra.mxu0 0
      %1187 = vmatprep.subr.bf16.mxu0 0
      %1188 = vmatpush1.bf16.msra.mxu0 0
      %1189 = vmatprep.subr.bf16.mxu0 0
      %1190 = vmatpush1.bf16.msra.mxu0 0
      %1191 = vmatprep.subr.bf16.mxu0 0
      %1192 = vmatpush1.bf16.msra.mxu0 0
      %1193 = vmatprep.subr.bf16.mxu0 0
      %1194 = vmatpush1.bf16.msra.mxu0 0
      %1195 = vmatprep.subr.bf16.mxu0 0
      %1196 = vmatpush1.bf16.msra.mxu0 0
      %1197 = vmatprep.subr.bf16.mxu0 0
      %1198 = vmatpush1.bf16.msra.mxu0 0
      %1199 = vmatprep.subr.bf16.mxu0 0
      %1200 = vmatpush1.bf16.msra.mxu0 0
      %1201 = vmatprep.mubr.bf16.mxu0 0
      %1202 = vmatmul.mubr.bf16.gmra.mrb[0].mxu0 %v1122
      %v1203 = vpop.f32.mrb[0].mxu0
      %v1204 = vadd.f32 %v1119, %v1203
      %v1205 = vpop.f32.mrb[0].mxu0
      %v1206 = vpop.f32.mrb[0].mxu0
      %v1207 = vadd.f32 %v1119, %v1206
      %v1208 = vpop.f32.mrb[0].mxu0
      %1209 = vmatprep.mubr.bf16.mxu0 0
      %1210 = vmatmul.mubr.bf16.gmra.mrb[0].mxu0 %v1125
      %v1211 = vpop.f32.mrb[0].mxu0
      %v1212 = vadd.f32 %v1119, %v1211
      %v1213 = vpop.f32.mrb[0].mxu0
      %v1214 = vpop.f32.mrb[0].mxu0
      %v1215 = vadd.f32 %v1119, %v1214
      %v1216 = vpop.f32.mrb[0].mxu0
      %1217 = vmatprep.mubr.bf16.mxu0 0
      %1218 = vmatmul.mubr.bf16.gmra.mrb[0].mxu0 %v1128
      %v1219 = vpop.f32.mrb[0].mxu0
      %v1220 = vadd.f32 %v1119, %v1219
      %v1221 = vpop.f32.mrb[0].mxu0
      %v1222 = vpop.f32.mrb[0].mxu0
      %v1223 = vadd.f32 %v1119, %v1222
      %v1224 = vpop.f32.mrb[0].mxu0
      %1225 = vmatprep.mubr.bf16.mxu0 0
      %1226 = vmatmul.mubr.bf16.gmra.mrb[0].mxu0 %v1131
      %v1227 = vpop.f32.mrb[0].mxu0
      %v1228 = vadd.f32 %v1119, %v1227
      %v1229 = vpop.f32.mrb[0].mxu0
      %v1230 = vpop.f32.mrb[0].mxu0
      %v1231 = vadd.f32 %v1119, %v1230
      %v1232 = vpop.f32.mrb[0].mxu0
      %1233 = vmatprep.mubr.bf16.mxu0 0
      %1234 = vmatmul.mubr.bf16.gmra.mrb[0].mxu0 %v1134
      %v1235 = vpop.f32.mrb[0].mxu0
      %v1236 = vadd.f32 %v1119, %v1235
      %v1237 = vpop.f32.mrb[0].mxu0
      %v1238 = vpop.f32.mrb[0].mxu0
      %v1239 = vadd.f32 %v1119, %v1238
      %v1240 = vpop.f32.mrb[0].mxu0
      %1241 = vmatprep.mubr.bf16.mxu0 0
      %1242 = vmatmul.mubr.bf16.gmra.mrb[0].mxu0 %v1137
      %v1243 = vpop.f32.mrb[0].mxu0
      %v1244 = vadd.f32 %v1119, %v1243
      %v1245 = vpop.f32.mrb[0].mxu0
      %v1246 = vpop.f32.mrb[0].mxu0
      %v1247 = vadd.f32 %v1119, %v1246
      %v1248 = vpop.f32.mrb[0].mxu0
      %1249 = vmatprep.mubr.bf16.mxu0 0
      %1250 = vmatmul.mubr.bf16.gmra.mrb[0].mxu0 %v1140
      %v1251 = vpop.f32.mrb[0].mxu0
      %v1252 = vadd.f32 %v1119, %v1251
      %v1253 = vpop.f32.mrb[0].mxu0
      %v1254 = vpop.f32.mrb[0].mxu0
      %v1255 = vadd.f32 %v1119, %v1254
      %v1256 = vpop.f32.mrb[0].mxu0
      %1257 = vmatprep.mubr.bf16.mxu0 0
      %1258 = vmatmul.mubr.bf16.gmra.mrb[0].mxu0 %v1143
      %v1259 = vpop.f32.mrb[0].mxu0
      %v1260 = vadd.f32 %v1119, %v1259
      %v1261 = vpop.f32.mrb[0].mxu0
      %v1262 = vpop.f32.mrb[0].mxu0
      %v1263 = vadd.f32 %v1119, %v1262
      %v1264 = vpop.f32.mrb[0].mxu0
      %1265 = vmatprep.mubr.bf16.mxu0 0
      %1266 = vmatmul.mubr.bf16.gmra.mrb[0].mxu0 %v1146
      %v1267 = vpop.f32.mrb[0].mxu0
      %v1268 = vadd.f32 %v1119, %v1267
      %v1269 = vpop.f32.mrb[0].mxu0
      %v1270 = vpop.f32.mrb[0].mxu0
      %v1271 = vadd.f32 %v1119, %v1270
      %v1272 = vpop.f32.mrb[0].mxu0
      %1273 = vmatprep.mubr.bf16.mxu0 0
      %1274 = vmatmul.mubr.bf16.gmra.mrb[0].mxu0 %v1149
      %v1275 = vpop.f32.mrb[0].mxu0
      %v1276 = vadd.f32 %v1119, %v1275
      %v1277 = vpop.f32.mrb[0].mxu0
      %v1278 = vpop.f32.mrb[0].mxu0
      %v1279 = vadd.f32 %v1119, %v1278
      %v1280 = vpop.f32.mrb[0].mxu0
      %1281 = vmatprep.mubr.bf16.mxu0 0
      %1282 = vmatmul.mubr.bf16.gmra.mrb[0].mxu0 %v1152
      %v1283 = vpop.f32.mrb[0].mxu0
      %v1284 = vadd.f32 %v1119, %v1283
      %v1285 = vpop.f32.mrb[0].mxu0
      %v1286 = vpop.f32.mrb[0].mxu0
      %v1287 = vadd.f32 %v1119, %v1286
      %v1288 = vpop.f32.mrb[0].mxu0
      %1289 = vmatprep.mubr.bf16.mxu0 0
      %1290 = vmatmul.mubr.bf16.gmra.mrb[0].mxu0 %v1155
      %v1291 = vpop.f32.mrb[0].mxu0
      %v1292 = vadd.f32 %v1119, %v1291
      %v1293 = vpop.f32.mrb[0].mxu0
      %v1294 = vpop.f32.mrb[0].mxu0
      %v1295 = vadd.f32 %v1119, %v1294
      %v1296 = vpop.f32.mrb[0].mxu0
      %1297 = vmatprep.mubr.bf16.mxu0 0
      %1298 = vmatmul.mubr.bf16.gmra.mrb[0].mxu0 %v1158
      %v1299 = vpop.f32.mrb[0].mxu0
      %v1300 = vadd.f32 %v1119, %v1299
      %v1301 = vpop.f32.mrb[0].mxu0
      %v1302 = vpop.f32.mrb[0].mxu0
      %v1303 = vadd.f32 %v1119, %v1302
      %v1304 = vpop.f32.mrb[0].mxu0
      %1305 = vmatprep.mubr.bf16.mxu0 0
      %1306 = vmatmul.mubr.bf16.gmra.mrb[0].mxu0 %v1161
      %v1307 = vpop.f32.mrb[0].mxu0
      %v1308 = vadd.f32 %v1119, %v1307
      %v1309 = vpop.f32.mrb[0].mxu0
      %v1310 = vpop.f32.mrb[0].mxu0
      %v1311 = vadd.f32 %v1119, %v1310
      %v1312 = vpop.f32.mrb[0].mxu0
      %1313 = vmatprep.mubr.bf16.mxu0 0
      %1314 = vmatmul.mubr.bf16.gmra.mrb[0].mxu0 %v1164
      %v1315 = vpop.f32.mrb[0].mxu0
      %v1316 = vadd.f32 %v1119, %v1315
      %v1317 = vpop.f32.mrb[0].mxu0
      %v1318 = vpop.f32.mrb[0].mxu0
      %v1319 = vadd.f32 %v1119, %v1318
      %v1320 = vpop.f32.mrb[0].mxu0
      %1321 = vmatprep.mubr.bf16.mxu0 0
      %1322 = vmatmul.mubr.bf16.gmra.mrb[0].mxu0 %v1167
      %v1323 = vpop.f32.mrb[0].mxu0
      %v1324 = vadd.f32 %v1119, %v1323
      %v1325 = vpop.f32.mrb[0].mxu0
      %v1326 = vpop.f32.mrb[0].mxu0
      %v1327 = vadd.f32 %v1119, %v1326
      %v1328 = vpop.f32.mrb[0].mxu0
      %1329 = vdwg.mxu0
      %v1330 = vlaneseq
      %v1331 = vshrl.u32 %v1330, 7
      %v1332 = vsub.s32 0, %v1331
      %v1333 = vrot.slane %v1049, %v1332
      %v1334 = vadd.f32 %v1204, %v1333
      %v1335 = vadd.f32 %v1207, %v1333
      %v1336 = vadd.f32 %v1212, %v1333
      %v1337 = vadd.f32 %v1215, %v1333
      %v1338 = vadd.f32 %v1220, %v1333
      %v1339 = vadd.f32 %v1223, %v1333
      %v1340 = vadd.f32 %v1228, %v1333
      %v1341 = vadd.f32 %v1231, %v1333
      %v1342 = vadd.f32 %v1236, %v1333
      %v1343 = vadd.f32 %v1239, %v1333
      %v1344 = vadd.f32 %v1244, %v1333
      %v1345 = vadd.f32 %v1247, %v1333
      %v1346 = vadd.f32 %v1252, %v1333
      %v1347 = vadd.f32 %v1255, %v1333
      %v1348 = vadd.f32 %v1260, %v1333
      %v1349 = vadd.f32 %v1263, %v1333
      %v1350 = vadd.f32 %v1268, %v1333
      %v1351 = vadd.f32 %v1271, %v1333
      %v1352 = vadd.f32 %v1276, %v1333
      %v1353 = vadd.f32 %v1279, %v1333
      %v1354 = vadd.f32 %v1284, %v1333
      %v1355 = vadd.f32 %v1287, %v1333
      %v1356 = vadd.f32 %v1292, %v1333
      %v1357 = vadd.f32 %v1295, %v1333
      %v1358 = vadd.f32 %v1300, %v1333
      %v1359 = vadd.f32 %v1303, %v1333
      %v1360 = vadd.f32 %v1308, %v1333
      %v1361 = vadd.f32 %v1311, %v1333
      %v1362 = vadd.f32 %v1316, %v1333
      %v1363 = vadd.f32 %v1319, %v1333
      %v1364 = vadd.f32 %v1324, %v1333
      %v1365 = vadd.f32 %v1327, %v1333
      %v1366 = vld [vmem:[%s16] sm:$0xff]
      %v1367 = vld [vmem:[%s16 + $0x8] sm:$0xff]
      %v1368 = vld [vmem:[%s16 + $0x10] sm:$0xff]
      %v1369 = vld [vmem:[%s16 + $0x18] sm:$0xff]
      %v1370 = vld [vmem:[%s16 + $0x20] sm:$0xff]
      %v1371 = vld [vmem:[%s16 + $0x28] sm:$0xff]
      %v1372 = vld [vmem:[%s16 + $0x30] sm:$0xff]
      %v1373 = vld [vmem:[%s16 + $0x38] sm:$0xff]
      %v1374 = vpack.c.bf16 %v1335, %v1334
      %v1375 = vpack.c.bf16 %v1337, %v1336
      %v1376 = vpack.c.bf16 %v1339, %v1338
      %v1377 = vpack.c.bf16 %v1341, %v1340
      %v1378 = vpack.c.bf16 %v1343, %v1342
      %v1379 = vpack.c.bf16 %v1345, %v1344
      %v1380 = vpack.c.bf16 %v1347, %v1346
      %v1381 = vpack.c.bf16 %v1349, %v1348
      %v1382 = vpack.c.bf16 %v1351, %v1350
      %v1383 = vpack.c.bf16 %v1353, %v1352
      %v1384 = vpack.c.bf16 %v1355, %v1354
      %v1385 = vpack.c.bf16 %v1357, %v1356
      %v1386 = vpack.c.bf16 %v1359, %v1358
      %v1387 = vpack.c.bf16 %v1361, %v1360
      %v1388 = vpack.c.bf16 %v1363, %v1362
      %v1389 = vpack.c.bf16 %v1365, %v1364
      %v1390 = vpack.c.bf16 %v1367, %v1366
      %v1391 = vpack.c.bf16 %v1369, %v1368
      %v1392 = vpack.c.bf16 %v1371, %v1370
      %v1393 = vpack.c.bf16 %v1373, %v1372
      %v1395 = vsel %vm818, %v1374, 0
      %v1398 = vsel %vm818, %v1375, 0
      %v1401 = vsel %vm818, %v1376, 0
      %v1404 = vsel %vm818, %v1377, 0
      %v1407 = vsel %vm818, %v1378, 0
      %v1410 = vsel %vm818, %v1379, 0
      %v1413 = vsel %vm818, %v1380, 0
      %v1416 = vsel %vm818, %v1381, 0
      %v1419 = vsel %vm818, %v1382, 0
      %v1422 = vsel %vm818, %v1383, 0
      %v1425 = vsel %vm818, %v1384, 0
      %v1428 = vsel %vm818, %v1385, 0
      %v1431 = vsel %vm818, %v1386, 0
      %v1434 = vsel %vm818, %v1387, 0
      %v1437 = vsel %vm818, %v1388, 0
      %v1440 = vsel %vm818, %v1389, 0
      %1442 = vmatprep.subr.bf16.mxu0 0
      %1443 = vmatpush1.bf16.msra.mxu0 %v1390
      %1444 = vmatprep.subr.bf16.mxu0 0
      %1445 = vmatpush1.bf16.msra.mxu0 %v1391
      %1446 = vmatprep.subr.bf16.mxu0 0
      %1447 = vmatpush1.bf16.msra.mxu0 %v1392
      %1448 = vmatprep.subr.bf16.mxu0 0
      %1449 = vmatpush1.bf16.msra.mxu0 %v1393
      %1450 = vmatprep.subr.bf16.mxu0 0
      %1451 = vmatpush1.bf16.msra.mxu0 0
      %1452 = vmatprep.subr.bf16.mxu0 0
      %1453 = vmatpush1.bf16.msra.mxu0 0
      %1454 = vmatprep.subr.bf16.mxu0 0
      %1455 = vmatpush1.bf16.msra.mxu0 0
      %1456 = vmatprep.subr.bf16.mxu0 0
      %1457 = vmatpush1.bf16.msra.mxu0 0
      %1458 = vmatprep.subr.bf16.mxu0 0
      %1459 = vmatpush1.bf16.msra.mxu0 0
      %1460 = vmatprep.subr.bf16.mxu0 0
      %1461 = vmatpush1.bf16.msra.mxu0 0
      %1462 = vmatprep.subr.bf16.mxu0 0
      %1463 = vmatpush1.bf16.msra.mxu0 0
      %1464 = vmatprep.subr.bf16.mxu0 0
      %1465 = vmatpush1.bf16.msra.mxu0 0
      %1466 = vmatprep.subr.bf16.mxu0 0
      %1467 = vmatpush1.bf16.msra.mxu0 0
      %1468 = vmatprep.subr.bf16.mxu0 0
      %1469 = vmatpush1.bf16.msra.mxu0 0
      %1470 = vmatprep.subr.bf16.mxu0 0
      %1471 = vmatpush1.bf16.msra.mxu0 0
      %1472 = vmatprep.subr.bf16.mxu0 0
      %1473 = vmatpush1.bf16.msra.mxu0 0
      %1474 = vmatprep.mubr.bf16.mxu0 0
      %1475 = vmatmul.mubr.bf16.gmra.mrb[0].mxu0 %v1395
      %v1476 = vpop.f32.mrb[0].mxu0
      %v1477 = vadd.f32 0.0, %v1476
      %v1478 = vpop.f32.mrb[0].mxu0
      %v1479 = vpop.f32.mrb[0].mxu0
      %v1480 = vadd.f32 0.0, %v1479
      %v1481 = vpop.f32.mrb[0].mxu0
      %1482 = vmatprep.mubr.bf16.mxu0 0
      %1483 = vmatmul.mubr.bf16.gmra.mrb[0].mxu0 %v1398
      %v1484 = vpop.f32.mrb[0].mxu0
      %v1485 = vadd.f32 0.0, %v1484
      %v1486 = vpop.f32.mrb[0].mxu0
      %v1487 = vpop.f32.mrb[0].mxu0
      %v1488 = vadd.f32 0.0, %v1487
      %v1489 = vpop.f32.mrb[0].mxu0
      %1490 = vmatprep.mubr.bf16.mxu0 0
      %1491 = vmatmul.mubr.bf16.gmra.mrb[0].mxu0 %v1401
      %v1492 = vpop.f32.mrb[0].mxu0
      %v1493 = vadd.f32 0.0, %v1492
      %v1494 = vpop.f32.mrb[0].mxu0
      %v1495 = vpop.f32.mrb[0].mxu0
      %v1496 = vadd.f32 0.0, %v1495
      %v1497 = vpop.f32.mrb[0].mxu0
      %1498 = vmatprep.mubr.bf16.mxu0 0
      %1499 = vmatmul.mubr.bf16.gmra.mrb[0].mxu0 %v1404
      %v1500 = vpop.f32.mrb[0].mxu0
      %v1501 = vadd.f32 0.0, %v1500
      %v1502 = vpop.f32.mrb[0].mxu0
      %v1503 = vpop.f32.mrb[0].mxu0
      %v1504 = vadd.f32 0.0, %v1503
      %v1505 = vpop.f32.mrb[0].mxu0
      %1506 = vmatprep.mubr.bf16.mxu0 0
      %1507 = vmatmul.mubr.bf16.gmra.mrb[0].mxu0 %v1407
      %v1508 = vpop.f32.mrb[0].mxu0
      %v1509 = vadd.f32 0.0, %v1508
      %v1510 = vpop.f32.mrb[0].mxu0
      %v1511 = vpop.f32.mrb[0].mxu0
      %v1512 = vadd.f32 0.0, %v1511
      %v1513 = vpop.f32.mrb[0].mxu0
      %1514 = vmatprep.mubr.bf16.mxu0 0
      %1515 = vmatmul.mubr.bf16.gmra.mrb[0].mxu0 %v1410
      %v1516 = vpop.f32.mrb[0].mxu0
      %v1517 = vadd.f32 0.0, %v1516
      %v1518 = vpop.f32.mrb[0].mxu0
      %v1519 = vpop.f32.mrb[0].mxu0
      %v1520 = vadd.f32 0.0, %v1519
      %v1521 = vpop.f32.mrb[0].mxu0
      %1522 = vmatprep.mubr.bf16.mxu0 0
      %1523 = vmatmul.mubr.bf16.gmra.mrb[0].mxu0 %v1413
      %v1524 = vpop.f32.mrb[0].mxu0
      %v1525 = vadd.f32 0.0, %v1524
      %v1526 = vpop.f32.mrb[0].mxu0
      %v1527 = vpop.f32.mrb[0].mxu0
      %v1528 = vadd.f32 0.0, %v1527
      %v1529 = vpop.f32.mrb[0].mxu0
      %1530 = vmatprep.mubr.bf16.mxu0 0
      %1531 = vmatmul.mubr.bf16.gmra.mrb[0].mxu0 %v1416
      %v1532 = vpop.f32.mrb[0].mxu0
      %v1533 = vadd.f32 0.0, %v1532
      %v1534 = vpop.f32.mrb[0].mxu0
      %v1535 = vpop.f32.mrb[0].mxu0
      %v1536 = vadd.f32 0.0, %v1535
      %v1537 = vpop.f32.mrb[0].mxu0
      %1538 = vmatprep.mubr.bf16.mxu0 0
      %1539 = vmatmul.mubr.bf16.gmra.mrb[0].mxu0 %v1419
      %v1540 = vpop.f32.mrb[0].mxu0
      %v1541 = vadd.f32 0.0, %v1540
      %v1542 = vpop.f32.mrb[0].mxu0
      %v1543 = vpop.f32.mrb[0].mxu0
      %v1544 = vadd.f32 0.0, %v1543
      %v1545 = vpop.f32.mrb[0].mxu0
      %1546 = vmatprep.mubr.bf16.mxu0 0
      %1547 = vmatmul.mubr.bf16.gmra.mrb[0].mxu0 %v1422
      %v1548 = vpop.f32.mrb[0].mxu0
      %v1549 = vadd.f32 0.0, %v1548
      %v1550 = vpop.f32.mrb[0].mxu0
      %v1551 = vpop.f32.mrb[0].mxu0
      %v1552 = vadd.f32 0.0, %v1551
      %v1553 = vpop.f32.mrb[0].mxu0
      %1554 = vmatprep.mubr.bf16.mxu0 0
      %1555 = vmatmul.mubr.bf16.gmra.mrb[0].mxu0 %v1425
      %v1556 = vpop.f32.mrb[0].mxu0
      %v1557 = vadd.f32 0.0, %v1556
      %v1558 = vpop.f32.mrb[0].mxu0
      %v1559 = vpop.f32.mrb[0].mxu0
      %v1560 = vadd.f32 0.0, %v1559
      %v1561 = vpop.f32.mrb[0].mxu0
      %1562 = vmatprep.mubr.bf16.mxu0 0
      %1563 = vmatmul.mubr.bf16.gmra.mrb[0].mxu0 %v1428
      %v1564 = vpop.f32.mrb[0].mxu0
      %v1565 = vadd.f32 0.0, %v1564
      %v1566 = vpop.f32.mrb[0].mxu0
      %v1567 = vpop.f32.mrb[0].mxu0
      %v1568 = vadd.f32 0.0, %v1567
      %v1569 = vpop.f32.mrb[0].mxu0
      %1570 = vmatprep.mubr.bf16.mxu0 0
      %1571 = vmatmul.mubr.bf16.gmra.mrb[0].mxu0 %v1431
      %v1572 = vpop.f32.mrb[0].mxu0
      %v1573 = vadd.f32 0.0, %v1572
      %v1574 = vpop.f32.mrb[0].mxu0
      %v1575 = vpop.f32.mrb[0].mxu0
      %v1576 = vadd.f32 0.0, %v1575
      %v1577 = vpop.f32.mrb[0].mxu0
      %1578 = vmatprep.mubr.bf16.mxu0 0
      %1579 = vmatmul.mubr.bf16.gmra.mrb[0].mxu0 %v1434
      %v1580 = vpop.f32.mrb[0].mxu0
      %v1581 = vadd.f32 0.0, %v1580
      %v1582 = vpop.f32.mrb[0].mxu0
      %v1583 = vpop.f32.mrb[0].mxu0
      %v1584 = vadd.f32 0.0, %v1583
      %v1585 = vpop.f32.mrb[0].mxu0
      %1586 = vmatprep.mubr.bf16.mxu0 0
      %1587 = vmatmul.mubr.bf16.gmra.mrb[0].mxu0 %v1437
      %v1588 = vpop.f32.mrb[0].mxu0
      %v1589 = vadd.f32 0.0, %v1588
      %v1590 = vpop.f32.mrb[0].mxu0
      %v1591 = vpop.f32.mrb[0].mxu0
      %v1592 = vadd.f32 0.0, %v1591
      %v1593 = vpop.f32.mrb[0].mxu0
      %1594 = vmatprep.mubr.bf16.mxu0 0
      %1595 = vmatmul.mubr.bf16.gmra.mrb[0].mxu0 %v1440
      %v1596 = vpop.f32.mrb[0].mxu0
      %v1597 = vadd.f32 0.0, %v1596
      %v1598 = vpop.f32.mrb[0].mxu0
      %v1599 = vpop.f32.mrb[0].mxu0
      %v1600 = vadd.f32 0.0, %v1599
      %v1601 = vpop.f32.mrb[0].mxu0
      %1602 = vdwg.mxu0
      %v1603 = vld [vmem:[%s17] sm:$0xff]
      %v1604 = vld [vmem:[%s17 + $0x8] sm:$0xff]
      %v1605 = vld [vmem:[%s17 + $0x10] sm:$0xff]
      %v1606 = vld [vmem:[%s17 + $0x18] sm:$0xff]
      %v1607 = vld [vmem:[%s17 + $0x20] sm:$0xff]
      %v1608 = vld [vmem:[%s17 + $0x28] sm:$0xff]
      %v1609 = vld [vmem:[%s17 + $0x30] sm:$0xff]
      %v1610 = vld [vmem:[%s17 + $0x38] sm:$0xff]
      %v1611 = vpack.c.bf16 %v813, %v813
      %v1612 = vpack.c.bf16 %v1604, %v1603
      %v1613 = vpack.c.bf16 %v1606, %v1605
      %v1614 = vpack.c.bf16 %v1608, %v1607
      %v1615 = vpack.c.bf16 %v1610, %v1609
      %v1617 = vsel %vm818, %v1611, 0
      %1619 = vmatprep.subr.bf16.mxu0 0
      %1620 = vmatpush1.bf16.msra.mxu0 %v1612
      %1621 = vmatprep.subr.bf16.mxu0 0
      %1622 = vmatpush1.bf16.msra.mxu0 %v1613
      %1623 = vmatprep.subr.bf16.mxu0 0
      %1624 = vmatpush1.bf16.msra.mxu0 %v1614
      %1625 = vmatprep.subr.bf16.mxu0 0
      %1626 = vmatpush1.bf16.msra.mxu0 %v1615
      %1627 = vmatprep.subr.bf16.mxu0 0
      %1628 = vmatpush1.bf16.msra.mxu0 0
      %1629 = vmatprep.subr.bf16.mxu0 0
      %1630 = vmatpush1.bf16.msra.mxu0 0
      %1631 = vmatprep.subr.bf16.mxu0 0
      %1632 = vmatpush1.bf16.msra.mxu0 0
      %1633 = vmatprep.subr.bf16.mxu0 0
      %1634 = vmatpush1.bf16.msra.mxu0 0
      %1635 = vmatprep.subr.bf16.mxu0 0
      %1636 = vmatpush1.bf16.msra.mxu0 0
      %1637 = vmatprep.subr.bf16.mxu0 0
      %1638 = vmatpush1.bf16.msra.mxu0 0
      %1639 = vmatprep.subr.bf16.mxu0 0
      %1640 = vmatpush1.bf16.msra.mxu0 0
      %1641 = vmatprep.subr.bf16.mxu0 0
      %1642 = vmatpush1.bf16.msra.mxu0 0
      %1643 = vmatprep.subr.bf16.mxu0 0
      %1644 = vmatpush1.bf16.msra.mxu0 0
      %1645 = vmatprep.subr.bf16.mxu0 0
      %1646 = vmatpush1.bf16.msra.mxu0 0
      %1647 = vmatprep.subr.bf16.mxu0 0
      %1648 = vmatpush1.bf16.msra.mxu0 0
      %1649 = vmatprep.subr.bf16.mxu0 0
      %1650 = vmatpush1.bf16.msra.mxu0 0
      %1651 = vmatprep.mubr.bf16.mxu0 0
      %1652 = vmatmul.mubr.bf16.gmra.mrb[0].mxu0 %v1617
      %v1653 = vpop.f32.mrb[0].mxu0
      %v1654 = vadd.f32 0.0, %v1653
      %v1655 = vpop.f32.mrb[0].mxu0
      %v1656 = vpop.f32.mrb[0].mxu0
      %v1657 = vpop.f32.mrb[0].mxu0
      %1658 = vdwg.mxu0
      %v1659 = vpack.c.bf16 %v1480, %v1477
      %v1660 = vpack.c.bf16 %v1488, %v1485
      %v1661 = vpack.c.bf16 %v1496, %v1493
      %v1662 = vpack.c.bf16 %v1504, %v1501
      %v1663 = vpack.c.bf16 %v1512, %v1509
      %v1664 = vpack.c.bf16 %v1520, %v1517
      %v1665 = vpack.c.bf16 %v1528, %v1525
      %v1666 = vpack.c.bf16 %v1536, %v1533
      %v1667 = vpack.c.bf16 %v1544, %v1541
      %v1668 = vpack.c.bf16 %v1552, %v1549
      %v1669 = vpack.c.bf16 %v1560, %v1557
      %v1670 = vpack.c.bf16 %v1568, %v1565
      %v1671 = vpack.c.bf16 %v1576, %v1573
      %v1672 = vpack.c.bf16 %v1584, %v1581
      %v1673 = vpack.c.bf16 %v1592, %v1589
      %v1674 = vpack.c.bf16 %v1600, %v1597
      %v1675 = vpack.c.bf16 %v1654, %v1654
      %v1677 = vsel %vm818, %v1659, 0
      %v1680 = vsel %vm818, %v1660, 0
      %v1683 = vsel %vm818, %v1661, 0
      %v1686 = vsel %vm818, %v1662, 0
      %v1689 = vsel %vm818, %v1663, 0
      %v1692 = vsel %vm818, %v1664, 0
      %v1695 = vsel %vm818, %v1665, 0
      %v1698 = vsel %vm818, %v1666, 0
      %v1701 = vsel %vm818, %v1667, 0
      %v1704 = vsel %vm818, %v1668, 0
      %v1707 = vsel %vm818, %v1669, 0
      %v1710 = vsel %vm818, %v1670, 0
      %v1713 = vsel %vm818, %v1671, 0
      %v1716 = vsel %vm818, %v1672, 0
      %v1719 = vsel %vm818, %v1673, 0
      %v1722 = vsel %vm818, %v1674, 0
      %v1725 = vsel %vm818, %v1675, 0
      %1727 = vmatprep.subr.bf16.mxu0 0
      %1728 = vmatpush1.bf16.xpose.msra.mxu0 %v1725
      %1729 = vmatprep.subr.bf16.mxu0 0
      %1730 = vmatpush1.bf16.xpose.msra.mxu0 0
      %1731 = vmatprep.subr.bf16.mxu0 0
      %1732 = vmatpush1.bf16.xpose.msra.mxu0 0
      %1733 = vmatprep.subr.bf16.mxu0 0
      %1734 = vmatpush1.bf16.xpose.msra.mxu0 0
      %1735 = vmatprep.subr.bf16.mxu0 0
      %1736 = vmatpush1.bf16.xpose.msra.mxu0 0
      %1737 = vmatprep.subr.bf16.mxu0 0
      %1738 = vmatpush1.bf16.xpose.msra.mxu0 0
      %1739 = vmatprep.subr.bf16.mxu0 0
      %1740 = vmatpush1.bf16.xpose.msra.mxu0 0
      %1741 = vmatprep.subr.bf16.mxu0 0
      %1742 = vmatpush1.bf16.xpose.msra.mxu0 0
      %1743 = vmatprep.subr.bf16.mxu0 0
      %1744 = vmatpush1.bf16.xpose.msra.mxu0 0
      %1745 = vmatprep.subr.bf16.mxu0 0
      %1746 = vmatpush1.bf16.xpose.msra.mxu0 0
      %1747 = vmatprep.subr.bf16.mxu0 0
      %1748 = vmatpush1.bf16.xpose.msra.mxu0 0
      %1749 = vmatprep.subr.bf16.mxu0 0
      %1750 = vmatpush1.bf16.xpose.msra.mxu0 0
      %1751 = vmatprep.subr.bf16.mxu0 0
      %1752 = vmatpush1.bf16.xpose.msra.mxu0 0
      %1753 = vmatprep.subr.bf16.mxu0 0
      %1754 = vmatpush1.bf16.xpose.msra.mxu0 0
      %1755 = vmatprep.subr.bf16.mxu0 0
      %1756 = vmatpush1.bf16.xpose.msra.mxu0 0
      %1757 = vmatprep.subr.bf16.mxu0 0
      %1758 = vmatpush1.bf16.xpose.msra.mxu0 0
      %1759 = vmatprep.mubr.bf16.mxu0 0
      %1760 = vmatmul.mubr.bf16.gmra.mrb[0].mxu0 %v1677
      %v1761 = vpop.f32.mrb[0].mxu0
      %v1762 = vadd.f32 0.0, %v1761
      %v1763 = vpop.f32.mrb[0].mxu0
      %v1764 = vpop.f32.mrb[0].mxu0
      %v1765 = vadd.f32 0.0, %v1764
      %v1766 = vpop.f32.mrb[0].mxu0
      %1767 = vmatprep.mubr.bf16.mxu0 0
      %1768 = vmatmul.mubr.bf16.gmra.mrb[0].mxu0 %v1680
      %v1769 = vpop.f32.mrb[0].mxu0
      %v1770 = vadd.f32 0.0, %v1769
      %v1771 = vpop.f32.mrb[0].mxu0
      %v1772 = vpop.f32.mrb[0].mxu0
      %v1773 = vadd.f32 0.0, %v1772
      %v1774 = vpop.f32.mrb[0].mxu0
      %1775 = vmatprep.mubr.bf16.mxu0 0
      %1776 = vmatmul.mubr.bf16.gmra.mrb[0].mxu0 %v1683
      %v1777 = vpop.f32.mrb[0].mxu0
      %v1778 = vadd.f32 0.0, %v1777
      %v1779 = vpop.f32.mrb[0].mxu0
      %v1780 = vpop.f32.mrb[0].mxu0
      %v1781 = vadd.f32 0.0, %v1780
      %v1782 = vpop.f32.mrb[0].mxu0
      %1783 = vmatprep.mubr.bf16.mxu0 0
      %1784 = vmatmul.mubr.bf16.gmra.mrb[0].mxu0 %v1686
      %v1785 = vpop.f32.mrb[0].mxu0
      %v1786 = vadd.f32 0.0, %v1785
      %v1787 = vpop.f32.mrb[0].mxu0
      %v1788 = vpop.f32.mrb[0].mxu0
      %v1789 = vadd.f32 0.0, %v1788
      %v1790 = vpop.f32.mrb[0].mxu0
      %1791 = vmatprep.mubr.bf16.mxu0 0
      %1792 = vmatmul.mubr.bf16.gmra.mrb[0].mxu0 %v1689
      %v1793 = vpop.f32.mrb[0].mxu0
      %v1794 = vadd.f32 0.0, %v1793
      %v1795 = vpop.f32.mrb[0].mxu0
      %v1796 = vpop.f32.mrb[0].mxu0
      %v1797 = vadd.f32 0.0, %v1796
      %v1798 = vpop.f32.mrb[0].mxu0
      %1799 = vmatprep.mubr.bf16.mxu0 0
      %1800 = vmatmul.mubr.bf16.gmra.mrb[0].mxu0 %v1692
      %v1801 = vpop.f32.mrb[0].mxu0
      %v1802 = vadd.f32 0.0, %v1801
      %v1803 = vpop.f32.mrb[0].mxu0
      %v1804 = vpop.f32.mrb[0].mxu0
      %v1805 = vadd.f32 0.0, %v1804
      %v1806 = vpop.f32.mrb[0].mxu0
      %1807 = vmatprep.mubr.bf16.mxu0 0
      %1808 = vmatmul.mubr.bf16.gmra.mrb[0].mxu0 %v1695
      %v1809 = vpop.f32.mrb[0].mxu0
      %v1810 = vadd.f32 0.0, %v1809
      %v1811 = vpop.f32.mrb[0].mxu0
      %v1812 = vpop.f32.mrb[0].mxu0
      %v1813 = vadd.f32 0.0, %v1812
      %v1814 = vpop.f32.mrb[0].mxu0
      %1815 = vmatprep.mubr.bf16.mxu0 0
      %1816 = vmatmul.mubr.bf16.gmra.mrb[0].mxu0 %v1698
      %v1817 = vpop.f32.mrb[0].mxu0
      %v1818 = vadd.f32 0.0, %v1817
      %v1819 = vpop.f32.mrb[0].mxu0
      %v1820 = vpop.f32.mrb[0].mxu0
      %v1821 = vadd.f32 0.0, %v1820
      %v1822 = vpop.f32.mrb[0].mxu0
      %1823 = vmatprep.mubr.bf16.mxu0 0
      %1824 = vmatmul.mubr.bf16.gmra.mrb[0].mxu0 %v1701
      %v1825 = vpop.f32.mrb[0].mxu0
      %v1826 = vadd.f32 0.0, %v1825
      %v1827 = vpop.f32.mrb[0].mxu0
      %v1828 = vpop.f32.mrb[0].mxu0
      %v1829 = vadd.f32 0.0, %v1828
      %v1830 = vpop.f32.mrb[0].mxu0
      %1831 = vmatprep.mubr.bf16.mxu0 0
      %1832 = vmatmul.mubr.bf16.gmra.mrb[0].mxu0 %v1704
      %v1833 = vpop.f32.mrb[0].mxu0
      %v1834 = vadd.f32 0.0, %v1833
      %v1835 = vpop.f32.mrb[0].mxu0
      %v1836 = vpop.f32.mrb[0].mxu0
      %v1837 = vadd.f32 0.0, %v1836
      %v1838 = vpop.f32.mrb[0].mxu0
      %1839 = vmatprep.mubr.bf16.mxu0 0
      %1840 = vmatmul.mubr.bf16.gmra.mrb[0].mxu0 %v1707
      %v1841 = vpop.f32.mrb[0].mxu0
      %v1842 = vadd.f32 0.0, %v1841
      %v1843 = vpop.f32.mrb[0].mxu0
      %v1844 = vpop.f32.mrb[0].mxu0
      %v1845 = vadd.f32 0.0, %v1844
      %v1846 = vpop.f32.mrb[0].mxu0
      %1847 = vmatprep.mubr.bf16.mxu0 0
      %1848 = vmatmul.mubr.bf16.gmra.mrb[0].mxu0 %v1710
      %v1849 = vpop.f32.mrb[0].mxu0
      %v1850 = vadd.f32 0.0, %v1849
      %v1851 = vpop.f32.mrb[0].mxu0
      %v1852 = vpop.f32.mrb[0].mxu0
      %v1853 = vadd.f32 0.0, %v1852
      %v1854 = vpop.f32.mrb[0].mxu0
      %1855 = vmatprep.mubr.bf16.mxu0 0
      %1856 = vmatmul.mubr.bf16.gmra.mrb[0].mxu0 %v1713
      %v1857 = vpop.f32.mrb[0].mxu0
      %v1858 = vadd.f32 0.0, %v1857
      %v1859 = vpop.f32.mrb[0].mxu0
      %v1860 = vpop.f32.mrb[0].mxu0
      %v1861 = vadd.f32 0.0, %v1860
      %v1862 = vpop.f32.mrb[0].mxu0
      %1863 = vmatprep.mubr.bf16.mxu0 0
      %1864 = vmatmul.mubr.bf16.gmra.mrb[0].mxu0 %v1716
      %v1865 = vpop.f32.mrb[0].mxu0
      %v1866 = vadd.f32 0.0, %v1865
      %v1867 = vpop.f32.mrb[0].mxu0
      %v1868 = vpop.f32.mrb[0].mxu0
      %v1869 = vadd.f32 0.0, %v1868
      %v1870 = vpop.f32.mrb[0].mxu0
      %1871 = vmatprep.mubr.bf16.mxu0 0
      %1872 = vmatmul.mubr.bf16.gmra.mrb[0].mxu0 %v1719
      %v1873 = vpop.f32.mrb[0].mxu0
      %v1874 = vadd.f32 0.0, %v1873
      %v1875 = vpop.f32.mrb[0].mxu0
      %v1876 = vpop.f32.mrb[0].mxu0
      %v1877 = vadd.f32 0.0, %v1876
      %v1878 = vpop.f32.mrb[0].mxu0
      %1879 = vmatprep.mubr.bf16.mxu0 0
      %1880 = vmatmul.mubr.bf16.gmra.mrb[0].mxu0 %v1722
      %v1881 = vpop.f32.mrb[0].mxu0
      %v1882 = vadd.f32 0.0, %v1881
      %v1883 = vpop.f32.mrb[0].mxu0
      %v1884 = vpop.f32.mrb[0].mxu0
      %v1885 = vadd.f32 0.0, %v1884
      %v1886 = vpop.f32.mrb[0].mxu0
      %1887 = vdwg.mxu0
      %v1888 = vmul.f32 %v1762, 0.125
      %v1889 = vmul.f32 %v1765, 0.125
      %v1890 = vmul.f32 %v1770, 0.125
      %v1891 = vmul.f32 %v1773, 0.125
      %v1892 = vmul.f32 %v1778, 0.125
      %v1893 = vmul.f32 %v1781, 0.125
      %v1894 = vmul.f32 %v1786, 0.125
      %v1895 = vmul.f32 %v1789, 0.125
      %v1896 = vmul.f32 %v1794, 0.125
      %v1897 = vmul.f32 %v1797, 0.125
      %v1898 = vmul.f32 %v1802, 0.125
      %v1899 = vmul.f32 %v1805, 0.125
      %v1900 = vmul.f32 %v1810, 0.125
      %v1901 = vmul.f32 %v1813, 0.125
      %v1902 = vmul.f32 %v1818, 0.125
      %v1903 = vmul.f32 %v1821, 0.125
      %v1904 = vmul.f32 %v1826, 0.125
      %v1905 = vmul.f32 %v1829, 0.125
      %v1906 = vmul.f32 %v1834, 0.125
      %v1907 = vmul.f32 %v1837, 0.125
      %v1908 = vmul.f32 %v1842, 0.125
      %v1909 = vmul.f32 %v1845, 0.125
      %v1910 = vmul.f32 %v1850, 0.125
      %v1911 = vmul.f32 %v1853, 0.125
      %v1912 = vmul.f32 %v1858, 0.125
      %v1913 = vmul.f32 %v1861, 0.125
      %v1914 = vmul.f32 %v1866, 0.125
      %v1915 = vmul.f32 %v1869, 0.125
      %v1916 = vmul.f32 %v1874, 0.125
      %v1917 = vmul.f32 %v1877, 0.125
      %v1918 = vmul.f32 %v1882, 0.125
      %v1919 = vmul.f32 %v1885, 0.125
      %v1920 = vsel %vm896, %v1888, -inf
      %1921 = vmax.xlane.f32.xlu0 %v1920
      %v1922 = vpop.xlane.xlu0 %1921
      %v1923 = vsel %vm896, %v1889, -inf
      %1924 = vmax.xlane.f32.xlu0 %v1923
      %v1925 = vpop.xlane.xlu0 %1924
      %v1926 = vsel %vm896, %v1890, -inf
      %1927 = vmax.xlane.f32.xlu0 %v1926
      %v1928 = vpop.xlane.xlu0 %1927
      %v1929 = vsel %vm896, %v1891, -inf
      %1930 = vmax.xlane.f32.xlu0 %v1929
      %v1931 = vpop.xlane.xlu0 %1930
      %v1932 = vsel %vm896, %v1892, -inf
      %1933 = vmax.xlane.f32.xlu0 %v1932
      %v1934 = vpop.xlane.xlu0 %1933
      %v1935 = vsel %vm896, %v1893, -inf
      %1936 = vmax.xlane.f32.xlu0 %v1935
      %v1937 = vpop.xlane.xlu0 %1936
      %v1938 = vsel %vm896, %v1894, -inf
      %1939 = vmax.xlane.f32.xlu0 %v1938
      %v1940 = vpop.xlane.xlu0 %1939
      %v1941 = vsel %vm896, %v1895, -inf
      %1942 = vmax.xlane.f32.xlu0 %v1941
      %v1943 = vpop.xlane.xlu0 %1942
      %v1944 = vsel %vm896, %v1896, -inf
      %1945 = vmax.xlane.f32.xlu0 %v1944
      %v1946 = vpop.xlane.xlu0 %1945
      %v1947 = vsel %vm896, %v1897, -inf
      %1948 = vmax.xlane.f32.xlu0 %v1947
      %v1949 = vpop.xlane.xlu0 %1948
      %v1950 = vsel %vm896, %v1898, -inf
      %1951 = vmax.xlane.f32.xlu0 %v1950
      %v1952 = vpop.xlane.xlu0 %1951
      %v1953 = vsel %vm896, %v1899, -inf
      %1954 = vmax.xlane.f32.xlu0 %v1953
      %v1955 = vpop.xlane.xlu0 %1954
      %v1956 = vsel %vm896, %v1900, -inf
      %1957 = vmax.xlane.f32.xlu0 %v1956
      %v1958 = vpop.xlane.xlu0 %1957
      %v1959 = vsel %vm896, %v1901, -inf
      %1960 = vmax.xlane.f32.xlu0 %v1959
      %v1961 = vpop.xlane.xlu0 %1960
      %v1962 = vsel %vm896, %v1902, -inf
      %1963 = vmax.xlane.f32.xlu0 %v1962
      %v1964 = vpop.xlane.xlu0 %1963
      %v1965 = vsel %vm896, %v1903, -inf
      %1966 = vmax.xlane.f32.xlu0 %v1965
      %v1967 = vpop.xlane.xlu0 %1966
      %v1968 = vsel %vm896, %v1904, -inf
      %1969 = vmax.xlane.f32.xlu0 %v1968
      %v1970 = vpop.xlane.xlu0 %1969
      %v1971 = vsel %vm896, %v1905, -inf
      %1972 = vmax.xlane.f32.xlu0 %v1971
      %v1973 = vpop.xlane.xlu0 %1972
      %v1974 = vsel %vm896, %v1906, -inf
      %1975 = vmax.xlane.f32.xlu0 %v1974
      %v1976 = vpop.xlane.xlu0 %1975
      %v1977 = vsel %vm896, %v1907, -inf
      %1978 = vmax.xlane.f32.xlu0 %v1977
      %v1979 = vpop.xlane.xlu0 %1978
      %v1980 = vsel %vm896, %v1908, -inf
      %1981 = vmax.xlane.f32.xlu0 %v1980
      %v1982 = vpop.xlane.xlu0 %1981
      %v1983 = vsel %vm896, %v1909, -inf
      %1984 = vmax.xlane.f32.xlu0 %v1983
      %v1985 = vpop.xlane.xlu0 %1984
      %v1986 = vsel %vm896, %v1910, -inf
      %1987 = vmax.xlane.f32.xlu0 %v1986
      %v1988 = vpop.xlane.xlu0 %1987
      %v1989 = vsel %vm896, %v1911, -inf
      %1990 = vmax.xlane.f32.xlu0 %v1989
      %v1991 = vpop.xlane.xlu0 %1990
      %v1992 = vsel %vm896, %v1912, -inf
      %1993 = vmax.xlane.f32.xlu0 %v1992
      %v1994 = vpop.xlane.xlu0 %1993
      %v1995 = vsel %vm896, %v1913, -inf
      %1996 = vmax.xlane.f32.xlu0 %v1995
      %v1997 = vpop.xlane.xlu0 %1996
      %v1998 = vsel %vm896, %v1914, -inf
      %1999 = vmax.xlane.f32.xlu0 %v1998
      %v2000 = vpop.xlane.xlu0 %1999
      %v2001 = vsel %vm896, %v1915, -inf
      %2002 = vmax.xlane.f32.xlu0 %v2001
      %v2003 = vpop.xlane.xlu0 %2002
      %v2004 = vsel %vm896, %v1916, -inf
      %2005 = vmax.xlane.f32.xlu0 %v2004
      %v2006 = vpop.xlane.xlu0 %2005
      %v2007 = vsel %vm896, %v1917, -inf
      %2008 = vmax.xlane.f32.xlu0 %v2007
      %v2009 = vpop.xlane.xlu0 %2008
      %v2010 = vsel %vm896, %v1918, -inf
      %2011 = vmax.xlane.f32.xlu0 %v2010
      %v2012 = vpop.xlane.xlu0 %2011
      %v2013 = vsel %vm896, %v1919, -inf
      %2014 = vmax.xlane.f32.xlu0 %v2013
      %v2015 = vpop.xlane.xlu0 %2014
      %v2016 = vsub.f32 %v1888, %v1922
      %v2017 = vsub.f32 %v1889, %v1925
      %v2018 = vsub.f32 %v1890, %v1928
      %v2019 = vsub.f32 %v1891, %v1931
      %v2020 = vsub.f32 %v1892, %v1934
      %v2021 = vsub.f32 %v1893, %v1937
      %v2022 = vsub.f32 %v1894, %v1940
      %v2023 = vsub.f32 %v1895, %v1943
      %v2024 = vsub.f32 %v1896, %v1946
      %v2025 = vsub.f32 %v1897, %v1949
      %v2026 = vsub.f32 %v1898, %v1952
      %v2027 = vsub.f32 %v1899, %v1955
      %v2028 = vsub.f32 %v1900, %v1958
      %v2029 = vsub.f32 %v1901, %v1961
      %v2030 = vsub.f32 %v1902, %v1964
      %v2031 = vsub.f32 %v1903, %v1967
      %v2032 = vsub.f32 %v1904, %v1970
      %v2033 = vsub.f32 %v1905, %v1973
      %v2034 = vsub.f32 %v1906, %v1976
      %v2035 = vsub.f32 %v1907, %v1979
      %v2036 = vsub.f32 %v1908, %v1982
      %v2037 = vsub.f32 %v1909, %v1985
      %v2038 = vsub.f32 %v1910, %v1988
      %v2039 = vsub.f32 %v1911, %v1991
      %v2040 = vsub.f32 %v1912, %v1994
      %v2041 = vsub.f32 %v1913, %v1997
      %v2042 = vsub.f32 %v1914, %v2000
      %v2043 = vsub.f32 %v1915, %v2003
      %v2044 = vsub.f32 %v1916, %v2006
      %v2045 = vsub.f32 %v1917, %v2009
      %v2046 = vsub.f32 %v1918, %v2012
      %v2047 = vsub.f32 %v1919, %v2015
      %v2048 = vmul.f32 %v2016, 1.442695
      %v2049 = vpow.pop %v2048
      %v2050 = vmul.f32 %v2017, 1.442695
      %v2051 = vpow.pop %v2050
      %v2052 = vmul.f32 %v2018, 1.442695
      %v2053 = vpow.pop %v2052
      %v2054 = vmul.f32 %v2019, 1.442695
      %v2055 = vpow.pop %v2054
      %v2056 = vmul.f32 %v2020, 1.442695
      %v2057 = vpow.pop %v2056
      %v2058 = vmul.f32 %v2021, 1.442695
      %v2059 = vpow.pop %v2058
      %v2060 = vmul.f32 %v2022, 1.442695
      %v2061 = vpow.pop %v2060
      %v2062 = vmul.f32 %v2023, 1.442695
      %v2063 = vpow.pop %v2062
      %v2064 = vmul.f32 %v2024, 1.442695
      %v2065 = vpow.pop %v2064
      %v2066 = vmul.f32 %v2025, 1.442695
      %v2067 = vpow.pop %v2066
      %v2068 = vmul.f32 %v2026, 1.442695
      %v2069 = vpow.pop %v2068
      %v2070 = vmul.f32 %v2027, 1.442695
      %v2071 = vpow.pop %v2070
      %v2072 = vmul.f32 %v2028, 1.442695
      %v2073 = vpow.pop %v2072
      %v2074 = vmul.f32 %v2029, 1.442695
      %v2075 = vpow.pop %v2074
      %v2076 = vmul.f32 %v2030, 1.442695
      %v2077 = vpow.pop %v2076
      %v2078 = vmul.f32 %v2031, 1.442695
      %v2079 = vpow.pop %v2078
      %v2080 = vmul.f32 %v2032, 1.442695
      %v2081 = vpow.pop %v2080
      %v2082 = vmul.f32 %v2033, 1.442695
      %v2083 = vpow.pop %v2082
      %v2084 = vmul.f32 %v2034, 1.442695
      %v2085 = vpow.pop %v2084
      %v2086 = vmul.f32 %v2035, 1.442695
      %v2087 = vpow.pop %v2086
      %v2088 = vmul.f32 %v2036, 1.442695
      %v2089 = vpow.pop %v2088
      %v2090 = vmul.f32 %v2037, 1.442695
      %v2091 = vpow.pop %v2090
      %v2092 = vmul.f32 %v2038, 1.442695
      %v2093 = vpow.pop %v2092
      %v2094 = vmul.f32 %v2039, 1.442695
      %v2095 = vpow.pop %v2094
      %v2096 = vmul.f32 %v2040, 1.442695
      %v2097 = vpow.pop %v2096
      %v2098 = vmul.f32 %v2041, 1.442695
      %v2099 = vpow.pop %v2098
      %v2100 = vmul.f32 %v2042, 1.442695
      %v2101 = vpow.pop %v2100
      %v2102 = vmul.f32 %v2043, 1.442695
      %v2103 = vpow.pop %v2102
      %v2104 = vmul.f32 %v2044, 1.442695
      %v2105 = vpow.pop %v2104
      %v2106 = vmul.f32 %v2045, 1.442695
      %v2107 = vpow.pop %v2106
      %v2108 = vmul.f32 %v2046, 1.442695
      %v2109 = vpow.pop %v2108
      %v2110 = vmul.f32 %v2047, 1.442695
      %v2111 = vpow.pop %v2110
      %v2112 = vsel %vm896, %v2049, 0.0
      %2113 = vadd.xlane.f32.xlu0 %v2112
      %v2114 = vpop.xlane.xlu0 %2113
      %v2115 = vsel %vm896, %v2051, 0.0
      %2116 = vadd.xlane.f32.xlu0 %v2115
      %v2117 = vpop.xlane.xlu0 %2116
      %v2118 = vsel %vm896, %v2053, 0.0
      %2119 = vadd.xlane.f32.xlu0 %v2118
      %v2120 = vpop.xlane.xlu0 %2119
      %v2121 = vsel %vm896, %v2055, 0.0
      %2122 = vadd.xlane.f32.xlu0 %v2121
      %v2123 = vpop.xlane.xlu0 %2122
      %v2124 = vsel %vm896, %v2057, 0.0
      %2125 = vadd.xlane.f32.xlu0 %v2124
      %v2126 = vpop.xlane.xlu0 %2125
      %v2127 = vsel %vm896, %v2059, 0.0
      %2128 = vadd.xlane.f32.xlu0 %v2127
      %v2129 = vpop.xlane.xlu0 %2128
      %v2130 = vsel %vm896, %v2061, 0.0
      %2131 = vadd.xlane.f32.xlu0 %v2130
      %v2132 = vpop.xlane.xlu0 %2131
      %v2133 = vsel %vm896, %v2063, 0.0
      %2134 = vadd.xlane.f32.xlu0 %v2133
      %v2135 = vpop.xlane.xlu0 %2134
      %v2136 = vsel %vm896, %v2065, 0.0
      %2137 = vadd.xlane.f32.xlu0 %v2136
      %v2138 = vpop.xlane.xlu0 %2137
      %v2139 = vsel %vm896, %v2067, 0.0
      %2140 = vadd.xlane.f32.xlu0 %v2139
      %v2141 = vpop.xlane.xlu0 %2140
      %v2142 = vsel %vm896, %v2069, 0.0
      %2143 = vadd.xlane.f32.xlu0 %v2142
      %v2144 = vpop.xlane.xlu0 %2143
      %v2145 = vsel %vm896, %v2071, 0.0
      %2146 = vadd.xlane.f32.xlu0 %v2145
      %v2147 = vpop.xlane.xlu0 %2146
      %v2148 = vsel %vm896, %v2073, 0.0
      %2149 = vadd.xlane.f32.xlu0 %v2148
      %v2150 = vpop.xlane.xlu0 %2149
      %v2151 = vsel %vm896, %v2075, 0.0
      %2152 = vadd.xlane.f32.xlu0 %v2151
      %v2153 = vpop.xlane.xlu0 %2152
      %v2154 = vsel %vm896, %v2077, 0.0
      %2155 = vadd.xlane.f32.xlu0 %v2154
      %v2156 = vpop.xlane.xlu0 %2155
      %v2157 = vsel %vm896, %v2079, 0.0
      %2158 = vadd.xlane.f32.xlu0 %v2157
      %v2159 = vpop.xlane.xlu0 %2158
      %v2160 = vsel %vm896, %v2081, 0.0
      %2161 = vadd.xlane.f32.xlu0 %v2160
      %v2162 = vpop.xlane.xlu0 %2161
      %v2163 = vsel %vm896, %v2083, 0.0
      %2164 = vadd.xlane.f32.xlu0 %v2163
      %v2165 = vpop.xlane.xlu0 %2164
      %v2166 = vsel %vm896, %v2085, 0.0
      %2167 = vadd.xlane.f32.xlu0 %v2166
      %v2168 = vpop.xlane.xlu0 %2167
      %v2169 = vsel %vm896, %v2087, 0.0
      %2170 = vadd.xlane.f32.xlu0 %v2169
      %v2171 = vpop.xlane.xlu0 %2170
      %v2172 = vsel %vm896, %v2089, 0.0
      %2173 = vadd.xlane.f32.xlu0 %v2172
      %v2174 = vpop.xlane.xlu0 %2173
      %v2175 = vsel %vm896, %v2091, 0.0
      %2176 = vadd.xlane.f32.xlu0 %v2175
      %v2177 = vpop.xlane.xlu0 %2176
      %v2178 = vsel %vm896, %v2093, 0.0
      %2179 = vadd.xlane.f32.xlu0 %v2178
      %v2180 = vpop.xlane.xlu0 %2179
      %v2181 = vsel %vm896, %v2095, 0.0
      %2182 = vadd.xlane.f32.xlu0 %v2181
      %v2183 = vpop.xlane.xlu0 %2182
      %v2184 = vsel %vm896, %v2097, 0.0
      %2185 = vadd.xlane.f32.xlu0 %v2184
      %v2186 = vpop.xlane.xlu0 %2185
      %v2187 = vsel %vm896, %v2099, 0.0
      %2188 = vadd.xlane.f32.xlu0 %v2187
      %v2189 = vpop.xlane.xlu0 %2188
      %v2190 = vsel %vm896, %v2101, 0.0
      %2191 = vadd.xlane.f32.xlu0 %v2190
      %v2192 = vpop.xlane.xlu0 %2191
      %v2193 = vsel %vm896, %v2103, 0.0
      %2194 = vadd.xlane.f32.xlu0 %v2193
      %v2195 = vpop.xlane.xlu0 %2194
      %v2196 = vsel %vm896, %v2105, 0.0
      %2197 = vadd.xlane.f32.xlu0 %v2196
      %v2198 = vpop.xlane.xlu0 %2197
      %v2199 = vsel %vm896, %v2107, 0.0
      %2200 = vadd.xlane.f32.xlu0 %v2199
      %v2201 = vpop.xlane.xlu0 %2200
      %v2202 = vsel %vm896, %v2109, 0.0
      %2203 = vadd.xlane.f32.xlu0 %v2202
      %v2204 = vpop.xlane.xlu0 %2203
      %v2205 = vsel %vm896, %v2111, 0.0
      %2206 = vadd.xlane.f32.xlu0 %v2205
      %v2207 = vpop.xlane.xlu0 %2206
      %v2208 = vrcp.pop %v2114
      %v2209 = vrcp.pop %v2117
      %v2210 = vrcp.pop %v2120
      %v2211 = vrcp.pop %v2123
      %v2212 = vrcp.pop %v2126
      %v2213 = vrcp.pop %v2129
      %v2214 = vrcp.pop %v2132
      %v2215 = vrcp.pop %v2135
      %v2216 = vrcp.pop %v2138
      %v2217 = vrcp.pop %v2141
      %v2218 = vrcp.pop %v2144
      %v2219 = vrcp.pop %v2147
      %v2220 = vrcp.pop %v2150
      %v2221 = vrcp.pop %v2153
      %v2222 = vrcp.pop %v2156
      %v2223 = vrcp.pop %v2159
      %v2224 = vrcp.pop %v2162
      %v2225 = vrcp.pop %v2165
      %v2226 = vrcp.pop %v2168
      %v2227 = vrcp.pop %v2171
      %v2228 = vrcp.pop %v2174
      %v2229 = vrcp.pop %v2177
      %v2230 = vrcp.pop %v2180
      %v2231 = vrcp.pop %v2183
      %v2232 = vrcp.pop %v2186
      %v2233 = vrcp.pop %v2189
      %v2234 = vrcp.pop %v2192
      %v2235 = vrcp.pop %v2195
      %v2236 = vrcp.pop %v2198
      %v2237 = vrcp.pop %v2201
      %v2238 = vrcp.pop %v2204
      %v2239 = vrcp.pop %v2207
      %v2240 = vmul.f32 %v2049, %v2208
      %v2241 = vmul.f32 %v2051, %v2209
      %v2242 = vmul.f32 %v2053, %v2210
      %v2243 = vmul.f32 %v2055, %v2211
      %v2244 = vmul.f32 %v2057, %v2212
      %v2245 = vmul.f32 %v2059, %v2213
      %v2246 = vmul.f32 %v2061, %v2214
      %v2247 = vmul.f32 %v2063, %v2215
      %v2248 = vmul.f32 %v2065, %v2216
      %v2249 = vmul.f32 %v2067, %v2217
      %v2250 = vmul.f32 %v2069, %v2218
      %v2251 = vmul.f32 %v2071, %v2219
      %v2252 = vmul.f32 %v2073, %v2220
      %v2253 = vmul.f32 %v2075, %v2221
      %v2254 = vmul.f32 %v2077, %v2222
      %v2255 = vmul.f32 %v2079, %v2223
      %v2256 = vmul.f32 %v2081, %v2224
      %v2257 = vmul.f32 %v2083, %v2225
      %v2258 = vmul.f32 %v2085, %v2226
      %v2259 = vmul.f32 %v2087, %v2227
      %v2260 = vmul.f32 %v2089, %v2228
      %v2261 = vmul.f32 %v2091, %v2229
      %v2262 = vmul.f32 %v2093, %v2230
      %v2263 = vmul.f32 %v2095, %v2231
      %v2264 = vmul.f32 %v2097, %v2232
      %v2265 = vmul.f32 %v2099, %v2233
      %v2266 = vmul.f32 %v2101, %v2234
      %v2267 = vmul.f32 %v2103, %v2235
      %v2268 = vmul.f32 %v2105, %v2236
      %v2269 = vmul.f32 %v2107, %v2237
      %v2270 = vmul.f32 %v2109, %v2238
      %v2271 = vmul.f32 %v2111, %v2239
      %v2272 = vpack.c.bf16 %v2241, %v2240
      %v2273 = vpack.c.bf16 %v2243, %v2242
      %v2274 = vpack.c.bf16 %v2245, %v2244
      %v2275 = vpack.c.bf16 %v2247, %v2246
      %v2276 = vpack.c.bf16 %v2249, %v2248
      %v2277 = vpack.c.bf16 %v2251, %v2250
      %v2278 = vpack.c.bf16 %v2253, %v2252
      %v2279 = vpack.c.bf16 %v2255, %v2254
      %v2280 = vpack.c.bf16 %v2257, %v2256
      %v2281 = vpack.c.bf16 %v2259, %v2258
      %v2282 = vpack.c.bf16 %v2261, %v2260
      %v2283 = vpack.c.bf16 %v2263, %v2262
      %v2284 = vpack.c.bf16 %v2265, %v2264
      %v2285 = vpack.c.bf16 %v2267, %v2266
      %v2286 = vpack.c.bf16 %v2269, %v2268
      %v2287 = vpack.c.bf16 %v2271, %v2270
      %2289 = vrot.lane.b32.xlu0 %v1675, 64
      %v2290 = vpop.permute.xlu0 %2289
      %v2292 = vsel %vm896, %v2272, 0
      %v2295 = vsel %vm896, %v2273, 0
      %v2298 = vsel %vm896, %v2274, 0
      %v2301 = vsel %vm896, %v2275, 0
      %v2304 = vsel %vm896, %v2276, 0
      %v2307 = vsel %vm896, %v2277, 0
      %v2310 = vsel %vm896, %v2278, 0
      %v2313 = vsel %vm896, %v2279, 0
      %v2316 = vsel %vm896, %v2280, 0
      %v2319 = vsel %vm896, %v2281, 0
      %v2322 = vsel %vm896, %v2282, 0
      %v2325 = vsel %vm896, %v2283, 0
      %v2328 = vsel %vm896, %v2284, 0
      %v2331 = vsel %vm896, %v2285, 0
      %v2334 = vsel %vm896, %v2286, 0
      %v2337 = vsel %vm896, %v2287, 0
      %v2340 = vsel %vm900, %v2290, 0
      %2342 = vmatprep.subr.bf16.mxu0 0
      %2343 = vmatpush1.bf16.msra.mxu0 %v2340
      %2344 = vmatprep.subr.bf16.mxu0 0
      %2345 = vmatpush1.bf16.msra.mxu0 0
      %2346 = vmatprep.subr.bf16.mxu0 0
      %2347 = vmatpush1.bf16.msra.mxu0 0
      %2348 = vmatprep.subr.bf16.mxu0 0
      %2349 = vmatpush1.bf16.msra.mxu0 0
      %2350 = vmatprep.subr.bf16.mxu0 0
      %2351 = vmatpush1.bf16.msra.mxu0 0
      %2352 = vmatprep.subr.bf16.mxu0 0
      %2353 = vmatpush1.bf16.msra.mxu0 0
      %2354 = vmatprep.subr.bf16.mxu0 0
      %2355 = vmatpush1.bf16.msra.mxu0 0
      %2356 = vmatprep.subr.bf16.mxu0 0
      %2357 = vmatpush1.bf16.msra.mxu0 0
      %2358 = vmatprep.subr.bf16.mxu0 0
      %2359 = vmatpush1.bf16.msra.mxu0 0
      %2360 = vmatprep.subr.bf16.mxu0 0
      %2361 = vmatpush1.bf16.msra.mxu0 0
      %2362 = vmatprep.subr.bf16.mxu0 0
      %2363 = vmatpush1.bf16.msra.mxu0 0
      %2364 = vmatprep.subr.bf16.mxu0 0
      %2365 = vmatpush1.bf16.msra.mxu0 0
      %2366 = vmatprep.subr.bf16.mxu0 0
      %2367 = vmatpush1.bf16.msra.mxu0 0
      %2368 = vmatprep.subr.bf16.mxu0 0
      %2369 = vmatpush1.bf16.msra.mxu0 0
      %2370 = vmatprep.subr.bf16.mxu0 0
      %2371 = vmatpush1.bf16.msra.mxu0 0
      %2372 = vmatprep.subr.bf16.mxu0 0
      %2373 = vmatpush1.bf16.msra.mxu0 0
      %2374 = vmatprep.mubr.bf16.mxu0 0
      %2375 = vmatmul.mubr.bf16.gmra.mrb[0].mxu0 %v2292
      %v2376 = vpop.f32.mrb[0].mxu0
      %v2377 = vadd.f32 0.0, %v2376
      %v2378 = vpop.f32.mrb[0].mxu0
      %v2379 = vpop.f32.mrb[0].mxu0
      %v2380 = vadd.f32 0.0, %v2379
      %v2381 = vpop.f32.mrb[0].mxu0
      %2382 = vmatprep.mubr.bf16.mxu0 0
      %2383 = vmatmul.mubr.bf16.gmra.mrb[0].mxu0 %v2295
      %v2384 = vpop.f32.mrb[0].mxu0
      %v2385 = vadd.f32 0.0, %v2384
      %v2386 = vpop.f32.mrb[0].mxu0
      %v2387 = vpop.f32.mrb[0].mxu0
      %v2388 = vadd.f32 0.0, %v2387
      %v2389 = vpop.f32.mrb[0].mxu0
      %2390 = vmatprep.mubr.bf16.mxu0 0
      %2391 = vmatmul.mubr.bf16.gmra.mrb[0].mxu0 %v2298
      %v2392 = vpop.f32.mrb[0].mxu0
      %v2393 = vadd.f32 0.0, %v2392
      %v2394 = vpop.f32.mrb[0].mxu0
      %v2395 = vpop.f32.mrb[0].mxu0
      %v2396 = vadd.f32 0.0, %v2395
      %v2397 = vpop.f32.mrb[0].mxu0
      %2398 = vmatprep.mubr.bf16.mxu0 0
      %2399 = vmatmul.mubr.bf16.gmra.mrb[0].mxu0 %v2301
      %v2400 = vpop.f32.mrb[0].mxu0
      %v2401 = vadd.f32 0.0, %v2400
      %v2402 = vpop.f32.mrb[0].mxu0
      %v2403 = vpop.f32.mrb[0].mxu0
      %v2404 = vadd.f32 0.0, %v2403
      %v2405 = vpop.f32.mrb[0].mxu0
      %2406 = vmatprep.mubr.bf16.mxu0 0
      %2407 = vmatmul.mubr.bf16.gmra.mrb[0].mxu0 %v2304
      %v2408 = vpop.f32.mrb[0].mxu0
      %v2409 = vadd.f32 0.0, %v2408
      %v2410 = vpop.f32.mrb[0].mxu0
      %v2411 = vpop.f32.mrb[0].mxu0
      %v2412 = vadd.f32 0.0, %v2411
      %v2413 = vpop.f32.mrb[0].mxu0
      %2414 = vmatprep.mubr.bf16.mxu0 0
      %2415 = vmatmul.mubr.bf16.gmra.mrb[0].mxu0 %v2307
      %v2416 = vpop.f32.mrb[0].mxu0
      %v2417 = vadd.f32 0.0, %v2416
      %v2418 = vpop.f32.mrb[0].mxu0
      %v2419 = vpop.f32.mrb[0].mxu0
      %v2420 = vadd.f32 0.0, %v2419
      %v2421 = vpop.f32.mrb[0].mxu0
      %2422 = vmatprep.mubr.bf16.mxu0 0
      %2423 = vmatmul.mubr.bf16.gmra.mrb[0].mxu0 %v2310
      %v2424 = vpop.f32.mrb[0].mxu0
      %v2425 = vadd.f32 0.0, %v2424
      %v2426 = vpop.f32.mrb[0].mxu0
      %v2427 = vpop.f32.mrb[0].mxu0
      %v2428 = vadd.f32 0.0, %v2427
      %v2429 = vpop.f32.mrb[0].mxu0
      %2430 = vmatprep.mubr.bf16.mxu0 0
      %2431 = vmatmul.mubr.bf16.gmra.mrb[0].mxu0 %v2313
      %v2432 = vpop.f32.mrb[0].mxu0
      %v2433 = vadd.f32 0.0, %v2432
      %v2434 = vpop.f32.mrb[0].mxu0
      %v2435 = vpop.f32.mrb[0].mxu0
      %v2436 = vadd.f32 0.0, %v2435
      %v2437 = vpop.f32.mrb[0].mxu0
      %2438 = vmatprep.mubr.bf16.mxu0 0
      %2439 = vmatmul.mubr.bf16.gmra.mrb[0].mxu0 %v2316
      %v2440 = vpop.f32.mrb[0].mxu0
      %v2441 = vadd.f32 0.0, %v2440
      %v2442 = vpop.f32.mrb[0].mxu0
      %v2443 = vpop.f32.mrb[0].mxu0
      %v2444 = vadd.f32 0.0, %v2443
      %v2445 = vpop.f32.mrb[0].mxu0
      %2446 = vmatprep.mubr.bf16.mxu0 0
      %2447 = vmatmul.mubr.bf16.gmra.mrb[0].mxu0 %v2319
      %v2448 = vpop.f32.mrb[0].mxu0
      %v2449 = vadd.f32 0.0, %v2448
      %v2450 = vpop.f32.mrb[0].mxu0
      %v2451 = vpop.f32.mrb[0].mxu0
      %v2452 = vadd.f32 0.0, %v2451
      %v2453 = vpop.f32.mrb[0].mxu0
      %2454 = vmatprep.mubr.bf16.mxu0 0
      %2455 = vmatmul.mubr.bf16.gmra.mrb[0].mxu0 %v2322
      %v2456 = vpop.f32.mrb[0].mxu0
      %v2457 = vadd.f32 0.0, %v2456
      %v2458 = vpop.f32.mrb[0].mxu0
      %v2459 = vpop.f32.mrb[0].mxu0
      %v2460 = vadd.f32 0.0, %v2459
      %v2461 = vpop.f32.mrb[0].mxu0
      %2462 = vmatprep.mubr.bf16.mxu0 0
      %2463 = vmatmul.mubr.bf16.gmra.mrb[0].mxu0 %v2325
      %v2464 = vpop.f32.mrb[0].mxu0
      %v2465 = vadd.f32 0.0, %v2464
      %v2466 = vpop.f32.mrb[0].mxu0
      %v2467 = vpop.f32.mrb[0].mxu0
      %v2468 = vadd.f32 0.0, %v2467
      %v2469 = vpop.f32.mrb[0].mxu0
      %2470 = vmatprep.mubr.bf16.mxu0 0
      %2471 = vmatmul.mubr.bf16.gmra.mrb[0].mxu0 %v2328
      %v2472 = vpop.f32.mrb[0].mxu0
      %v2473 = vadd.f32 0.0, %v2472
      %v2474 = vpop.f32.mrb[0].mxu0
      %v2475 = vpop.f32.mrb[0].mxu0
      %v2476 = vadd.f32 0.0, %v2475
      %v2477 = vpop.f32.mrb[0].mxu0
      %2478 = vmatprep.mubr.bf16.mxu0 0
      %2479 = vmatmul.mubr.bf16.gmra.mrb[0].mxu0 %v2331
      %v2480 = vpop.f32.mrb[0].mxu0
      %v2481 = vadd.f32 0.0, %v2480
      %v2482 = vpop.f32.mrb[0].mxu0
      %v2483 = vpop.f32.mrb[0].mxu0
      %v2484 = vadd.f32 0.0, %v2483
      %v2485 = vpop.f32.mrb[0].mxu0
      %2486 = vmatprep.mubr.bf16.mxu0 0
      %2487 = vmatmul.mubr.bf16.gmra.mrb[0].mxu0 %v2334
      %v2488 = vpop.f32.mrb[0].mxu0
      %v2489 = vadd.f32 0.0, %v2488
      %v2490 = vpop.f32.mrb[0].mxu0
      %v2491 = vpop.f32.mrb[0].mxu0
      %v2492 = vadd.f32 0.0, %v2491
      %v2493 = vpop.f32.mrb[0].mxu0
      %2494 = vmatprep.mubr.bf16.mxu0 0
      %2495 = vmatmul.mubr.bf16.gmra.mrb[0].mxu0 %v2337
      %v2496 = vpop.f32.mrb[0].mxu0
      %v2497 = vadd.f32 0.0, %v2496
      %v2498 = vpop.f32.mrb[0].mxu0
      %v2499 = vpop.f32.mrb[0].mxu0
      %v2500 = vadd.f32 0.0, %v2499
      %v2501 = vpop.f32.mrb[0].mxu0
      %2502 = vdwg.mxu0
      %v2503 = vld [vmem:[%s18] sm:$0xff]
      %v2504 = vld [vmem:[%s18 + $0x8] sm:$0xff]
      %v2505 = vld [vmem:[%s18 + $0x10] sm:$0xff]
      %v2506 = vld [vmem:[%s18 + $0x18] sm:$0xff]
      %v2507 = vld [vmem:[%s18 + $0x20] sm:$0xff]
      %v2508 = vld [vmem:[%s18 + $0x28] sm:$0xff]
      %v2509 = vld [vmem:[%s18 + $0x30] sm:$0xff]
      %v2510 = vld [vmem:[%s18 + $0x38] sm:$0xff]
      %v2511 = vpack.c.bf16 %v2380, %v2377
      %v2512 = vpack.c.bf16 %v2388, %v2385
      %v2513 = vpack.c.bf16 %v2396, %v2393
      %v2514 = vpack.c.bf16 %v2404, %v2401
      %v2515 = vpack.c.bf16 %v2412, %v2409
      %v2516 = vpack.c.bf16 %v2420, %v2417
      %v2517 = vpack.c.bf16 %v2428, %v2425
      %v2518 = vpack.c.bf16 %v2436, %v2433
      %v2519 = vpack.c.bf16 %v2444, %v2441
      %v2520 = vpack.c.bf16 %v2452, %v2449
      %v2521 = vpack.c.bf16 %v2460, %v2457
      %v2522 = vpack.c.bf16 %v2468, %v2465
      %v2523 = vpack.c.bf16 %v2476, %v2473
      %v2524 = vpack.c.bf16 %v2484, %v2481
      %v2525 = vpack.c.bf16 %v2492, %v2489
      %v2526 = vpack.c.bf16 %v2500, %v2497
      %v2527 = vpack.c.bf16 %v2504, %v2503
      %v2528 = vpack.c.bf16 %v2506, %v2505
      %v2529 = vpack.c.bf16 %v2508, %v2507
      %v2530 = vpack.c.bf16 %v2510, %v2509
      %v2532 = vsel %vm818, %v2511, 0
      %v2535 = vsel %vm818, %v2512, 0
      %v2538 = vsel %vm818, %v2513, 0
      %v2541 = vsel %vm818, %v2514, 0
      %v2544 = vsel %vm818, %v2515, 0
      %v2547 = vsel %vm818, %v2516, 0
      %v2550 = vsel %vm818, %v2517, 0
      %v2553 = vsel %vm818, %v2518, 0
      %v2556 = vsel %vm818, %v2519, 0
      %v2559 = vsel %vm818, %v2520, 0
      %v2562 = vsel %vm818, %v2521, 0
      %v2565 = vsel %vm818, %v2522, 0
      %v2568 = vsel %vm818, %v2523, 0
      %v2571 = vsel %vm818, %v2524, 0
      %v2574 = vsel %vm818, %v2525, 0
      %v2577 = vsel %vm818, %v2526, 0
      %2579 = vmatprep.subr.bf16.mxu0 0
      %2580 = vmatpush1.bf16.msra.mxu0 %v2527
      %2581 = vmatprep.subr.bf16.mxu0 0
      %2582 = vmatpush1.bf16.msra.mxu0 %v2528
      %2583 = vmatprep.subr.bf16.mxu0 0
      %2584 = vmatpush1.bf16.msra.mxu0 %v2529
      %2585 = vmatprep.subr.bf16.mxu0 0
      %2586 = vmatpush1.bf16.msra.mxu0 %v2530
      %2587 = vmatprep.subr.bf16.mxu0 0
      %2588 = vmatpush1.bf16.msra.mxu0 0
      %2589 = vmatprep.subr.bf16.mxu0 0
      %2590 = vmatpush1.bf16.msra.mxu0 0
      %2591 = vmatprep.subr.bf16.mxu0 0
      %2592 = vmatpush1.bf16.msra.mxu0 0
      %2593 = vmatprep.subr.bf16.mxu0 0
      %2594 = vmatpush1.bf16.msra.mxu0 0
      %2595 = vmatprep.subr.bf16.mxu0 0
      %2596 = vmatpush1.bf16.msra.mxu0 0
      %2597 = vmatprep.subr.bf16.mxu0 0
      %2598 = vmatpush1.bf16.msra.mxu0 0
      %2599 = vmatprep.subr.bf16.mxu0 0
      %2600 = vmatpush1.bf16.msra.mxu0 0
      %2601 = vmatprep.subr.bf16.mxu0 0
      %2602 = vmatpush1.bf16.msra.mxu0 0
      %2603 = vmatprep.subr.bf16.mxu0 0
      %2604 = vmatpush1.bf16.msra.mxu0 0
      %2605 = vmatprep.subr.bf16.mxu0 0
      %2606 = vmatpush1.bf16.msra.mxu0 0
      %2607 = vmatprep.subr.bf16.mxu0 0
      %2608 = vmatpush1.bf16.msra.mxu0 0
      %2609 = vmatprep.subr.bf16.mxu0 0
      %2610 = vmatpush1.bf16.msra.mxu0 0
      %2611 = vmatprep.mubr.bf16.mxu0 0
      %2612 = vmatmul.mubr.bf16.gmra.mrb[0].mxu0 %v2532
      %v2613 = vpop.f32.mrb[0].mxu0
      %v2614 = vadd.f32 0.0, %v2613
      %v2615 = vpop.f32.mrb[0].mxu0
      %v2616 = vpop.f32.mrb[0].mxu0
      %v2617 = vadd.f32 0.0, %v2616
      %v2618 = vpop.f32.mrb[0].mxu0
      %2619 = vmatprep.mubr.bf16.mxu0 0
      %2620 = vmatmul.mubr.bf16.gmra.mrb[0].mxu0 %v2535
      %v2621 = vpop.f32.mrb[0].mxu0
      %v2622 = vadd.f32 0.0, %v2621
      %v2623 = vpop.f32.mrb[0].mxu0
      %v2624 = vpop.f32.mrb[0].mxu0
      %v2625 = vadd.f32 0.0, %v2624
      %v2626 = vpop.f32.mrb[0].mxu0
      %2627 = vmatprep.mubr.bf16.mxu0 0
      %2628 = vmatmul.mubr.bf16.gmra.mrb[0].mxu0 %v2538
      %v2629 = vpop.f32.mrb[0].mxu0
      %v2630 = vadd.f32 0.0, %v2629
      %v2631 = vpop.f32.mrb[0].mxu0
      %v2632 = vpop.f32.mrb[0].mxu0
      %v2633 = vadd.f32 0.0, %v2632
      %v2634 = vpop.f32.mrb[0].mxu0
      %2635 = vmatprep.mubr.bf16.mxu0 0
      %2636 = vmatmul.mubr.bf16.gmra.mrb[0].mxu0 %v2541
      %v2637 = vpop.f32.mrb[0].mxu0
      %v2638 = vadd.f32 0.0, %v2637
      %v2639 = vpop.f32.mrb[0].mxu0
      %v2640 = vpop.f32.mrb[0].mxu0
      %v2641 = vadd.f32 0.0, %v2640
      %v2642 = vpop.f32.mrb[0].mxu0
      %2643 = vmatprep.mubr.bf16.mxu0 0
      %2644 = vmatmul.mubr.bf16.gmra.mrb[0].mxu0 %v2544
      %v2645 = vpop.f32.mrb[0].mxu0
      %v2646 = vadd.f32 0.0, %v2645
      %v2647 = vpop.f32.mrb[0].mxu0
      %v2648 = vpop.f32.mrb[0].mxu0
      %v2649 = vadd.f32 0.0, %v2648
      %v2650 = vpop.f32.mrb[0].mxu0
      %2651 = vmatprep.mubr.bf16.mxu0 0
      %2652 = vmatmul.mubr.bf16.gmra.mrb[0].mxu0 %v2547
      %v2653 = vpop.f32.mrb[0].mxu0
      %v2654 = vadd.f32 0.0, %v2653
      %v2655 = vpop.f32.mrb[0].mxu0
      %v2656 = vpop.f32.mrb[0].mxu0
      %v2657 = vadd.f32 0.0, %v2656
      %v2658 = vpop.f32.mrb[0].mxu0
      %2659 = vmatprep.mubr.bf16.mxu0 0
      %2660 = vmatmul.mubr.bf16.gmra.mrb[0].mxu0 %v2550
      %v2661 = vpop.f32.mrb[0].mxu0
      %v2662 = vadd.f32 0.0, %v2661
      %v2663 = vpop.f32.mrb[0].mxu0
      %v2664 = vpop.f32.mrb[0].mxu0
      %v2665 = vadd.f32 0.0, %v2664
      %v2666 = vpop.f32.mrb[0].mxu0
      %2667 = vmatprep.mubr.bf16.mxu0 0
      %2668 = vmatmul.mubr.bf16.gmra.mrb[0].mxu0 %v2553
      %v2669 = vpop.f32.mrb[0].mxu0
      %v2670 = vadd.f32 0.0, %v2669
      %v2671 = vpop.f32.mrb[0].mxu0
      %v2672 = vpop.f32.mrb[0].mxu0
      %v2673 = vadd.f32 0.0, %v2672
      %v2674 = vpop.f32.mrb[0].mxu0
      %2675 = vmatprep.mubr.bf16.mxu0 0
      %2676 = vmatmul.mubr.bf16.gmra.mrb[0].mxu0 %v2556
      %v2677 = vpop.f32.mrb[0].mxu0
      %v2678 = vadd.f32 0.0, %v2677
      %v2679 = vpop.f32.mrb[0].mxu0
      %v2680 = vpop.f32.mrb[0].mxu0
      %v2681 = vadd.f32 0.0, %v2680
      %v2682 = vpop.f32.mrb[0].mxu0
      %2683 = vmatprep.mubr.bf16.mxu0 0
      %2684 = vmatmul.mubr.bf16.gmra.mrb[0].mxu0 %v2559
      %v2685 = vpop.f32.mrb[0].mxu0
      %v2686 = vadd.f32 0.0, %v2685
      %v2687 = vpop.f32.mrb[0].mxu0
      %v2688 = vpop.f32.mrb[0].mxu0
      %v2689 = vadd.f32 0.0, %v2688
      %v2690 = vpop.f32.mrb[0].mxu0
      %2691 = vmatprep.mubr.bf16.mxu0 0
      %2692 = vmatmul.mubr.bf16.gmra.mrb[0].mxu0 %v2562
      %v2693 = vpop.f32.mrb[0].mxu0
      %v2694 = vadd.f32 0.0, %v2693
      %v2695 = vpop.f32.mrb[0].mxu0
      %v2696 = vpop.f32.mrb[0].mxu0
      %v2697 = vadd.f32 0.0, %v2696
      %v2698 = vpop.f32.mrb[0].mxu0
      %2699 = vmatprep.mubr.bf16.mxu0 0
      %2700 = vmatmul.mubr.bf16.gmra.mrb[0].mxu0 %v2565
      %v2701 = vpop.f32.mrb[0].mxu0
      %v2702 = vadd.f32 0.0, %v2701
      %v2703 = vpop.f32.mrb[0].mxu0
      %v2704 = vpop.f32.mrb[0].mxu0
      %v2705 = vadd.f32 0.0, %v2704
      %v2706 = vpop.f32.mrb[0].mxu0
      %2707 = vmatprep.mubr.bf16.mxu0 0
      %2708 = vmatmul.mubr.bf16.gmra.mrb[0].mxu0 %v2568
      %v2709 = vpop.f32.mrb[0].mxu0
      %v2710 = vadd.f32 0.0, %v2709
      %v2711 = vpop.f32.mrb[0].mxu0
      %v2712 = vpop.f32.mrb[0].mxu0
      %v2713 = vadd.f32 0.0, %v2712
      %v2714 = vpop.f32.mrb[0].mxu0
      %2715 = vmatprep.mubr.bf16.mxu0 0
      %2716 = vmatmul.mubr.bf16.gmra.mrb[0].mxu0 %v2571
      %v2717 = vpop.f32.mrb[0].mxu0
      %v2718 = vadd.f32 0.0, %v2717
      %v2719 = vpop.f32.mrb[0].mxu0
      %v2720 = vpop.f32.mrb[0].mxu0
      %v2721 = vadd.f32 0.0, %v2720
      %v2722 = vpop.f32.mrb[0].mxu0
      %2723 = vmatprep.mubr.bf16.mxu0 0
      %2724 = vmatmul.mubr.bf16.gmra.mrb[0].mxu0 %v2574
      %v2725 = vpop.f32.mrb[0].mxu0
      %v2726 = vadd.f32 0.0, %v2725
      %v2727 = vpop.f32.mrb[0].mxu0
      %v2728 = vpop.f32.mrb[0].mxu0
      %v2729 = vadd.f32 0.0, %v2728
      %v2730 = vpop.f32.mrb[0].mxu0
      %2731 = vmatprep.mubr.bf16.mxu0 0
      %2732 = vmatmul.mubr.bf16.gmra.mrb[0].mxu0 %v2577
      %v2733 = vpop.f32.mrb[0].mxu0
      %v2734 = vadd.f32 0.0, %v2733
      %v2735 = vpop.f32.mrb[0].mxu0
      %v2736 = vpop.f32.mrb[0].mxu0
      %v2737 = vadd.f32 0.0, %v2736
      %v2738 = vpop.f32.mrb[0].mxu0
      %2739 = vdwg.mxu0
      %v2740 = vadd.f32 %v1334, %v2614
      %v2741 = vadd.f32 %v1335, %v2617
      %v2742 = vadd.f32 %v1336, %v2622
      %v2743 = vadd.f32 %v1337, %v2625
      %v2744 = vadd.f32 %v1338, %v2630
      %v2745 = vadd.f32 %v1339, %v2633
      %v2746 = vadd.f32 %v1340, %v2638
      %v2747 = vadd.f32 %v1341, %v2641
      %v2748 = vadd.f32 %v1342, %v2646
      %v2749 = vadd.f32 %v1343, %v2649
      %v2750 = vadd.f32 %v1344, %v2654
      %v2751 = vadd.f32 %v1345, %v2657
      %v2752 = vadd.f32 %v1346, %v2662
      %v2753 = vadd.f32 %v1347, %v2665
      %v2754 = vadd.f32 %v1348, %v2670
      %v2755 = vadd.f32 %v1349, %v2673
      %v2756 = vadd.f32 %v1350, %v2678
      %v2757 = vadd.f32 %v1351, %v2681
      %v2758 = vadd.f32 %v1352, %v2686
      %v2759 = vadd.f32 %v1353, %v2689
      %v2760 = vadd.f32 %v1354, %v2694
      %v2761 = vadd.f32 %v1355, %v2697
      %v2762 = vadd.f32 %v1356, %v2702
      %v2763 = vadd.f32 %v1357, %v2705
      %v2764 = vadd.f32 %v1358, %v2710
      %v2765 = vadd.f32 %v1359, %v2713
      %v2766 = vadd.f32 %v1360, %v2718
      %v2767 = vadd.f32 %v1361, %v2721
      %v2768 = vadd.f32 %v1362, %v2726
      %v2769 = vadd.f32 %v1363, %v2729
      %v2770 = vadd.f32 %v1364, %v2734
      %v2771 = vadd.f32 %v1365, %v2737
      %v2772 = vld [vmem:[%s19] sm:$0xff]
      %v2773 = vld [vmem:[%s19 + $0x8] sm:$0xff]
      %v2774 = vld [vmem:[%s19 + $0x10] sm:$0xff]
      %v2775 = vld [vmem:[%s19 + $0x18] sm:$0xff]
      %v2776 = vld [vmem:[%s19 + $0x20] sm:$0xff]
      %v2777 = vld [vmem:[%s19 + $0x28] sm:$0xff]
      %v2778 = vld [vmem:[%s19 + $0x30] sm:$0xff]
      %v2779 = vld [vmem:[%s19 + $0x38] sm:$0xff]
      %v2780 = vpack.c.bf16 %v2741, %v2740
      %v2781 = vpack.c.bf16 %v2743, %v2742
      %v2782 = vpack.c.bf16 %v2745, %v2744
      %v2783 = vpack.c.bf16 %v2747, %v2746
      %v2784 = vpack.c.bf16 %v2749, %v2748
      %v2785 = vpack.c.bf16 %v2751, %v2750
      %v2786 = vpack.c.bf16 %v2753, %v2752
      %v2787 = vpack.c.bf16 %v2755, %v2754
      %v2788 = vpack.c.bf16 %v2757, %v2756
      %v2789 = vpack.c.bf16 %v2759, %v2758
      %v2790 = vpack.c.bf16 %v2761, %v2760
      %v2791 = vpack.c.bf16 %v2763, %v2762
      %v2792 = vpack.c.bf16 %v2765, %v2764
      %v2793 = vpack.c.bf16 %v2767, %v2766
      %v2794 = vpack.c.bf16 %v2769, %v2768
      %v2795 = vpack.c.bf16 %v2771, %v2770
      %v2796 = vpack.c.bf16 %v2773, %v2772
      %v2797 = vpack.c.bf16 %v2775, %v2774
      %v2798 = vpack.c.bf16 %v2777, %v2776
      %v2799 = vpack.c.bf16 %v2779, %v2778
      %v2800 = vld [vmem:[%s20] sm:$0x1]
      %v2802 = vlaneseq
      %v2803 = vshrl.u32 %v2802, 7
      %v2804 = vsub.s32 0, %v2803
      %v2805 = vrot.slane %v2800, %v2804
      %v2808 = vsel %vm818, %v2780, 0
      %v2811 = vsel %vm818, %v2781, 0
      %v2814 = vsel %vm818, %v2782, 0
      %v2817 = vsel %vm818, %v2783, 0
      %v2820 = vsel %vm818, %v2784, 0
      %v2823 = vsel %vm818, %v2785, 0
      %v2826 = vsel %vm818, %v2786, 0
      %v2829 = vsel %vm818, %v2787, 0
      %v2832 = vsel %vm818, %v2788, 0
      %v2835 = vsel %vm818, %v2789, 0
      %v2838 = vsel %vm818, %v2790, 0
      %v2841 = vsel %vm818, %v2791, 0
      %v2844 = vsel %vm818, %v2792, 0
      %v2847 = vsel %vm818, %v2793, 0
      %v2850 = vsel %vm818, %v2794, 0
      %v2853 = vsel %vm818, %v2795, 0
      %2855 = vmatprep.subr.bf16.mxu0 0
      %2856 = vmatpush1.bf16.msra.mxu0 %v2796
      %2857 = vmatprep.subr.bf16.mxu0 0
      %2858 = vmatpush1.bf16.msra.mxu0 %v2797
      %2859 = vmatprep.subr.bf16.mxu0 0
      %2860 = vmatpush1.bf16.msra.mxu0 %v2798
      %2861 = vmatprep.subr.bf16.mxu0 0
      %2862 = vmatpush1.bf16.msra.mxu0 %v2799
      %2863 = vmatprep.subr.bf16.mxu0 0
      %2864 = vmatpush1.bf16.msra.mxu0 0
      %2865 = vmatprep.subr.bf16.mxu0 0
      %2866 = vmatpush1.bf16.msra.mxu0 0
      %2867 = vmatprep.subr.bf16.mxu0 0
      %2868 = vmatpush1.bf16.msra.mxu0 0
      %2869 = vmatprep.subr.bf16.mxu0 0
      %2870 = vmatpush1.bf16.msra.mxu0 0
      %2871 = vmatprep.subr.bf16.mxu0 0
      %2872 = vmatpush1.bf16.msra.mxu0 0
      %2873 = vmatprep.subr.bf16.mxu0 0
      %2874 = vmatpush1.bf16.msra.mxu0 0
      %2875 = vmatprep.subr.bf16.mxu0 0
      %2876 = vmatpush1.bf16.msra.mxu0 0
      %2877 = vmatprep.subr.bf16.mxu0 0
      %2878 = vmatpush1.bf16.msra.mxu0 0
      %2879 = vmatprep.subr.bf16.mxu0 0
      %2880 = vmatpush1.bf16.msra.mxu0 0
      %2881 = vmatprep.subr.bf16.mxu0 0
      %2882 = vmatpush1.bf16.msra.mxu0 0
      %2883 = vmatprep.subr.bf16.mxu0 0
      %2884 = vmatpush1.bf16.msra.mxu0 0
      %2885 = vmatprep.subr.bf16.mxu0 0
      %2886 = vmatpush1.bf16.msra.mxu0 0
      %2887 = vmatprep.mubr.bf16.mxu0 0
      %2888 = vmatmul.mubr.bf16.gmra.mrb[0].mxu0 %v2808
      %v2889 = vpop.f32.mrb[0].mxu0
      %v2890 = vadd.f32 %v2805, %v2889
      %v2891 = vpop.f32.mrb[0].mxu0
      %v2892 = vpop.f32.mrb[0].mxu0
      %v2893 = vadd.f32 %v2805, %v2892
      %v2894 = vpop.f32.mrb[0].mxu0
      %2895 = vmatprep.mubr.bf16.mxu0 0
      %2896 = vmatmul.mubr.bf16.gmra.mrb[0].mxu0 %v2811
      %v2897 = vpop.f32.mrb[0].mxu0
      %v2898 = vadd.f32 %v2805, %v2897
      %v2899 = vpop.f32.mrb[0].mxu0
      %v2900 = vpop.f32.mrb[0].mxu0
      %v2901 = vadd.f32 %v2805, %v2900
      %v2902 = vpop.f32.mrb[0].mxu0
      %2903 = vmatprep.mubr.bf16.mxu0 0
      %2904 = vmatmul.mubr.bf16.gmra.mrb[0].mxu0 %v2814
      %v2905 = vpop.f32.mrb[0].mxu0
      %v2906 = vadd.f32 %v2805, %v2905
      %v2907 = vpop.f32.mrb[0].mxu0
      %v2908 = vpop.f32.mrb[0].mxu0
      %v2909 = vadd.f32 %v2805, %v2908
      %v2910 = vpop.f32.mrb[0].mxu0
      %2911 = vmatprep.mubr.bf16.mxu0 0
      %2912 = vmatmul.mubr.bf16.gmra.mrb[0].mxu0 %v2817
      %v2913 = vpop.f32.mrb[0].mxu0
      %v2914 = vadd.f32 %v2805, %v2913
      %v2915 = vpop.f32.mrb[0].mxu0
      %v2916 = vpop.f32.mrb[0].mxu0
      %v2917 = vadd.f32 %v2805, %v2916
      %v2918 = vpop.f32.mrb[0].mxu0
      %2919 = vmatprep.mubr.bf16.mxu0 0
      %2920 = vmatmul.mubr.bf16.gmra.mrb[0].mxu0 %v2820
      %v2921 = vpop.f32.mrb[0].mxu0
      %v2922 = vadd.f32 %v2805, %v2921
      %v2923 = vpop.f32.mrb[0].mxu0
      %v2924 = vpop.f32.mrb[0].mxu0
      %v2925 = vadd.f32 %v2805, %v2924
      %v2926 = vpop.f32.mrb[0].mxu0
      %2927 = vmatprep.mubr.bf16.mxu0 0
      %2928 = vmatmul.mubr.bf16.gmra.mrb[0].mxu0 %v2823
      %v2929 = vpop.f32.mrb[0].mxu0
      %v2930 = vadd.f32 %v2805, %v2929
      %v2931 = vpop.f32.mrb[0].mxu0
      %v2932 = vpop.f32.mrb[0].mxu0
      %v2933 = vadd.f32 %v2805, %v2932
      %v2934 = vpop.f32.mrb[0].mxu0
      %2935 = vmatprep.mubr.bf16.mxu0 0
      %2936 = vmatmul.mubr.bf16.gmra.mrb[0].mxu0 %v2826
      %v2937 = vpop.f32.mrb[0].mxu0
      %v2938 = vadd.f32 %v2805, %v2937
      %v2939 = vpop.f32.mrb[0].mxu0
      %v2940 = vpop.f32.mrb[0].mxu0
      %v2941 = vadd.f32 %v2805, %v2940
      %v2942 = vpop.f32.mrb[0].mxu0
      %2943 = vmatprep.mubr.bf16.mxu0 0
      %2944 = vmatmul.mubr.bf16.gmra.mrb[0].mxu0 %v2829
      %v2945 = vpop.f32.mrb[0].mxu0
      %v2946 = vadd.f32 %v2805, %v2945
      %v2947 = vpop.f32.mrb[0].mxu0
      %v2948 = vpop.f32.mrb[0].mxu0
      %v2949 = vadd.f32 %v2805, %v2948
      %v2950 = vpop.f32.mrb[0].mxu0
      %2951 = vmatprep.mubr.bf16.mxu0 0
      %2952 = vmatmul.mubr.bf16.gmra.mrb[0].mxu0 %v2832
      %v2953 = vpop.f32.mrb[0].mxu0
      %v2954 = vadd.f32 %v2805, %v2953
      %v2955 = vpop.f32.mrb[0].mxu0
      %v2956 = vpop.f32.mrb[0].mxu0
      %v2957 = vadd.f32 %v2805, %v2956
      %v2958 = vpop.f32.mrb[0].mxu0
      %2959 = vmatprep.mubr.bf16.mxu0 0
      %2960 = vmatmul.mubr.bf16.gmra.mrb[0].mxu0 %v2835
      %v2961 = vpop.f32.mrb[0].mxu0
      %v2962 = vadd.f32 %v2805, %v2961
      %v2963 = vpop.f32.mrb[0].mxu0
      %v2964 = vpop.f32.mrb[0].mxu0
      %v2965 = vadd.f32 %v2805, %v2964
      %v2966 = vpop.f32.mrb[0].mxu0
      %2967 = vmatprep.mubr.bf16.mxu0 0
      %2968 = vmatmul.mubr.bf16.gmra.mrb[0].mxu0 %v2838
      %v2969 = vpop.f32.mrb[0].mxu0
      %v2970 = vadd.f32 %v2805, %v2969
      %v2971 = vpop.f32.mrb[0].mxu0
      %v2972 = vpop.f32.mrb[0].mxu0
      %v2973 = vadd.f32 %v2805, %v2972
      %v2974 = vpop.f32.mrb[0].mxu0
      %2975 = vmatprep.mubr.bf16.mxu0 0
      %2976 = vmatmul.mubr.bf16.gmra.mrb[0].mxu0 %v2841
      %v2977 = vpop.f32.mrb[0].mxu0
      %v2978 = vadd.f32 %v2805, %v2977
      %v2979 = vpop.f32.mrb[0].mxu0
      %v2980 = vpop.f32.mrb[0].mxu0
      %v2981 = vadd.f32 %v2805, %v2980
      %v2982 = vpop.f32.mrb[0].mxu0
      %2983 = vmatprep.mubr.bf16.mxu0 0
      %2984 = vmatmul.mubr.bf16.gmra.mrb[0].mxu0 %v2844
      %v2985 = vpop.f32.mrb[0].mxu0
      %v2986 = vadd.f32 %v2805, %v2985
      %v2987 = vpop.f32.mrb[0].mxu0
      %v2988 = vpop.f32.mrb[0].mxu0
      %v2989 = vadd.f32 %v2805, %v2988
      %v2990 = vpop.f32.mrb[0].mxu0
      %2991 = vmatprep.mubr.bf16.mxu0 0
      %2992 = vmatmul.mubr.bf16.gmra.mrb[0].mxu0 %v2847
      %v2993 = vpop.f32.mrb[0].mxu0
      %v2994 = vadd.f32 %v2805, %v2993
      %v2995 = vpop.f32.mrb[0].mxu0
      %v2996 = vpop.f32.mrb[0].mxu0
      %v2997 = vadd.f32 %v2805, %v2996
      %v2998 = vpop.f32.mrb[0].mxu0
      %2999 = vmatprep.mubr.bf16.mxu0 0
      %3000 = vmatmul.mubr.bf16.gmra.mrb[0].mxu0 %v2850
      %v3001 = vpop.f32.mrb[0].mxu0
      %v3002 = vadd.f32 %v2805, %v3001
      %v3003 = vpop.f32.mrb[0].mxu0
      %v3004 = vpop.f32.mrb[0].mxu0
      %v3005 = vadd.f32 %v2805, %v3004
      %v3006 = vpop.f32.mrb[0].mxu0
      %3007 = vmatprep.mubr.bf16.mxu0 0
      %3008 = vmatmul.mubr.bf16.gmra.mrb[0].mxu0 %v2853
      %v3009 = vpop.f32.mrb[0].mxu0
      %v3010 = vadd.f32 %v2805, %v3009
      %v3011 = vpop.f32.mrb[0].mxu0
      %v3012 = vpop.f32.mrb[0].mxu0
      %v3013 = vadd.f32 %v2805, %v3012
      %v3014 = vpop.f32.mrb[0].mxu0
      %3015 = vdwg.mxu0
      %vm3016 = vcmask 31744
      %3017 = vst.msk [vmem:[%s754] sm:$0xff] %vm3016, %v2890
      %3018 = vst.msk [vmem:[%s754 + $0x8] sm:$0xff] %vm3016, %v2893
      %3019 = vst.msk [vmem:[%s754 + $0x10] sm:$0xff] %vm3016, %v2898
      %3020 = vst.msk [vmem:[%s754 + $0x18] sm:$0xff] %vm3016, %v2901
      %3021 = vst.msk [vmem:[%s754 + $0x20] sm:$0xff] %vm3016, %v2906
      %3022 = vst.msk [vmem:[%s754 + $0x28] sm:$0xff] %vm3016, %v2909
      %3023 = vst.msk [vmem:[%s754 + $0x30] sm:$0xff] %vm3016, %v2914
      %3024 = vst.msk [vmem:[%s754 + $0x38] sm:$0xff] %vm3016, %v2917
      %3025 = vst.msk [vmem:[%s754 + $0x40] sm:$0xff] %vm3016, %v2922
      %3026 = vst.msk [vmem:[%s754 + $0x48] sm:$0xff] %vm3016, %v2925
      %3027 = vst.msk [vmem:[%s754 + $0x50] sm:$0xff] %vm3016, %v2930
      %3028 = vst.msk [vmem:[%s754 + $0x58] sm:$0xff] %vm3016, %v2933
      %3029 = vst.msk [vmem:[%s754 + $0x60] sm:$0xff] %vm3016, %v2938
      %3030 = vst.msk [vmem:[%s754 + $0x68] sm:$0xff] %vm3016, %v2941
      %3031 = vst.msk [vmem:[%s754 + $0x70] sm:$0xff] %vm3016, %v2946
      %3032 = vst.msk [vmem:[%s754 + $0x78] sm:$0xff] %vm3016, %v2949
      %3033 = vst.msk [vmem:[%s754 + $0x80] sm:$0xff] %vm3016, %v2954
      %3034 = vst.msk [vmem:[%s754 + $0x88] sm:$0xff] %vm3016, %v2957
      %3035 = vst.msk [vmem:[%s754 + $0x90] sm:$0xff] %vm3016, %v2962
      %3036 = vst.msk [vmem:[%s754 + $0x98] sm:$0xff] %vm3016, %v2965
      %3037 = vst.msk [vmem:[%s754 + $0xa0] sm:$0xff] %vm3016, %v2970
      %3038 = vst.msk [vmem:[%s754 + $0xa8] sm:$0xff] %vm3016, %v2973
      %3039 = vst.msk [vmem:[%s754 + $0xb0] sm:$0xff] %vm3016, %v2978
      %3040 = vst.msk [vmem:[%s754 + $0xb8] sm:$0xff] %vm3016, %v2981
      %3041 = vst.msk [vmem:[%s754 + $0xc0] sm:$0xff] %vm3016, %v2986
      %3042 = vst.msk [vmem:[%s754 + $0xc8] sm:$0xff] %vm3016, %v2989
      %3043 = vst.msk [vmem:[%s754 + $0xd0] sm:$0xff] %vm3016, %v2994
      %3044 = vst.msk [vmem:[%s754 + $0xd8] sm:$0xff] %vm3016, %v2997
      %3045 = vst.msk [vmem:[%s754 + $0xe0] sm:$0xff] %vm3016, %v3002
      %3046 = vst.msk [vmem:[%s754 + $0xe8] sm:$0xff] %vm3016, %v3005
      %3047 = vst.msk [vmem:[%s754 + $0xf0] sm:$0xff] %vm3016, %v3010
      %3048 = vst.msk [vmem:[%s754 + $0xf8] sm:$0xff] %vm3016, %v3013
      %v3049 = vld [vmem:[%s749] sm:$0xff]
      %v3050 = vld [vmem:[%s749 + $0x8] sm:$0xff]
      %v3051 = vld [vmem:[%s749 + $0x10] sm:$0xff]
      %v3052 = vld [vmem:[%s749 + $0x18] sm:$0xff]
      %v3053 = vld [vmem:[%s749 + $0x20] sm:$0xff]
      %v3054 = vld [vmem:[%s749 + $0x28] sm:$0xff]
      %v3055 = vld [vmem:[%s749 + $0x30] sm:$0xff]
      %v3056 = vld [vmem:[%s749 + $0x38] sm:$0xff]
      %v3057 = vld [vmem:[%s749 + $0x40] sm:$0xff]
      %v3058 = vld [vmem:[%s749 + $0x48] sm:$0xff]
      %v3059 = vld [vmem:[%s749 + $0x50] sm:$0xff]
      %v3060 = vld [vmem:[%s749 + $0x58] sm:$0xff]
      %v3061 = vld [vmem:[%s749 + $0x60] sm:$0xff]
      %v3062 = vld [vmem:[%s749 + $0x68] sm:$0xff]
      %v3063 = vld [vmem:[%s749 + $0x70] sm:$0xff]
      %v3064 = vld [vmem:[%s749 + $0x78] sm:$0xff]
      %v3065 = vld [vmem:[%s749 + $0x80] sm:$0xff]
      %v3066 = vld [vmem:[%s749 + $0x88] sm:$0xff]
      %v3067 = vld [vmem:[%s749 + $0x90] sm:$0xff]
      %v3068 = vld [vmem:[%s749 + $0x98] sm:$0xff]
      %v3069 = vld [vmem:[%s749 + $0xa0] sm:$0xff]
      %v3070 = vld [vmem:[%s749 + $0xa8] sm:$0xff]
      %v3071 = vld [vmem:[%s749 + $0xb0] sm:$0xff]
      %v3072 = vld [vmem:[%s749 + $0xb8] sm:$0xff]
      %v3073 = vld [vmem:[%s749 + $0xc0] sm:$0xff]
      %v3074 = vld [vmem:[%s749 + $0xc8] sm:$0xff]
      %v3075 = vld [vmem:[%s749 + $0xd0] sm:$0xff]
      %v3076 = vld [vmem:[%s749 + $0xd8] sm:$0xff]
      %v3077 = vld [vmem:[%s749 + $0xe0] sm:$0xff]
      %v3078 = vld [vmem:[%s749 + $0xe8] sm:$0xff]
      %v3079 = vld [vmem:[%s749 + $0xf0] sm:$0xff]
      %v3080 = vld [vmem:[%s749 + $0xf8] sm:$0xff]
      %v3081 = vsub.f32 %v2890, %v3049
      %v3082 = vsub.f32 %v2893, %v3050
      %v3083 = vsub.f32 %v2898, %v3051
      %v3084 = vsub.f32 %v2901, %v3052
      %v3085 = vsub.f32 %v2906, %v3053
      %v3086 = vsub.f32 %v2909, %v3054
      %v3087 = vsub.f32 %v2914, %v3055
      %v3088 = vsub.f32 %v2917, %v3056
      %v3089 = vsub.f32 %v2922, %v3057
      %v3090 = vsub.f32 %v2925, %v3058
      %v3091 = vsub.f32 %v2930, %v3059
      %v3092 = vsub.f32 %v2933, %v3060
      %v3093 = vsub.f32 %v2938, %v3061
      %v3094 = vsub.f32 %v2941, %v3062
      %v3095 = vsub.f32 %v2946, %v3063
      %v3096 = vsub.f32 %v2949, %v3064
      %v3097 = vsub.f32 %v2954, %v3065
      %v3098 = vsub.f32 %v2957, %v3066
      %v3099 = vsub.f32 %v2962, %v3067
      %v3100 = vsub.f32 %v2965, %v3068
      %v3101 = vsub.f32 %v2970, %v3069
      %v3102 = vsub.f32 %v2973, %v3070
      %v3103 = vsub.f32 %v2978, %v3071
      %v3104 = vsub.f32 %v2981, %v3072
      %v3105 = vsub.f32 %v2986, %v3073
      %v3106 = vsub.f32 %v2989, %v3074
      %v3107 = vsub.f32 %v2994, %v3075
      %v3108 = vsub.f32 %v2997, %v3076
      %v3109 = vsub.f32 %v3002, %v3077
      %v3110 = vsub.f32 %v3005, %v3078
      %v3111 = vsub.f32 %v3010, %v3079
      %v3112 = vsub.f32 %v3013, %v3080
      %v3113 = vmul.f32 %v3081, %v3081
      %v3114 = vmul.f32 %v3082, %v3082
      %v3115 = vmul.f32 %v3083, %v3083
      %v3116 = vmul.f32 %v3084, %v3084
      %v3117 = vmul.f32 %v3085, %v3085
      %v3118 = vmul.f32 %v3086, %v3086
      %v3119 = vmul.f32 %v3087, %v3087
      %v3120 = vmul.f32 %v3088, %v3088
      %v3121 = vmul.f32 %v3089, %v3089
      %v3122 = vmul.f32 %v3090, %v3090
      %v3123 = vmul.f32 %v3091, %v3091
      %v3124 = vmul.f32 %v3092, %v3092
      %v3125 = vmul.f32 %v3093, %v3093
      %v3126 = vmul.f32 %v3094, %v3094
      %v3127 = vmul.f32 %v3095, %v3095
      %v3128 = vmul.f32 %v3096, %v3096
      %v3129 = vmul.f32 %v3097, %v3097
      %v3130 = vmul.f32 %v3098, %v3098
      %v3131 = vmul.f32 %v3099, %v3099
      %v3132 = vmul.f32 %v3100, %v3100
      %v3133 = vmul.f32 %v3101, %v3101
      %v3134 = vmul.f32 %v3102, %v3102
      %v3135 = vmul.f32 %v3103, %v3103
      %v3136 = vmul.f32 %v3104, %v3104
      %v3137 = vmul.f32 %v3105, %v3105
      %v3138 = vmul.f32 %v3106, %v3106
      %v3139 = vmul.f32 %v3107, %v3107
      %v3140 = vmul.f32 %v3108, %v3108
      %v3141 = vmul.f32 %v3109, %v3109
      %v3142 = vmul.f32 %v3110, %v3110
      %v3143 = vmul.f32 %v3111, %v3111
      %v3144 = vmul.f32 %v3112, %v3112
      %v3145 = vsel %vm3016, %v3113, 0.0
      %v3146 = vsel %vm3016, %v3114, 0.0
      %v3147 = vadd.f32 %v3145, %v3146
      %v3148 = vsel %vm3016, %v3115, 0.0
      %v3149 = vadd.f32 %v3147, %v3148
      %v3150 = vsel %vm3016, %v3116, 0.0
      %v3151 = vadd.f32 %v3149, %v3150
      %v3152 = vsel %vm3016, %v3117, 0.0
      %v3153 = vadd.f32 %v3151, %v3152
      %v3154 = vsel %vm3016, %v3118, 0.0
      %v3155 = vadd.f32 %v3153, %v3154
      %v3156 = vsel %vm3016, %v3119, 0.0
      %v3157 = vadd.f32 %v3155, %v3156
      %v3158 = vsel %vm3016, %v3120, 0.0
      %v3159 = vadd.f32 %v3157, %v3158
      %v3160 = vsel %vm3016, %v3121, 0.0
      %v3161 = vadd.f32 %v3159, %v3160
      %v3162 = vsel %vm3016, %v3122, 0.0
      %v3163 = vadd.f32 %v3161, %v3162
      %v3164 = vsel %vm3016, %v3123, 0.0
      %v3165 = vadd.f32 %v3163, %v3164
      %v3166 = vsel %vm3016, %v3124, 0.0
      %v3167 = vadd.f32 %v3165, %v3166
      %v3168 = vsel %vm3016, %v3125, 0.0
      %v3169 = vadd.f32 %v3167, %v3168
      %v3170 = vsel %vm3016, %v3126, 0.0
      %v3171 = vadd.f32 %v3169, %v3170
      %v3172 = vsel %vm3016, %v3127, 0.0
      %v3173 = vadd.f32 %v3171, %v3172
      %v3174 = vsel %vm3016, %v3128, 0.0
      %v3175 = vadd.f32 %v3173, %v3174
      %v3176 = vsel %vm3016, %v3129, 0.0
      %v3177 = vadd.f32 %v3175, %v3176
      %v3178 = vsel %vm3016, %v3130, 0.0
      %v3179 = vadd.f32 %v3177, %v3178
      %v3180 = vsel %vm3016, %v3131, 0.0
      %v3181 = vadd.f32 %v3179, %v3180
      %v3182 = vsel %vm3016, %v3132, 0.0
      %v3183 = vadd.f32 %v3181, %v3182
      %v3184 = vsel %vm3016, %v3133, 0.0
      %v3185 = vadd.f32 %v3183, %v3184
      %v3186 = vsel %vm3016, %v3134, 0.0
      %v3187 = vadd.f32 %v3185, %v3186
      %v3188 = vsel %vm3016, %v3135, 0.0
      %v3189 = vadd.f32 %v3187, %v3188
      %v3190 = vsel %vm3016, %v3136, 0.0
      %v3191 = vadd.f32 %v3189, %v3190
      %v3192 = vsel %vm3016, %v3137, 0.0
      %v3193 = vadd.f32 %v3191, %v3192
      %v3194 = vsel %vm3016, %v3138, 0.0
      %v3195 = vadd.f32 %v3193, %v3194
      %v3196 = vsel %vm3016, %v3139, 0.0
      %v3197 = vadd.f32 %v3195, %v3196
      %v3198 = vsel %vm3016, %v3140, 0.0
      %v3199 = vadd.f32 %v3197, %v3198
      %v3200 = vsel %vm3016, %v3141, 0.0
      %v3201 = vadd.f32 %v3199, %v3200
      %v3202 = vsel %vm3016, %v3142, 0.0
      %v3203 = vadd.f32 %v3201, %v3202
      %v3204 = vsel %vm3016, %v3143, 0.0
      %v3205 = vadd.f32 %v3203, %v3204
      %v3206 = vsel %vm3016, %v3144, 0.0
      %v3207 = vadd.f32 %v3205, %v3206
      %v3208 = vrot.slane %v3207, 4
      %v3209 = vadd.f32 %v3207, %v3208
      %v3210 = vrot.slane %v3209, 2
      %v3211 = vadd.f32 %v3209, %v3210
      %v3212 = vrot.slane %v3211, 1
      %v3213 = vadd.f32 %v3211, %v3212
      %vm3214 = vcmask 24576
      %3215 = vst.msk [vmem:[%s757] sm:$0x1] %vm3214, %v3213
      %p3216 = scmp.lt.s32.totalorder %s34, 1
      %s3217 = scalar_select %p3216, %s34, 1
      %s3218 = smul.addr %s3217, 32
      %s3219 = smul.addr %s3218, 8
      %s3220 = scalar_lea.vmem %s21, %s3219
      %p3221 = scmp.lt.s32.totalorder %s34, 1
      %s3222 = scalar_select %p3221, %s34, 1
      %s3223 = scalar_lea.vmem %s22, %s3222
      // Predicated region
      $region105: #{sdxl_adapter_forward.1} parent=103 // pred_check
        %p3224 = pneg %p518
      $region106: #{sdxl_adapter_forward.1} parent=103 // pred_check_branch
        %3226 = sbr.rel (%p3224) target = $region108
      $region107: #{sdxl_adapter_forward.1} parent=103 // pred_region
        _
      $region108: #{sdxl_adapter_forward.1} parent=103 // pred_fallthru
        _
      // Predicated region
      $region109: #{sdxl_adapter_forward.1} parent=103 // pred_check
        %p3227 = pneg %p544
      $region110: #{sdxl_adapter_forward.1} parent=103 // pred_check_branch
        %3229 = sbr.rel (%p3227) target = $region112
      $region111: #{sdxl_adapter_forward.1} parent=103 // pred_region
        _
      $region112: #{sdxl_adapter_forward.1} parent=103 // pred_fallthru
        _
    $region104: #{sdxl_adapter_forward.1} parent=5 // pred_fallthru
      _
    %p3230 = scmp.le.s32.totalorder 2, %s29
    // Predicated region
    $region113: #{sdxl_adapter_forward.1} parent=5 // pred_check
      %p3231 = pneg %p3230
    $region114: #{sdxl_adapter_forward.1} parent=5 // pred_check_branch
      %3233 = sbr.rel (%p3231) target = $region116
    $region115: #{sdxl_adapter_forward.1} parent=5 // pred_region
      %s3234 = ssub.s32 %s29, 2
      // Predicated region
      $region117: #{sdxl_adapter_forward.1} parent=115 // pred_check
        %p3235 = pneg %p524
      $region118: #{sdxl_adapter_forward.1} parent=115 // pred_check_branch
        %3237 = sbr.rel (%p3235) target = $region120
      $region119: #{sdxl_adapter_forward.1} parent=115 // pred_region
        %p3238 = scmp.lt.s32.totalorder %s35, 1
        %s3239 = scalar_select %p3238, %s35, 1
        %s3240 = smul.addr %s3239, 32
        %s3241 = smul.addr %s3240, 8
        %s3242 = scalar_lea.vmem %s21, %s3241
      $region120: #{sdxl_adapter_forward.1} parent=115 // pred_fallthru
        _
      // Predicated region
      $region121: #{sdxl_adapter_forward.1} parent=115 // pred_check
        %p3243 = pneg %p550
      $region122: #{sdxl_adapter_forward.1} parent=115 // pred_check_branch
        %3245 = sbr.rel (%p3243) target = $region124
      $region123: #{sdxl_adapter_forward.1} parent=115 // pred_region
        %p3246 = scmp.lt.s32.totalorder %s35, 1
        %s3247 = scalar_select %p3246, %s35, 1
        %s3248 = scalar_lea.vmem %s22, %s3247
      $region124: #{sdxl_adapter_forward.1} parent=115 // pred_fallthru
        _
    $region116: #{sdxl_adapter_forward.1} parent=5 // pred_fallthru
      _
  $region6: #{sdxl_adapter_forward.1} parent=0 // loop_footer
    %s33 = sadd.s32 1, %s29
  $region7: #{sdxl_adapter_forward.1} parent=0 // loop_footer_branch
    %28 = sbr.rel target = $region3
  $region8: #{sdxl_adapter_forward.1} parent=0 // loop_exit
    _

</llo_original>
